<compile_context>
chip_gen: v7x
topology: tpu7x:2x2x1
jax: 0.10.0
libtpu: 0.0.40
codegen_flags: <defaults>
</compile_context>

<pallas_src>
import numpy as np
import jax
import jax.numpy as jnp
from jax.experimental import pallas as pl
from jax.experimental.pallas import tpu as pltpu

LEAKY_SLOPE = 0.1   # ACT_TYPE_MAP['leakyrelu'] -> nn.LeakyReLU(0.1)
BN_EPS = 1e-5


def _round_up(x, m):
    return (x + m - 1) // m * m


def mixconv_kernel(x_ref, w_ref, bias_ref, out_ref, xpad_ref):
    # x_ref    : (1, H, W, C1)   f32 NHWC input for this batch element
    # w_ref    : (3, 3, C1, C2)  bf16 combined weights, BN scale pre-folded;
    #                            1x1 branch lives at the centre tap of the
    #                            first C2a output channels (zeros elsewhere)
    # bias_ref : (1, 1, C2)      f32 folded BN bias  (beta - mean*scale)
    # out_ref  : (1, H, W*C2) if lane-folded else (1, H, W, C2)
    # xpad_ref : VMEM scratch (H+2, Wp, C1) bf16, Wp = round_up(W+2, 8)
    H = x_ref.shape[1]
    W = x_ref.shape[2]
    C1 = x_ref.shape[3]
    C2 = w_ref.shape[3]
    Wp = xpad_ref.shape[1]
    n = H * Wp
    dt = xpad_ref.dtype

    x = x_ref[0]                                             # (H, W, C1) f32

    # ---- zero only the halo (cheap; re-done every step -> megacore-safe) ----
    xpad_ref[0:1, :, :] = jnp.zeros((1, Wp, C1), dt)
    xpad_ref[H + 1:H + 2, :, :] = jnp.zeros((1, Wp, C1), dt)
    xpad_ref[1:H + 1, 0:1, :] = jnp.zeros((H, 1, C1), dt)
    xpad_ref[1:H + 1, W + 1:Wp, :] = jnp.zeros((H, Wp - W - 1, C1), dt)

    # ---- interior fill (f32 -> bf16 cast happens once, here) ----
    xpad_ref[1:H + 1, 1:W + 1, :] = x.astype(dt)

    # ---- fused {1x1, 3x3} conv: 9 bf16 matmuls, single running f32 sum ----
    # Per kh: one aligned row-slab view (H*Wp, C1).  Per (kh, kw): one matmul,
    # whose column-shifted slice is folded immediately into `y` (no persistent
    # per-kw accumulators).
    y = jnp.zeros((H, W, C2), jnp.float32)
    for kh in range(3):
        rows = xpad_ref[kh:kh + H, :, :].reshape(n, C1)      # bf16, free reshape
        for kw in range(3):
            s = jnp.dot(rows, w_ref[kh, kw],
                        preferred_element_type=jnp.float32)  # (n, C2) f32
            y = y + s.reshape(H, Wp, C2)[:, kw:kw + W, :]

    # ---- folded-BN bias -> LeakyReLU -> residual (c1 == c2) ----
    y = y + bias_ref[...]
    y = jnp.maximum(y, LEAKY_SLOPE * y)
    out = x + y

    if len(out_ref.shape) == 3:
        # Lane-dense store (only taken when W*C2 is a 128-multiple >= 128).
        out_ref[0] = out.reshape(H, W * C2).astype(out_ref.dtype)
    else:
        out_ref[0] = out.astype(out_ref.dtype)


def mixconv2d_nhwc(x_nhwc, w1_oihw, w3_oihw, gamma, beta, run_mean, run_var):
    N, H, W, C1 = x_nhwc.shape
    C2a = w1_oihw.shape[0]
    C2b = w3_oihw.shape[0]
    C2 = C2a + C2b
    out_dtype = x_nhwc.dtype

    # Folded BN: scale goes into the weights (convs have no bias -> exact),
    # bias stays as a single add in the kernel.
    scale = (gamma.astype(jnp.float32)
             / jnp.sqrt(run_var.astype(jnp.float32) + BN_EPS))           # (C2,)
    bias = beta.astype(jnp.float32) - run_mean.astype(jnp.float32) * scale

    # Combined (3,3,C1,C2) weight: 3x3 branch in the last C2b output channels
    # at every tap; 1x1 branch only at the centre tap of the first C2a.
    w1 = jnp.transpose(w1_oihw[:, :, 0, 0], (1, 0)).astype(jnp.float32)  # (C1,C2a)
    w3 = jnp.transpose(w3_oihw, (2, 3, 1, 0)).astype(jnp.float32)        # (3,3,C1,C2b)
    wc = jnp.zeros((3, 3, C1, C2), jnp.float32)
    wc = wc.at[:, :, :, C2a:].set(w3)
    wc = wc.at[1, 1, :, :C2a].set(w1)
    wc = (wc * scale.reshape(1, 1, 1, C2)).astype(jnp.bfloat16)          # scale folded

    bias3 = bias.reshape(1, 1, C2)

    Wp = _round_up(W + 2, 8)                 # sublane-aligned padded width
    scratch = pltpu.VMEM((H + 2, Wp, C1), jnp.bfloat16)

    fold_lanes = (C2 < 128) and (W * C2 >= 128) and ((W * C2) % 128 == 0)
    if fold_lanes:
        out_struct = jax.ShapeDtypeStruct((N, H, W * C2), out_dtype)
        out_spec = pl.BlockSpec((1, H, W * C2), lambda b: (b, 0, 0))
    else:
        out_struct = jax.ShapeDtypeStruct((N, H, W, C2), out_dtype)
        out_spec = pl.BlockSpec((1, H, W, C2), lambda b: (b, 0, 0, 0))

    # Scoped-VMEM budget: double-buffered blocks + scratch + live accumulators,
    # clamped to [32 MiB, 64 MiB] (>= v5e's 16 MiB default, <= v7x physical).
    est = (2 * (H * W * C1 * 4 + H * W * C2 * 4 + 9 * C1 * C2 * 2 + C2 * 4)
           + (H + 2) * Wp * C1 * 2
           + 3 * H * Wp * C2 * 4
           + (4 << 20))
    vmem_limit = int(min(max(est, 32 << 20), 64 << 20))

    out = pl.pallas_call(
        mixconv_kernel,
        out_shape=out_struct,
        grid_spec=pltpu.PrefetchScalarGridSpec(
            num_scalar_prefetch=0,
            grid=(N,),
            in_specs=[
                pl.BlockSpec((1, H, W, C1), lambda b: (b, 0, 0, 0)),
                pl.BlockSpec((3, 3, C1, C2), lambda b: (0, 0, 0, 0)),
                pl.BlockSpec((1, 1, C2), lambda b: (0, 0, 0)),
            ],
            out_specs=out_spec,
            scratch_shapes=[scratch],
        ),
        compiler_params=pltpu.CompilerParams(
            dimension_semantics=("parallel",),
            vmem_limit_bytes=vmem_limit),
    )(x_nhwc, wc, bias3)

    # Contiguous reshape (no data movement) back to NHWC if lanes were folded.
    return out.reshape(N, H, W, C2)


def mixconv2d_pallas(x_nchw, w1_oihw, w3_oihw, gamma, beta, run_mean, run_var):
    # NCHW API to match the PyTorch module; transposes only at this boundary
    # (keep NHWC end-to-end in a real network).
    x_nhwc = jnp.transpose(x_nchw, (0, 2, 3, 1))
    out_nhwc = mixconv2d_nhwc(x_nhwc, w1_oihw, w3_oihw,
                              gamma, beta, run_mean, run_var)
    return jnp.transpose(out_nhwc, (0, 3, 1, 2))


def mixconv2d_ref(x, w1_oihw, w3_oihw, gamma, beta, run_mean, run_var):
    # Pure-JAX f32 reference (NCHW), mirrors the PyTorch forward exactly.
    dn = ('NCHW', 'OIHW', 'NCHW')
    y1 = jax.lax.conv_general_dilated(x, w1_oihw, (1, 1), [(0, 0), (0, 0)],
                                      dimension_numbers=dn)
    y3 = jax.lax.conv_general_dilated(x, w3_oihw, (1, 1), [(1, 1), (1, 1)],
                                      dimension_numbers=dn)
    y = jnp.concatenate([y1, y3], axis=1)
    scale = (gamma / jnp.sqrt(run_var + BN_EPS)).reshape(1, -1, 1, 1)
    bias = (beta - run_mean * gamma / jnp.sqrt(run_var + BN_EPS)).reshape(1, -1, 1, 1)
    y = y * scale + bias
    y = jnp.where(y > 0, y, LEAKY_SLOPE * y)
    return x + y


if __name__ == "__main__":
    # Small shapes consistent with the module (residual requires c1 == c2).
    N, C1, H, W = 2, 4, 16, 16
    C2 = C1
    k = (1, 3)
    groups = len(k)

    # equal_ch split, same rule as the PyTorch __init__:
    idx = np.floor(np.linspace(0, groups - 1e-6, C2))
    c_split = [int((idx == g).sum()) for g in range(groups)]   # -> [2, 2]
    C2a, C2b = c_split

    key = jax.random.PRNGKey(0)
    k1, k2, k3, k4, k5, k6, k7 = jax.random.split(key, 7)

    x = jax.random.normal(k1, (N, C1, H, W), dtype=jnp.float32)
    w1_oihw = 0.2 * jax.random.normal(k2, (C2a, C1, 1, 1), dtype=jnp.float32)
    w3_oihw = 0.2 * jax.random.normal(k3, (C2b, C1, 3, 3), dtype=jnp.float32)
    gamma = 1.0 + 0.1 * jax.random.normal(k4, (C2,), dtype=jnp.float32)
    beta = 0.1 * jax.random.normal(k5, (C2,), dtype=jnp.float32)
    run_mean = 0.1 * jax.random.normal(k6, (C2,), dtype=jnp.float32)
    run_var = jnp.abs(jax.random.normal(k7, (C2,), dtype=jnp.float32)) + 0.5

    out = mixconv2d_pallas(x, w1_oihw, w3_oihw, gamma, beta, run_mean, run_var)
    out = jax.block_until_ready(out)

    ref = mixconv2d_ref(x, w1_oihw, w3_oihw, gamma, beta, run_mean, run_var)
    ref = jax.block_until_ready(ref)

    # Tolerance relaxed vs the f32 reference because the kernel runs the
    # matmuls with bf16 operands (f32 accumulation) per the perf review.
    np.testing.assert_allclose(np.asarray(out), np.asarray(ref),
                               rtol=5e-2, atol=5e-2)
    print("KERNEL_OK")
</pallas_src>

<mosaic_0001>
module attributes {stable_mosaic.version = 11 : i64} {
  func.func @mixconv_kernel(%arg0: i32, %arg1: memref<1x16x16x4xf32, #tpu.memory_space<vmem>>, %arg2: memref<3x3x4x4xbf16, #tpu.memory_space<vmem>>, %arg3: memref<1x1x4xf32, #tpu.memory_space<vmem>>, %arg4: memref<1x16x16x4xf32, #tpu.memory_space<vmem>>, %arg5: memref<18x24x4xbf16, #tpu.memory_space<vmem>>) attributes {dimension_semantics = [#tpu.dimension_semantics<parallel>], iteration_bounds = array<i64: 2>, scalar_prefetch = 0 : i64, scratch_operands = 1 : i64, tpu.core_type = #tpu.core_type<tc>, window_params = [{transform_indices = @transform_0, window_bounds = array<i64: 1, 16, 16, 4>}, {pipeline_mode = #tpu.pipeline_mode<synchronous>, transform_indices = @transform_1, window_bounds = array<i64: 3, 3, 4, 4>}, {pipeline_mode = #tpu.pipeline_mode<synchronous>, transform_indices = @transform_2, window_bounds = array<i64: 1, 1, 4>}, {transform_indices = @transform_3, window_bounds = array<i64: 1, 16, 16, 4>}]} {
    %c0 = arith.constant 0 : index
    %c0_0 = arith.constant 0 : index
    %c0_1 = arith.constant 0 : index
    %c0_2 = arith.constant 0 : index
    %0 = vector.load %arg1[%c0, %c0_0, %c0_1, %c0_2] : memref<1x16x16x4xf32, #tpu.memory_space<vmem>>, vector<1x16x16x4xf32>
    %1 = vector.shape_cast %0 : vector<1x16x16x4xf32> to vector<16x16x4xf32>
    %cst = arith.constant 0.000000e+00 : bf16
    %2 = vector.broadcast %cst : bf16 to vector<1x24x4xbf16>
    %c0_3 = arith.constant 0 : index
    %c0_4 = arith.constant 0 : index
    %c0_5 = arith.constant 0 : index
    %3 = vector.load %arg5[%c0_3, %c0_4, %c0_5] : memref<18x24x4xbf16, #tpu.memory_space<vmem>>, vector<1x24x4xbf16>
    tpu.vector_store %arg5[%c0_3, %c0_4, %c0_5], %2 {strides = array<i32>} : memref<18x24x4xbf16, #tpu.memory_space<vmem>>, vector<1x24x4xbf16>,
    %cst_6 = arith.constant 0.000000e+00 : bf16
    %4 = vector.broadcast %cst_6 : bf16 to vector<1x24x4xbf16>
    %c17 = arith.constant 17 : index
    %c0_7 = arith.constant 0 : index
    %c0_8 = arith.constant 0 : index
    %5 = vector.load %arg5[%c17, %c0_7, %c0_8] : memref<18x24x4xbf16, #tpu.memory_space<vmem>>, vector<1x24x4xbf16>
    tpu.vector_store %arg5[%c17, %c0_7, %c0_8], %4 {strides = array<i32>} : memref<18x24x4xbf16, #tpu.memory_space<vmem>>, vector<1x24x4xbf16>,
    %cst_9 = arith.constant 0.000000e+00 : bf16
    %6 = vector.broadcast %cst_9 : bf16 to vector<16x1x4xbf16>
    %c1 = arith.constant 1 : index
    %c0_10 = arith.constant 0 : index
    %c0_11 = arith.constant 0 : index
    %7 = vector.load %arg5[%c1, %c0_10, %c0_11] : memref<18x24x4xbf16, #tpu.memory_space<vmem>>, vector<16x1x4xbf16>
    tpu.vector_store %arg5[%c1, %c0_10, %c0_11], %6 {strides = array<i32>} : memref<18x24x4xbf16, #tpu.memory_space<vmem>>, vector<16x1x4xbf16>,
    %cst_12 = arith.constant 0.000000e+00 : bf16
    %8 = vector.broadcast %cst_12 : bf16 to vector<16x7x4xbf16>
    %c1_13 = arith.constant 1 : index
    %c17_14 = arith.constant 17 : index
    %c0_15 = arith.constant 0 : index
    %9 = vector.load %arg5[%c1_13, %c17_14, %c0_15] : memref<18x24x4xbf16, #tpu.memory_space<vmem>>, vector<16x7x4xbf16>
    tpu.vector_store %arg5[%c1_13, %c17_14, %c0_15], %8 {strides = array<i32>} : memref<18x24x4xbf16, #tpu.memory_space<vmem>>, vector<16x7x4xbf16>,
    %10 = arith.truncf %1 : vector<16x16x4xf32> to vector<16x16x4xbf16>
    %c1_16 = arith.constant 1 : index
    %c1_17 = arith.constant 1 : index
    %c0_18 = arith.constant 0 : index
    %11 = vector.load %arg5[%c1_16, %c1_17, %c0_18] : memref<18x24x4xbf16, #tpu.memory_space<vmem>>, vector<16x16x4xbf16>
    tpu.vector_store %arg5[%c1_16, %c1_17, %c0_18], %10 {strides = array<i32>} : memref<18x24x4xbf16, #tpu.memory_space<vmem>>, vector<16x16x4xbf16>,
    %cst_19 = arith.constant 0.000000e+00 : f32
    %12 = vector.broadcast %cst_19 : f32 to vector<16x16x4xf32>
    %c0_20 = arith.constant 0 : index
    %c0_21 = arith.constant 0 : index
    %c0_22 = arith.constant 0 : index
    %13 = vector.load %arg5[%c0_20, %c0_21, %c0_22] : memref<18x24x4xbf16, #tpu.memory_space<vmem>>, vector<16x24x4xbf16>
    %14 = vector.shape_cast %13 : vector<16x24x4xbf16> to vector<384x4xbf16>
    %c0_23 = arith.constant 0 : index
    %c0_24 = arith.constant 0 : index
    %c0_25 = arith.constant 0 : index
    %c0_26 = arith.constant 0 : index
    %15 = vector.load %arg2[%c0_23, %c0_24, %c0_25, %c0_26] : memref<3x3x4x4xbf16, #tpu.memory_space<vmem>>, vector<1x1x4x4xbf16>
    %16 = vector.shape_cast %15 : vector<1x1x4x4xbf16> to vector<4x4xbf16>
    %cst_27 = arith.constant dense<0.000000e+00> : vector<384x4xf32>
    %17 = tpu.matmul %14, %16, %cst_27 {dimension_numbers = #tpu.dot_dimension_numbers<[1], [0], [0], [1], [0, 0, 1, 1], [], []>} : vector<384x4xbf16>, vector<4x4xbf16>, vector<384x4xf32> -> vector<384x4xf32>
    %18 = vector.shape_cast %17 : vector<384x4xf32> to vector<16x24x4xf32>
    %19 = vector.extract_strided_slice %18 {offsets = [0, 0, 0], sizes = [16, 16, 4], strides = [1, 1, 1]} : vector<16x24x4xf32> to vector<16x16x4xf32>
    %20 = arith.addf %12, %19 : vector<16x16x4xf32>
    %c0_28 = arith.constant 0 : index
    %c1_29 = arith.constant 1 : index
    %c0_30 = arith.constant 0 : index
    %c0_31 = arith.constant 0 : index
    %21 = vector.load %arg2[%c0_28, %c1_29, %c0_30, %c0_31] : memref<3x3x4x4xbf16, #tpu.memory_space<vmem>>, vector<1x1x4x4xbf16>
    %22 = vector.shape_cast %21 : vector<1x1x4x4xbf16> to vector<4x4xbf16>
    %cst_32 = arith.constant dense<0.000000e+00> : vector<384x4xf32>
    %23 = tpu.matmul %14, %22, %cst_32 {dimension_numbers = #tpu.dot_dimension_numbers<[1], [0], [0], [1], [0, 0, 1, 1], [], []>} : vector<384x4xbf16>, vector<4x4xbf16>, vector<384x4xf32> -> vector<384x4xf32>
    %24 = vector.shape_cast %23 : vector<384x4xf32> to vector<16x24x4xf32>
    %25 = vector.extract_strided_slice %24 {offsets = [0, 1, 0], sizes = [16, 16, 4], strides = [1, 1, 1]} : vector<16x24x4xf32> to vector<16x16x4xf32>
    %26 = arith.addf %20, %25 : vector<16x16x4xf32>
    %c0_33 = arith.constant 0 : index
    %c2 = arith.constant 2 : index
    %c0_34 = arith.constant 0 : index
    %c0_35 = arith.constant 0 : index
    %27 = vector.load %arg2[%c0_33, %c2, %c0_34, %c0_35] : memref<3x3x4x4xbf16, #tpu.memory_space<vmem>>, vector<1x1x4x4xbf16>
    %28 = vector.shape_cast %27 : vector<1x1x4x4xbf16> to vector<4x4xbf16>
    %cst_36 = arith.constant dense<0.000000e+00> : vector<384x4xf32>
    %29 = tpu.matmul %14, %28, %cst_36 {dimension_numbers = #tpu.dot_dimension_numbers<[1], [0], [0], [1], [0, 0, 1, 1], [], []>} : vector<384x4xbf16>, vector<4x4xbf16>, vector<384x4xf32> -> vector<384x4xf32>
    %30 = vector.shape_cast %29 : vector<384x4xf32> to vector<16x24x4xf32>
    %31 = vector.extract_strided_slice %30 {offsets = [0, 2, 0], sizes = [16, 16, 4], strides = [1, 1, 1]} : vector<16x24x4xf32> to vector<16x16x4xf32>
    %32 = arith.addf %26, %31 : vector<16x16x4xf32>
    %c1_37 = arith.constant 1 : index
    %c0_38 = arith.constant 0 : index
    %c0_39 = arith.constant 0 : index
    %33 = vector.load %arg5[%c1_37, %c0_38, %c0_39] : memref<18x24x4xbf16, #tpu.memory_space<vmem>>, vector<16x24x4xbf16>
    %34 = vector.shape_cast %33 : vector<16x24x4xbf16> to vector<384x4xbf16>
    %c1_40 = arith.constant 1 : index
    %c0_41 = arith.constant 0 : index
    %c0_42 = arith.constant 0 : index
    %c0_43 = arith.constant 0 : index
    %35 = vector.load %arg2[%c1_40, %c0_41, %c0_42, %c0_43] : memref<3x3x4x4xbf16, #tpu.memory_space<vmem>>, vector<1x1x4x4xbf16>
    %36 = vector.shape_cast %35 : vector<1x1x4x4xbf16> to vector<4x4xbf16>
    %cst_44 = arith.constant dense<0.000000e+00> : vector<384x4xf32>
    %37 = tpu.matmul %34, %36, %cst_44 {dimension_numbers = #tpu.dot_dimension_numbers<[1], [0], [0], [1], [0, 0, 1, 1], [], []>} : vector<384x4xbf16>, vector<4x4xbf16>, vector<384x4xf32> -> vector<384x4xf32>
    %38 = vector.shape_cast %37 : vector<384x4xf32> to vector<16x24x4xf32>
    %39 = vector.extract_strided_slice %38 {offsets = [0, 0, 0], sizes = [16, 16, 4], strides = [1, 1, 1]} : vector<16x24x4xf32> to vector<16x16x4xf32>
    %40 = arith.addf %32, %39 : vector<16x16x4xf32>
    %c1_45 = arith.constant 1 : index
    %c1_46 = arith.constant 1 : index
    %c0_47 = arith.constant 0 : index
    %c0_48 = arith.constant 0 : index
    %41 = vector.load %arg2[%c1_45, %c1_46, %c0_47, %c0_48] : memref<3x3x4x4xbf16, #tpu.memory_space<vmem>>, vector<1x1x4x4xbf16>
    %42 = vector.shape_cast %41 : vector<1x1x4x4xbf16> to vector<4x4xbf16>
    %cst_49 = arith.constant dense<0.000000e+00> : vector<384x4xf32>
    %43 = tpu.matmul %34, %42, %cst_49 {dimension_numbers = #tpu.dot_dimension_numbers<[1], [0], [0], [1], [0, 0, 1, 1], [], []>} : vector<384x4xbf16>, vector<4x4xbf16>, vector<384x4xf32> -> vector<384x4xf32>
    %44 = vector.shape_cast %43 : vector<384x4xf32> to vector<16x24x4xf32>
    %45 = vector.extract_strided_slice %44 {offsets = [0, 1, 0], sizes = [16, 16, 4], strides = [1, 1, 1]} : vector<16x24x4xf32> to vector<16x16x4xf32>
    %46 = arith.addf %40, %45 : vector<16x16x4xf32>
    %c1_50 = arith.constant 1 : index
    %c2_51 = arith.constant 2 : index
    %c0_52 = arith.constant 0 : index
    %c0_53 = arith.constant 0 : index
    %47 = vector.load %arg2[%c1_50, %c2_51, %c0_52, %c0_53] : memref<3x3x4x4xbf16, #tpu.memory_space<vmem>>, vector<1x1x4x4xbf16>
    %48 = vector.shape_cast %47 : vector<1x1x4x4xbf16> to vector<4x4xbf16>
    %cst_54 = arith.constant dense<0.000000e+00> : vector<384x4xf32>
    %49 = tpu.matmul %34, %48, %cst_54 {dimension_numbers = #tpu.dot_dimension_numbers<[1], [0], [0], [1], [0, 0, 1, 1], [], []>} : vector<384x4xbf16>, vector<4x4xbf16>, vector<384x4xf32> -> vector<384x4xf32>
    %50 = vector.shape_cast %49 : vector<384x4xf32> to vector<16x24x4xf32>
    %51 = vector.extract_strided_slice %50 {offsets = [0, 2, 0], sizes = [16, 16, 4], strides = [1, 1, 1]} : vector<16x24x4xf32> to vector<16x16x4xf32>
    %52 = arith.addf %46, %51 : vector<16x16x4xf32>
    %c2_55 = arith.constant 2 : index
    %c0_56 = arith.constant 0 : index
    %c0_57 = arith.constant 0 : index
    %53 = vector.load %arg5[%c2_55, %c0_56, %c0_57] : memref<18x24x4xbf16, #tpu.memory_space<vmem>>, vector<16x24x4xbf16>
    %54 = vector.shape_cast %53 : vector<16x24x4xbf16> to vector<384x4xbf16>
    %c2_58 = arith.constant 2 : index
    %c0_59 = arith.constant 0 : index
    %c0_60 = arith.constant 0 : index
    %c0_61 = arith.constant 0 : index
    %55 = vector.load %arg2[%c2_58, %c0_59, %c0_60, %c0_61] : memref<3x3x4x4xbf16, #tpu.memory_space<vmem>>, vector<1x1x4x4xbf16>
    %56 = vector.shape_cast %55 : vector<1x1x4x4xbf16> to vector<4x4xbf16>
    %cst_62 = arith.constant dense<0.000000e+00> : vector<384x4xf32>
    %57 = tpu.matmul %54, %56, %cst_62 {dimension_numbers = #tpu.dot_dimension_numbers<[1], [0], [0], [1], [0, 0, 1, 1], [], []>} : vector<384x4xbf16>, vector<4x4xbf16>, vector<384x4xf32> -> vector<384x4xf32>
    %58 = vector.shape_cast %57 : vector<384x4xf32> to vector<16x24x4xf32>
    %59 = vector.extract_strided_slice %58 {offsets = [0, 0, 0], sizes = [16, 16, 4], strides = [1, 1, 1]} : vector<16x24x4xf32> to vector<16x16x4xf32>
    %60 = arith.addf %52, %59 : vector<16x16x4xf32>
    %c2_63 = arith.constant 2 : index
    %c1_64 = arith.constant 1 : index
    %c0_65 = arith.constant 0 : index
    %c0_66 = arith.constant 0 : index
    %61 = vector.load %arg2[%c2_63, %c1_64, %c0_65, %c0_66] : memref<3x3x4x4xbf16, #tpu.memory_space<vmem>>, vector<1x1x4x4xbf16>
    %62 = vector.shape_cast %61 : vector<1x1x4x4xbf16> to vector<4x4xbf16>
    %cst_67 = arith.constant dense<0.000000e+00> : vector<384x4xf32>
    %63 = tpu.matmul %54, %62, %cst_67 {dimension_numbers = #tpu.dot_dimension_numbers<[1], [0], [0], [1], [0, 0, 1, 1], [], []>} : vector<384x4xbf16>, vector<4x4xbf16>, vector<384x4xf32> -> vector<384x4xf32>
    %64 = vector.shape_cast %63 : vector<384x4xf32> to vector<16x24x4xf32>
    %65 = vector.extract_strided_slice %64 {offsets = [0, 1, 0], sizes = [16, 16, 4], strides = [1, 1, 1]} : vector<16x24x4xf32> to vector<16x16x4xf32>
    %66 = arith.addf %60, %65 : vector<16x16x4xf32>
    %c2_68 = arith.constant 2 : index
    %c2_69 = arith.constant 2 : index
    %c0_70 = arith.constant 0 : index
    %c0_71 = arith.constant 0 : index
    %67 = vector.load %arg2[%c2_68, %c2_69, %c0_70, %c0_71] : memref<3x3x4x4xbf16, #tpu.memory_space<vmem>>, vector<1x1x4x4xbf16>
    %68 = vector.shape_cast %67 : vector<1x1x4x4xbf16> to vector<4x4xbf16>
    %cst_72 = arith.constant dense<0.000000e+00> : vector<384x4xf32>
    %69 = tpu.matmul %54, %68, %cst_72 {dimension_numbers = #tpu.dot_dimension_numbers<[1], [0], [0], [1], [0, 0, 1, 1], [], []>} : vector<384x4xbf16>, vector<4x4xbf16>, vector<384x4xf32> -> vector<384x4xf32>
    %70 = vector.shape_cast %69 : vector<384x4xf32> to vector<16x24x4xf32>
    %71 = vector.extract_strided_slice %70 {offsets = [0, 2, 0], sizes = [16, 16, 4], strides = [1, 1, 1]} : vector<16x24x4xf32> to vector<16x16x4xf32>
    %72 = arith.addf %66, %71 : vector<16x16x4xf32>
    %c0_73 = arith.constant 0 : index
    %c0_74 = arith.constant 0 : index
    %c0_75 = arith.constant 0 : index
    %73 = vector.load %arg3[%c0_73, %c0_74, %c0_75] : memref<1x1x4xf32, #tpu.memory_space<vmem>>, vector<1x1x4xf32>
    %74 = vector.broadcast %73 : vector<1x1x4xf32> to vector<16x16x4xf32>
    %75 = arith.addf %72, %74 : vector<16x16x4xf32>
    %cst_76 = arith.constant 1.000000e-01 : f32
    %76 = vector.broadcast %cst_76 : f32 to vector<16x16x4xf32>
    %77 = arith.mulf %76, %75 : vector<16x16x4xf32>
    %78 = arith.maximumf %75, %77 : vector<16x16x4xf32>
    %79 = arith.addf %1, %78 : vector<16x16x4xf32>
    %c0_77 = arith.constant 0 : index
    %c0_78 = arith.constant 0 : index
    %c0_79 = arith.constant 0 : index
    %c0_80 = arith.constant 0 : index
    %80 = vector.load %arg4[%c0_77, %c0_78, %c0_79, %c0_80] : memref<1x16x16x4xf32, #tpu.memory_space<vmem>>, vector<1x16x16x4xf32>
    %81 = vector.shape_cast %80 : vector<1x16x16x4xf32> to vector<16x16x4xf32>
    %82 = vector.shape_cast %79 : vector<16x16x4xf32> to vector<1x16x16x4xf32>
    tpu.vector_store %arg4[%c0_77, %c0_78, %c0_79, %c0_80], %82 {strides = array<i32>} : memref<1x16x16x4xf32, #tpu.memory_space<vmem>>, vector<1x16x16x4xf32>,
    return
  }
  func.func @transform_0(%arg0: i32) -> (i32, i32, i32, i32) {
    %c0_i32 = arith.constant 0 : i32
    %c0_i32_0 = arith.constant 0 : i32
    %c0_i32_1 = arith.constant 0 : i32
    %c0_i32_2 = arith.constant 0 : i32
    return %arg0, %c0_i32, %c0_i32_0, %c0_i32_1 : i32, i32, i32, i32
  }
  func.func @transform_1(%arg0: i32) -> (i32, i32, i32, i32) {
    %c0_i32 = arith.constant 0 : i32
    %c0_i32_0 = arith.constant 0 : i32
    %c0_i32_1 = arith.constant 0 : i32
    %c0_i32_2 = arith.constant 0 : i32
    %c0_i32_3 = arith.constant 0 : i32
    return %c0_i32, %c0_i32_0, %c0_i32_1, %c0_i32_2 : i32, i32, i32, i32
  }
  func.func @transform_2(%arg0: i32) -> (i32, i32, i32) {
    %c0_i32 = arith.constant 0 : i32
    %c0_i32_0 = arith.constant 0 : i32
    %c0_i32_1 = arith.constant 0 : i32
    %c0_i32_2 = arith.constant 0 : i32
    return %c0_i32, %c0_i32_0, %c0_i32_1 : i32, i32, i32
  }
  func.func @transform_3(%arg0: i32) -> (i32, i32, i32, i32) {
    %c0_i32 = arith.constant 0 : i32
    %c0_i32_0 = arith.constant 0 : i32
    %c0_i32_1 = arith.constant 0 : i32
    %c0_i32_2 = arith.constant 0 : i32
    return %arg0, %c0_i32, %c0_i32_0, %c0_i32_1 : i32, i32, i32, i32
  }
}

</mosaic_0001>

<llo_original>
// kernel: tpu_custom_call.1
$region0: #{tpu_custom_call.1}
  #allocation0 [shape = 'u32[]', space=smem, size = 0x4, offset = 0x4, fixed_abs, tag = 'smem constant byte address 0x4 - core index']
  #allocation1 [shape = 'u32[144,128]{1,0:T(1,128)}', space=vmem, size = 0x12000, scoped, tag = 'internal scratch']
  #allocation2 [shape = 'bf16[18,24,4]{2,1,0:T(8,128)(2,1)}', space=vmem, size = 0x1b000, scoped, tag = 'scratch operand']
  %s0 = inlined_call_operand.vmem [shape: f32[2,16,16,4], index: 0, kind: input, shape index: {}]
  %s1 = inlined_call_operand.vmem [shape: bf16[3,3,4,4], index: 1, kind: input, shape index: {}]
  %s2 = inlined_call_operand.vmem [shape: f32[1,1,4], index: 2, kind: input, shape index: {}]
  %s3 = inlined_call_operand.vmem [shape: f32[2,16,16,4], index: 3, kind: output, shape index: {}]
  %s4 = sld [smem:[#allocation0]]
  $region45: #{tpu_custom_call.1} parent=0
    _
  %s6 = ssub.s32 1, %s4
  %s7 = scalar_select 0, %s6, %s4
  loop: start=0, step=1, limit=4
  $region2: #{tpu_custom_call.1} parent=0 // loop_pre_header
    _
  $region3: #{tpu_custom_call.1} parent=0 // loop_header
    %s9 = sphi 0, %s13
    %p10 = scmp.ge.s32.totalorder %s9, 4
    %s19 = sphi 0, %s21
    %s22 = sphi 0, %s19
    %s23 = sphi 0, %s22
    %s39 = sphi 0, %s23
    %s43 = sphi 0, %s43
    %s45 = sphi 0, %s43
    %s46 = sphi 0, %s45
    %s60 = sphi 0, %s46
    %s64 = sphi 0, %s64
    %s66 = sphi 0, %s64
    %s67 = sphi 0, %s66
    %s81 = sphi 0, %s67
    %s87 = sphi 0, %s89
    %s90 = sphi 0, %s87
    %s91 = sphi 0, %s90
    %s107 = sphi 0, %s91
  $region4: #{tpu_custom_call.1} parent=0 // loop_header_branch
    %12 = sbr.rel (%p10) target = $region8
  $region5: #{tpu_custom_call.1} parent=0 // loop_body
    %s14 = ssub.s32 %s9, 1
    %s15 = ssub.s32 %s9, 2
    %s16 = sadd.s32 %s9, 1
    %s17 = ssub.s32 %s9, %s16
    %p18 = scmp.eq.s32.totalorder %s17, 0
    %s20 = sadd.s32 %s19, 1
    %s21 = scalar_select %p18, %s19, %s20
    %p24 = pneg %p18
    %p25 = scmp.eq.s32.totalorder %s9, 1
    %p26 = por %p24, %p25
    %p27 = scmp.ne.s32.totalorder %s19, %s22
    %p28 = scmp.eq.s32.totalorder %s9, 0
    %p29 = por %p27, %p28
    %p30 = scmp.ne.s32.totalorder %s19, %s22
    %p31 = scmp.eq.s32.totalorder %s14, 1
    %p32 = por %p30, %p31
    %p33 = scmp.ne.s32.totalorder %s22, %s23
    %p34 = scmp.eq.s32.totalorder %s14, 0
    %p35 = por %p33, %p34
    %p36 = scmp.ne.s32.totalorder %s22, %s23
    %p37 = scmp.eq.s32.totalorder %s15, 1
    %p38 = por %p36, %p37
    %p40 = scmp.ne.s32.totalorder %s23, %s39
    %p41 = scmp.eq.s32.totalorder %s15, 0
    %p42 = por %p40, %p41
    %s44 = sadd.s32 %s43, 1
    %p47 = scmp.eq.s32.totalorder %s9, 1
    %p48 = scmp.ne.s32.totalorder %s43, %s45
    %p49 = scmp.eq.s32.totalorder %s9, 0
    %p50 = por %p48, %p49
    %p51 = scmp.ne.s32.totalorder %s43, %s45
    %p52 = scmp.eq.s32.totalorder %s14, 1
    %p53 = por %p51, %p52
    %p54 = scmp.ne.s32.totalorder %s45, %s46
    %p55 = scmp.eq.s32.totalorder %s14, 0
    %p56 = por %p54, %p55
    %p57 = scmp.ne.s32.totalorder %s45, %s46
    %p58 = scmp.eq.s32.totalorder %s15, 1
    %p59 = por %p57, %p58
    %p61 = scmp.ne.s32.totalorder %s46, %s60
    %p62 = scmp.eq.s32.totalorder %s15, 0
    %p63 = por %p61, %p62
    %s65 = sadd.s32 %s64, 1
    %p68 = scmp.eq.s32.totalorder %s9, 1
    %p69 = scmp.ne.s32.totalorder %s64, %s66
    %p70 = scmp.eq.s32.totalorder %s9, 0
    %p71 = por %p69, %p70
    %p72 = scmp.ne.s32.totalorder %s64, %s66
    %p73 = scmp.eq.s32.totalorder %s14, 1
    %p74 = por %p72, %p73
    %p75 = scmp.ne.s32.totalorder %s66, %s67
    %p76 = scmp.eq.s32.totalorder %s14, 0
    %p77 = por %p75, %p76
    %p78 = scmp.ne.s32.totalorder %s66, %s67
    %p79 = scmp.eq.s32.totalorder %s15, 1
    %p80 = por %p78, %p79
    %p82 = scmp.ne.s32.totalorder %s67, %s81
    %p83 = scmp.eq.s32.totalorder %s15, 0
    %p84 = por %p82, %p83
    %s85 = ssub.s32 %s9, %s16
    %p86 = scmp.eq.s32.totalorder %s85, 0
    %s88 = sadd.s32 %s87, 1
    %s89 = scalar_select %p86, %s87, %s88
    %p92 = pneg %p86
    %p93 = scmp.eq.s32.totalorder %s9, 1
    %p94 = por %p92, %p93
    %p95 = scmp.ne.s32.totalorder %s87, %s90
    %p96 = scmp.eq.s32.totalorder %s9, 0
    %p97 = por %p95, %p96
    %p98 = scmp.ne.s32.totalorder %s87, %s90
    %p99 = scmp.eq.s32.totalorder %s14, 1
    %p100 = por %p98, %p99
    %p101 = scmp.ne.s32.totalorder %s90, %s91
    %p102 = scmp.eq.s32.totalorder %s14, 0
    %p103 = por %p101, %p102
    %p104 = scmp.ne.s32.totalorder %s90, %s91
    %p105 = scmp.eq.s32.totalorder %s15, 1
    %p106 = por %p104, %p105
    %p108 = scmp.ne.s32.totalorder %s91, %s107
    %p109 = scmp.eq.s32.totalorder %s15, 0
    %p110 = por %p108, %p109
    %p111 = scmp.le.s32.totalorder 1, %s9
    %p112 = scmp.lt.s32.totalorder %s9, 3
    %p113 = pnand %p111, %p112
    %p114 = pneg %p113
    // Predicated region
    $region9: #{tpu_custom_call.1} parent=5 // pred_check
      _
    $region10: #{tpu_custom_call.1} parent=5 // pred_check_branch
      %116 = sbr.rel (%p113) target = $region12
    $region11: #{tpu_custom_call.1} parent=5 // pred_region
      %s117 = ssub.s32 %s9, 1
      // Predicated region
      $region13: #{tpu_custom_call.1} parent=11 // pred_check
        %p118 = pneg %p56
      $region14: #{tpu_custom_call.1} parent=11 // pred_check_branch
        %120 = sbr.rel (%p118) target = $region16
      $region15: #{tpu_custom_call.1} parent=11 // pred_region
        _
      $region16: #{tpu_custom_call.1} parent=11 // pred_fallthru
        _
      // Predicated region
      $region17: #{tpu_custom_call.1} parent=11 // pred_check
        %p121 = pneg %p77
      $region18: #{tpu_custom_call.1} parent=11 // pred_check_branch
        %123 = sbr.rel (%p121) target = $region20
      $region19: #{tpu_custom_call.1} parent=11 // pred_region
        _
      $region20: #{tpu_custom_call.1} parent=11 // pred_fallthru
        _
    $region12: #{tpu_custom_call.1} parent=5 // pred_fallthru
      _
    %p124 = scmp.lt.s32.totalorder %s9, 2
    // Predicated region
    $region21: #{tpu_custom_call.1} parent=5 // pred_check
      %p125 = pneg %p124
    $region22: #{tpu_custom_call.1} parent=5 // pred_check_branch
      %127 = sbr.rel (%p125) target = $region24
    $region23: #{tpu_custom_call.1} parent=5 // pred_region
      // Predicated region
      $region25: #{tpu_custom_call.1} parent=23 // pred_check
        %p128 = pneg %p29
      $region26: #{tpu_custom_call.1} parent=23 // pred_check_branch
        %130 = sbr.rel (%p128) target = $region28
      $region27: #{tpu_custom_call.1} parent=23 // pred_region
        %p131 = scmp.lt.s32.totalorder %s9, 1
        %s132 = scalar_select %p131, %s9, 1
        %s133 = smul.addr %s132, 32
        %s134 = smul.addr %s133, 8
        %s135 = scalar_lea.vmem %s0, %s134
      $region28: #{tpu_custom_call.1} parent=23 // pred_fallthru
        _
    $region24: #{tpu_custom_call.1} parent=5 // pred_fallthru
      _
    %p136 = scmp.le.s32.totalorder 1, %s9
    %p137 = scmp.lt.s32.totalorder %s9, 3
    %p138 = pnand %p136, %p137
    %p139 = pneg %p138
    // Predicated region
    $region29: #{tpu_custom_call.1} parent=5 // pred_check
      _
    $region30: #{tpu_custom_call.1} parent=5 // pred_check_branch
      %141 = sbr.rel (%p138) target = $region32
    $region31: #{tpu_custom_call.1} parent=5 // pred_region
      %s142 = ssub.s32 %s9, 1
      %p143 = scmp.lt.s32.totalorder %s14, 1
      %s144 = scalar_select %p143, %s14, 1
      %s145 = smul.addr %s144, 32
      %s146 = smul.addr %s145, 8
      %s147 = scalar_lea.vmem %s0, %s146
      %p148 = pneg %p35
      %p149 = pneg %p32
      %p150 = pneg %p56
      %p151 = pneg %p53
      %p152 = pneg %p77
      %p153 = pneg %p74
      %p154 = pneg %p103
      %p155 = pneg %p100
      %p156 = scmp.lt.s32.totalorder %s14, 1
      %s157 = scalar_select %p156, %s14, 1
      %s158 = smul.addr %s157, 32
      %s159 = smul.addr %s158, 8
      %s160 = scalar_lea.vmem %s3, %s159
      %p161 = scmp.lt.s32.totalorder %s14, 1
      %s162 = scalar_select %p161, %s14, 1
      %s163 = smul.addr %s162, 32
      %s164 = smul.addr %s163, 8
      %s165 = scalar_lea.vmem %s0, %s164
      %p166 = scmp.lt.s32.totalorder %s14, 1
      %s167 = scalar_select %p166, %s14, 1
      %s168 = smul.addr %s167, 32
      %s169 = smul.addr %s168, 8
      %s170 = scalar_lea.vmem %s3, %s169
      %v172 = vld [vmem:[%s165] sm:$0xff]
      %v173 = vld [vmem:[%s165 + $0x8] sm:$0xff]
      %v174 = vld [vmem:[%s165 + $0x10] sm:$0xff]
      %v175 = vld [vmem:[%s165 + $0x18] sm:$0xff]
      %v176 = vld [vmem:[%s165 + $0x20] sm:$0xff]
      %v177 = vld [vmem:[%s165 + $0x28] sm:$0xff]
      %v178 = vld [vmem:[%s165 + $0x30] sm:$0xff]
      %v179 = vld [vmem:[%s165 + $0x38] sm:$0xff]
      %v180 = vld [vmem:[%s165 + $0x40] sm:$0xff]
      %v181 = vld [vmem:[%s165 + $0x48] sm:$0xff]
      %v182 = vld [vmem:[%s165 + $0x50] sm:$0xff]
      %v183 = vld [vmem:[%s165 + $0x58] sm:$0xff]
      %v184 = vld [vmem:[%s165 + $0x60] sm:$0xff]
      %v185 = vld [vmem:[%s165 + $0x68] sm:$0xff]
      %v186 = vld [vmem:[%s165 + $0x70] sm:$0xff]
      %v187 = vld [vmem:[%s165 + $0x78] sm:$0xff]
      %v188 = vld [vmem:[%s165 + $0x80] sm:$0xff]
      %v189 = vld [vmem:[%s165 + $0x88] sm:$0xff]
      %v190 = vld [vmem:[%s165 + $0x90] sm:$0xff]
      %v191 = vld [vmem:[%s165 + $0x98] sm:$0xff]
      %v192 = vld [vmem:[%s165 + $0xa0] sm:$0xff]
      %v193 = vld [vmem:[%s165 + $0xa8] sm:$0xff]
      %v194 = vld [vmem:[%s165 + $0xb0] sm:$0xff]
      %v195 = vld [vmem:[%s165 + $0xb8] sm:$0xff]
      %v196 = vld [vmem:[%s165 + $0xc0] sm:$0xff]
      %v197 = vld [vmem:[%s165 + $0xc8] sm:$0xff]
      %v198 = vld [vmem:[%s165 + $0xd0] sm:$0xff]
      %v199 = vld [vmem:[%s165 + $0xd8] sm:$0xff]
      %v200 = vld [vmem:[%s165 + $0xe0] sm:$0xff]
      %v201 = vld [vmem:[%s165 + $0xe8] sm:$0xff]
      %v202 = vld [vmem:[%s165 + $0xf0] sm:$0xff]
      %v203 = vld [vmem:[%s165 + $0xf8] sm:$0xff]
      %vm204 = vcmask 27648
      %205 = vst.msk [vmem:[#allocation2] sm:$0xf] %vm204, 0
      %206 = vst.msk [vmem:[#allocation2 + $0x4] sm:$0xf] %vm204, 0
      %207 = vst.msk [vmem:[#allocation2 + $0x8] sm:$0xf] %vm204, 0
      %s208 = scalar_lea.vmem [#allocation2], 204
      %209 = vst.msk [vmem:[%s208] sm:$0xf] %vm204, 0
      %210 = vst.msk [vmem:[%s208 + $0x4] sm:$0xf] %vm204, 0
      %211 = vst.msk [vmem:[%s208 + $0x8] sm:$0xf] %vm204, 0
      %s212 = scalar_lea.vmem [#allocation2], 12
      %vm213 = vcmask 24576
      %vm214 = vsmask.f32 256
      %vm215 = vmand %vm213, %vm214
      %v216 = vld [vmem:[%s212] sm:$0x1]
      %v217 = vsel %vm215, 0, %v216
      %218 = vst [vmem:[%s212] sm:$0x1] %v217
      %v219 = vld [vmem:[%s212 + $0xc] sm:$0x1]
      %v220 = vsel %vm215, 0, %v219
      %221 = vst [vmem:[%s212 + $0xc] sm:$0x1] %v220
      %v222 = vld [vmem:[%s212 + $0x18] sm:$0x1]
      %v223 = vsel %vm215, 0, %v222
      %224 = vst [vmem:[%s212 + $0x18] sm:$0x1] %v223
      %v225 = vld [vmem:[%s212 + $0x24] sm:$0x1]
      %v226 = vsel %vm215, 0, %v225
      %227 = vst [vmem:[%s212 + $0x24] sm:$0x1] %v226
      %v228 = vld [vmem:[%s212 + $0x30] sm:$0x1]
      %v229 = vsel %vm215, 0, %v228
      %230 = vst [vmem:[%s212 + $0x30] sm:$0x1] %v229
      %v231 = vld [vmem:[%s212 + $0x3c] sm:$0x1]
      %v232 = vsel %vm215, 0, %v231
      %233 = vst [vmem:[%s212 + $0x3c] sm:$0x1] %v232
      %v234 = vld [vmem:[%s212 + $0x48] sm:$0x1]
      %v235 = vsel %vm215, 0, %v234
      %236 = vst [vmem:[%s212 + $0x48] sm:$0x1] %v235
      %v237 = vld [vmem:[%s212 + $0x54] sm:$0x1]
      %v238 = vsel %vm215, 0, %v237
      %239 = vst [vmem:[%s212 + $0x54] sm:$0x1] %v238
      %v240 = vld [vmem:[%s212 + $0x60] sm:$0x1]
      %v241 = vsel %vm215, 0, %v240
      %242 = vst [vmem:[%s212 + $0x60] sm:$0x1] %v241
      %v243 = vld [vmem:[%s212 + $0x6c] sm:$0x1]
      %v244 = vsel %vm215, 0, %v243
      %245 = vst [vmem:[%s212 + $0x6c] sm:$0x1] %v244
      %v246 = vld [vmem:[%s212 + $0x78] sm:$0x1]
      %v247 = vsel %vm215, 0, %v246
      %248 = vst [vmem:[%s212 + $0x78] sm:$0x1] %v247
      %v249 = vld [vmem:[%s212 + $0x84] sm:$0x1]
      %v250 = vsel %vm215, 0, %v249
      %251 = vst [vmem:[%s212 + $0x84] sm:$0x1] %v250
      %v252 = vld [vmem:[%s212 + $0x90] sm:$0x1]
      %v253 = vsel %vm215, 0, %v252
      %254 = vst [vmem:[%s212 + $0x90] sm:$0x1] %v253
      %v255 = vld [vmem:[%s212 + $0x9c] sm:$0x1]
      %v256 = vsel %vm215, 0, %v255
      %257 = vst [vmem:[%s212 + $0x9c] sm:$0x1] %v256
      %v258 = vld [vmem:[%s212 + $0xa8] sm:$0x1]
      %v259 = vsel %vm215, 0, %v258
      %260 = vst [vmem:[%s212 + $0xa8] sm:$0x1] %v259
      %v261 = vld [vmem:[%s212 + $0xb4] sm:$0x1]
      %v262 = vsel %vm215, 0, %v261
      %263 = vst [vmem:[%s212 + $0xb4] sm:$0x1] %v262
      %vm264 = vcmask 27648
      %vm265 = vsmask.f32 7938
      %vm266 = vmand %vm264, %vm265
      %v267 = vld [vmem:[%s212 + $0x8] sm:$0xf]
      %v268 = vsel %vm266, 0, %v267
      %269 = vst [vmem:[%s212 + $0x8] sm:$0xf] %v268
      %v270 = vld [vmem:[%s212 + $0x14] sm:$0xf]
      %v271 = vsel %vm266, 0, %v270
      %272 = vst [vmem:[%s212 + $0x14] sm:$0xf] %v271
      %v273 = vld [vmem:[%s212 + $0x20] sm:$0xf]
      %v274 = vsel %vm266, 0, %v273
      %275 = vst [vmem:[%s212 + $0x20] sm:$0xf] %v274
      %v276 = vld [vmem:[%s212 + $0x2c] sm:$0xf]
      %v277 = vsel %vm266, 0, %v276
      %278 = vst [vmem:[%s212 + $0x2c] sm:$0xf] %v277
      %v279 = vld [vmem:[%s212 + $0x38] sm:$0xf]
      %v280 = vsel %vm266, 0, %v279
      %281 = vst [vmem:[%s212 + $0x38] sm:$0xf] %v280
      %v282 = vld [vmem:[%s212 + $0x44] sm:$0xf]
      %v283 = vsel %vm266, 0, %v282
      %284 = vst [vmem:[%s212 + $0x44] sm:$0xf] %v283
      %v285 = vld [vmem:[%s212 + $0x50] sm:$0xf]
      %v286 = vsel %vm266, 0, %v285
      %287 = vst [vmem:[%s212 + $0x50] sm:$0xf] %v286
      %v288 = vld [vmem:[%s212 + $0x5c] sm:$0xf]
      %v289 = vsel %vm266, 0, %v288
      %290 = vst [vmem:[%s212 + $0x5c] sm:$0xf] %v289
      %v291 = vld [vmem:[%s212 + $0x68] sm:$0xf]
      %v292 = vsel %vm266, 0, %v291
      %293 = vst [vmem:[%s212 + $0x68] sm:$0xf] %v292
      %v294 = vld [vmem:[%s212 + $0x74] sm:$0xf]
      %v295 = vsel %vm266, 0, %v294
      %296 = vst [vmem:[%s212 + $0x74] sm:$0xf] %v295
      %v297 = vld [vmem:[%s212 + $0x80] sm:$0xf]
      %v298 = vsel %vm266, 0, %v297
      %299 = vst [vmem:[%s212 + $0x80] sm:$0xf] %v298
      %v300 = vld [vmem:[%s212 + $0x8c] sm:$0xf]
      %v301 = vsel %vm266, 0, %v300
      %302 = vst [vmem:[%s212 + $0x8c] sm:$0xf] %v301
      %v303 = vld [vmem:[%s212 + $0x98] sm:$0xf]
      %v304 = vsel %vm266, 0, %v303
      %305 = vst [vmem:[%s212 + $0x98] sm:$0xf] %v304
      %v306 = vld [vmem:[%s212 + $0xa4] sm:$0xf]
      %v307 = vsel %vm266, 0, %v306
      %308 = vst [vmem:[%s212 + $0xa4] sm:$0xf] %v307
      %v309 = vld [vmem:[%s212 + $0xb0] sm:$0xf]
      %v310 = vsel %vm266, 0, %v309
      %311 = vst [vmem:[%s212 + $0xb0] sm:$0xf] %v310
      %v312 = vld [vmem:[%s212 + $0xbc] sm:$0xf]
      %v313 = vsel %vm266, 0, %v312
      %314 = vst [vmem:[%s212 + $0xbc] sm:$0xf] %v313
      %v315 = vpack.c.bf16 %v173, %v172
      %v316 = vpack.c.bf16 %v175, %v174
      %v317 = vpack.c.bf16 %v177, %v176
      %v318 = vpack.c.bf16 %v179, %v178
      %v319 = vpack.c.bf16 %v181, %v180
      %v320 = vpack.c.bf16 %v183, %v182
      %v321 = vpack.c.bf16 %v185, %v184
      %v322 = vpack.c.bf16 %v187, %v186
      %v323 = vpack.c.bf16 %v189, %v188
      %v324 = vpack.c.bf16 %v191, %v190
      %v325 = vpack.c.bf16 %v193, %v192
      %v326 = vpack.c.bf16 %v195, %v194
      %v327 = vpack.c.bf16 %v197, %v196
      %v328 = vpack.c.bf16 %v199, %v198
      %v329 = vpack.c.bf16 %v201, %v200
      %v330 = vpack.c.bf16 %v203, %v202
      %v347 = vunpack.c.l.b16 %v315
      %v348 = vunpack.c.h.b16 %v315
      %v349 = vunpack.c.l.b16 %v316
      %v350 = vunpack.c.h.b16 %v316
      %v351 = vunpack.c.l.b16 %v317
      %v352 = vunpack.c.h.b16 %v317
      %v353 = vunpack.c.l.b16 %v318
      %v354 = vunpack.c.h.b16 %v318
      %v355 = vunpack.c.l.b16 %v319
      %v356 = vunpack.c.h.b16 %v319
      %v357 = vunpack.c.l.b16 %v320
      %v358 = vunpack.c.h.b16 %v320
      %v359 = vunpack.c.l.b16 %v321
      %v360 = vunpack.c.h.b16 %v321
      %v361 = vunpack.c.l.b16 %v322
      %v362 = vunpack.c.h.b16 %v322
      %v363 = vunpack.c.l.b16 %v323
      %v364 = vunpack.c.h.b16 %v323
      %v365 = vunpack.c.l.b16 %v324
      %v366 = vunpack.c.h.b16 %v324
      %v367 = vunpack.c.l.b16 %v325
      %v368 = vunpack.c.h.b16 %v325
      %v369 = vunpack.c.l.b16 %v326
      %v370 = vunpack.c.h.b16 %v326
      %v371 = vunpack.c.l.b16 %v327
      %v372 = vunpack.c.h.b16 %v327
      %v373 = vunpack.c.l.b16 %v328
      %v374 = vunpack.c.h.b16 %v328
      %v375 = vunpack.c.l.b16 %v329
      %v376 = vunpack.c.h.b16 %v329
      %v377 = vunpack.c.l.b16 %v330
      %v378 = vunpack.c.h.b16 %v330
      %v379 = vpack.c.b16 %v347, %v347
      %v380 = vpack.c.b16 %v348, %v348
      %v381 = vpack.c.b16 %v349, %v349
      %v382 = vpack.c.b16 %v350, %v350
      %v383 = vpack.c.b16 %v351, %v351
      %v384 = vpack.c.b16 %v352, %v352
      %v385 = vpack.c.b16 %v353, %v353
      %v386 = vpack.c.b16 %v354, %v354
      %v387 = vpack.c.b16 %v355, %v355
      %v388 = vpack.c.b16 %v356, %v356
      %v389 = vpack.c.b16 %v357, %v357
      %v390 = vpack.c.b16 %v358, %v358
      %v391 = vpack.c.b16 %v359, %v359
      %v392 = vpack.c.b16 %v360, %v360
      %v393 = vpack.c.b16 %v361, %v361
      %v394 = vpack.c.b16 %v362, %v362
      %v395 = vpack.c.b16 %v363, %v363
      %v396 = vpack.c.b16 %v364, %v364
      %v397 = vpack.c.b16 %v365, %v365
      %v398 = vpack.c.b16 %v366, %v366
      %v399 = vpack.c.b16 %v367, %v367
      %v400 = vpack.c.b16 %v368, %v368
      %v401 = vpack.c.b16 %v369, %v369
      %v402 = vpack.c.b16 %v370, %v370
      %v403 = vpack.c.b16 %v371, %v371
      %v404 = vpack.c.b16 %v372, %v372
      %v405 = vpack.c.b16 %v373, %v373
      %v406 = vpack.c.b16 %v374, %v374
      %v407 = vpack.c.b16 %v375, %v375
      %v408 = vpack.c.b16 %v376, %v376
      %v409 = vpack.c.b16 %v377, %v377
      %v410 = vpack.c.b16 %v378, %v378
      %vm411 = vsmask.f32 4368
      %vm412 = vmor %vm214, %vm411
      %v414 = vshrl.u32 %v379, 16
      %v416 = vrot.slane %v414, 7
      %v417 = vshll.u32 %v379, 16
      %v419 = vor.u32 %v416, %v417
      %v420 = vrot.slane %v416, 4
      %v422 = vshrl.u32 %v380, 16
      %v424 = vrot.slane %v422, 7
      %v425 = vshll.u32 %v380, 16
      %v427 = vor.u32 %v424, %v425
      %v428 = vsel %vm412, %v420, %v427
      %v429 = vrot.slane %v424, 4
      %v431 = vshrl.u32 %v381, 16
      %v433 = vrot.slane %v431, 7
      %v434 = vshll.u32 %v381, 16
      %v436 = vor.u32 %v433, %v434
      %v437 = vrot.slane %v433, 4
      %v439 = vshrl.u32 %v382, 16
      %v441 = vrot.slane %v439, 7
      %v442 = vshll.u32 %v382, 16
      %v444 = vor.u32 %v441, %v442
      %v445 = vsel %vm412, %v437, %v444
      %v446 = vrot.slane %v441, 4
      %v448 = vshrl.u32 %v383, 16
      %v450 = vrot.slane %v448, 7
      %v451 = vshll.u32 %v383, 16
      %v453 = vor.u32 %v450, %v451
      %v454 = vrot.slane %v450, 4
      %v456 = vshrl.u32 %v384, 16
      %v458 = vrot.slane %v456, 7
      %v459 = vshll.u32 %v384, 16
      %v461 = vor.u32 %v458, %v459
      %v462 = vsel %vm412, %v454, %v461
      %v463 = vrot.slane %v458, 4
      %v465 = vshrl.u32 %v385, 16
      %v467 = vrot.slane %v465, 7
      %v468 = vshll.u32 %v385, 16
      %v470 = vor.u32 %v467, %v468
      %v471 = vrot.slane %v467, 4
      %v473 = vshrl.u32 %v386, 16
      %v475 = vrot.slane %v473, 7
      %v476 = vshll.u32 %v386, 16
      %v478 = vor.u32 %v475, %v476
      %v479 = vsel %vm412, %v471, %v478
      %v480 = vrot.slane %v475, 4
      %v482 = vshrl.u32 %v387, 16
      %v484 = vrot.slane %v482, 7
      %v485 = vshll.u32 %v387, 16
      %v487 = vor.u32 %v484, %v485
      %v488 = vrot.slane %v484, 4
      %v490 = vshrl.u32 %v388, 16
      %v492 = vrot.slane %v490, 7
      %v493 = vshll.u32 %v388, 16
      %v495 = vor.u32 %v492, %v493
      %v496 = vsel %vm412, %v488, %v495
      %v497 = vrot.slane %v492, 4
      %v499 = vshrl.u32 %v389, 16
      %v501 = vrot.slane %v499, 7
      %v502 = vshll.u32 %v389, 16
      %v504 = vor.u32 %v501, %v502
      %v505 = vrot.slane %v501, 4
      %v507 = vshrl.u32 %v390, 16
      %v509 = vrot.slane %v507, 7
      %v510 = vshll.u32 %v390, 16
      %v512 = vor.u32 %v509, %v510
      %v513 = vsel %vm412, %v505, %v512
      %v514 = vrot.slane %v509, 4
      %v516 = vshrl.u32 %v391, 16
      %v518 = vrot.slane %v516, 7
      %v519 = vshll.u32 %v391, 16
      %v521 = vor.u32 %v518, %v519
      %v522 = vrot.slane %v518, 4
      %v524 = vshrl.u32 %v392, 16
      %v526 = vrot.slane %v524, 7
      %v527 = vshll.u32 %v392, 16
      %v529 = vor.u32 %v526, %v527
      %v530 = vsel %vm412, %v522, %v529
      %v531 = vrot.slane %v526, 4
      %v533 = vshrl.u32 %v393, 16
      %v535 = vrot.slane %v533, 7
      %v536 = vshll.u32 %v393, 16
      %v538 = vor.u32 %v535, %v536
      %v539 = vrot.slane %v535, 4
      %v541 = vshrl.u32 %v394, 16
      %v543 = vrot.slane %v541, 7
      %v544 = vshll.u32 %v394, 16
      %v546 = vor.u32 %v543, %v544
      %v547 = vsel %vm412, %v539, %v546
      %v548 = vrot.slane %v543, 4
      %v550 = vshrl.u32 %v395, 16
      %v552 = vrot.slane %v550, 7
      %v553 = vshll.u32 %v395, 16
      %v555 = vor.u32 %v552, %v553
      %v556 = vrot.slane %v552, 4
      %v558 = vshrl.u32 %v396, 16
      %v560 = vrot.slane %v558, 7
      %v561 = vshll.u32 %v396, 16
      %v563 = vor.u32 %v560, %v561
      %v564 = vsel %vm412, %v556, %v563
      %v565 = vrot.slane %v560, 4
      %v567 = vshrl.u32 %v397, 16
      %v569 = vrot.slane %v567, 7
      %v570 = vshll.u32 %v397, 16
      %v572 = vor.u32 %v569, %v570
      %v573 = vrot.slane %v569, 4
      %v575 = vshrl.u32 %v398, 16
      %v577 = vrot.slane %v575, 7
      %v578 = vshll.u32 %v398, 16
      %v580 = vor.u32 %v577, %v578
      %v581 = vsel %vm412, %v573, %v580
      %v582 = vrot.slane %v577, 4
      %v584 = vshrl.u32 %v399, 16
      %v586 = vrot.slane %v584, 7
      %v587 = vshll.u32 %v399, 16
      %v589 = vor.u32 %v586, %v587
      %v590 = vrot.slane %v586, 4
      %v592 = vshrl.u32 %v400, 16
      %v594 = vrot.slane %v592, 7
      %v595 = vshll.u32 %v400, 16
      %v597 = vor.u32 %v594, %v595
      %v598 = vsel %vm412, %v590, %v597
      %v599 = vrot.slane %v594, 4
      %v601 = vshrl.u32 %v401, 16
      %v603 = vrot.slane %v601, 7
      %v604 = vshll.u32 %v401, 16
      %v606 = vor.u32 %v603, %v604
      %v607 = vrot.slane %v603, 4
      %v609 = vshrl.u32 %v402, 16
      %v611 = vrot.slane %v609, 7
      %v612 = vshll.u32 %v402, 16
      %v614 = vor.u32 %v611, %v612
      %v615 = vsel %vm412, %v607, %v614
      %v616 = vrot.slane %v611, 4
      %v618 = vshrl.u32 %v403, 16
      %v620 = vrot.slane %v618, 7
      %v621 = vshll.u32 %v403, 16
      %v623 = vor.u32 %v620, %v621
      %v624 = vrot.slane %v620, 4
      %v626 = vshrl.u32 %v404, 16
      %v628 = vrot.slane %v626, 7
      %v629 = vshll.u32 %v404, 16
      %v631 = vor.u32 %v628, %v629
      %v632 = vsel %vm412, %v624, %v631
      %v633 = vrot.slane %v628, 4
      %v635 = vshrl.u32 %v405, 16
      %v637 = vrot.slane %v635, 7
      %v638 = vshll.u32 %v405, 16
      %v640 = vor.u32 %v637, %v638
      %v641 = vrot.slane %v637, 4
      %v643 = vshrl.u32 %v406, 16
      %v645 = vrot.slane %v643, 7
      %v646 = vshll.u32 %v406, 16
      %v648 = vor.u32 %v645, %v646
      %v649 = vsel %vm412, %v641, %v648
      %v650 = vrot.slane %v645, 4
      %v652 = vshrl.u32 %v407, 16
      %v654 = vrot.slane %v652, 7
      %v655 = vshll.u32 %v407, 16
      %v657 = vor.u32 %v654, %v655
      %v658 = vrot.slane %v654, 4
      %v660 = vshrl.u32 %v408, 16
      %v662 = vrot.slane %v660, 7
      %v663 = vshll.u32 %v408, 16
      %v665 = vor.u32 %v662, %v663
      %v666 = vsel %vm412, %v658, %v665
      %v667 = vrot.slane %v662, 4
      %v669 = vshrl.u32 %v409, 16
      %v671 = vrot.slane %v669, 7
      %v672 = vshll.u32 %v409, 16
      %v674 = vor.u32 %v671, %v672
      %v675 = vrot.slane %v671, 4
      %v677 = vshrl.u32 %v410, 16
      %v679 = vrot.slane %v677, 7
      %v680 = vshll.u32 %v410, 16
      %v682 = vor.u32 %v679, %v680
      %v683 = vsel %vm412, %v675, %v682
      %v684 = vrot.slane %v679, 4
      %v733 = vld [vmem:[%s212] sm:$0xf]
      %v734 = vsel %vm266, %v419, %v733
      %735 = vst [vmem:[%s212] sm:$0xf] %v734
      %736 = vst.msk [vmem:[%s212 + $0x4] sm:$0xf] %vm204, %v428
      %v737 = vld [vmem:[%s212 + $0x8] sm:$0x1]
      %v738 = vsel %vm215, %v429, %v737
      %739 = vst [vmem:[%s212 + $0x8] sm:$0x1] %v738
      %v740 = vld [vmem:[%s212 + $0xc] sm:$0xf]
      %v741 = vsel %vm266, %v436, %v740
      %742 = vst [vmem:[%s212 + $0xc] sm:$0xf] %v741
      %743 = vst.msk [vmem:[%s212 + $0x10] sm:$0xf] %vm204, %v445
      %v744 = vld [vmem:[%s212 + $0x14] sm:$0x1]
      %v745 = vsel %vm215, %v446, %v744
      %746 = vst [vmem:[%s212 + $0x14] sm:$0x1] %v745
      %v747 = vld [vmem:[%s212 + $0x18] sm:$0xf]
      %v748 = vsel %vm266, %v453, %v747
      %749 = vst [vmem:[%s212 + $0x18] sm:$0xf] %v748
      %750 = vst.msk [vmem:[%s212 + $0x1c] sm:$0xf] %vm204, %v462
      %v751 = vld [vmem:[%s212 + $0x20] sm:$0x1]
      %v752 = vsel %vm215, %v463, %v751
      %753 = vst [vmem:[%s212 + $0x20] sm:$0x1] %v752
      %v754 = vld [vmem:[%s212 + $0x24] sm:$0xf]
      %v755 = vsel %vm266, %v470, %v754
      %756 = vst [vmem:[%s212 + $0x24] sm:$0xf] %v755
      %757 = vst.msk [vmem:[%s212 + $0x28] sm:$0xf] %vm204, %v479
      %v758 = vld [vmem:[%s212 + $0x2c] sm:$0x1]
      %v759 = vsel %vm215, %v480, %v758
      %760 = vst [vmem:[%s212 + $0x2c] sm:$0x1] %v759
      %v761 = vld [vmem:[%s212 + $0x30] sm:$0xf]
      %v762 = vsel %vm266, %v487, %v761
      %763 = vst [vmem:[%s212 + $0x30] sm:$0xf] %v762
      %764 = vst.msk [vmem:[%s212 + $0x34] sm:$0xf] %vm204, %v496
      %v765 = vld [vmem:[%s212 + $0x38] sm:$0x1]
      %v766 = vsel %vm215, %v497, %v765
      %767 = vst [vmem:[%s212 + $0x38] sm:$0x1] %v766
      %v768 = vld [vmem:[%s212 + $0x3c] sm:$0xf]
      %v769 = vsel %vm266, %v504, %v768
      %770 = vst [vmem:[%s212 + $0x3c] sm:$0xf] %v769
      %771 = vst.msk [vmem:[%s212 + $0x40] sm:$0xf] %vm204, %v513
      %v772 = vld [vmem:[%s212 + $0x44] sm:$0x1]
      %v773 = vsel %vm215, %v514, %v772
      %774 = vst [vmem:[%s212 + $0x44] sm:$0x1] %v773
      %v775 = vld [vmem:[%s212 + $0x48] sm:$0xf]
      %v776 = vsel %vm266, %v521, %v775
      %777 = vst [vmem:[%s212 + $0x48] sm:$0xf] %v776
      %778 = vst.msk [vmem:[%s212 + $0x4c] sm:$0xf] %vm204, %v530
      %v779 = vld [vmem:[%s212 + $0x50] sm:$0x1]
      %v780 = vsel %vm215, %v531, %v779
      %781 = vst [vmem:[%s212 + $0x50] sm:$0x1] %v780
      %v782 = vld [vmem:[%s212 + $0x54] sm:$0xf]
      %v783 = vsel %vm266, %v538, %v782
      %784 = vst [vmem:[%s212 + $0x54] sm:$0xf] %v783
      %785 = vst.msk [vmem:[%s212 + $0x58] sm:$0xf] %vm204, %v547
      %v786 = vld [vmem:[%s212 + $0x5c] sm:$0x1]
      %v787 = vsel %vm215, %v548, %v786
      %788 = vst [vmem:[%s212 + $0x5c] sm:$0x1] %v787
      %v789 = vld [vmem:[%s212 + $0x60] sm:$0xf]
      %v790 = vsel %vm266, %v555, %v789
      %791 = vst [vmem:[%s212 + $0x60] sm:$0xf] %v790
      %792 = vst.msk [vmem:[%s212 + $0x64] sm:$0xf] %vm204, %v564
      %v793 = vld [vmem:[%s212 + $0x68] sm:$0x1]
      %v794 = vsel %vm215, %v565, %v793
      %795 = vst [vmem:[%s212 + $0x68] sm:$0x1] %v794
      %v796 = vld [vmem:[%s212 + $0x6c] sm:$0xf]
      %v797 = vsel %vm266, %v572, %v796
      %798 = vst [vmem:[%s212 + $0x6c] sm:$0xf] %v797
      %799 = vst.msk [vmem:[%s212 + $0x70] sm:$0xf] %vm204, %v581
      %v800 = vld [vmem:[%s212 + $0x74] sm:$0x1]
      %v801 = vsel %vm215, %v582, %v800
      %802 = vst [vmem:[%s212 + $0x74] sm:$0x1] %v801
      %v803 = vld [vmem:[%s212 + $0x78] sm:$0xf]
      %v804 = vsel %vm266, %v589, %v803
      %805 = vst [vmem:[%s212 + $0x78] sm:$0xf] %v804
      %806 = vst.msk [vmem:[%s212 + $0x7c] sm:$0xf] %vm204, %v598
      %v807 = vld [vmem:[%s212 + $0x80] sm:$0x1]
      %v808 = vsel %vm215, %v599, %v807
      %809 = vst [vmem:[%s212 + $0x80] sm:$0x1] %v808
      %v810 = vld [vmem:[%s212 + $0x84] sm:$0xf]
      %v811 = vsel %vm266, %v606, %v810
      %812 = vst [vmem:[%s212 + $0x84] sm:$0xf] %v811
      %813 = vst.msk [vmem:[%s212 + $0x88] sm:$0xf] %vm204, %v615
      %v814 = vld [vmem:[%s212 + $0x8c] sm:$0x1]
      %v815 = vsel %vm215, %v616, %v814
      %816 = vst [vmem:[%s212 + $0x8c] sm:$0x1] %v815
      %v817 = vld [vmem:[%s212 + $0x90] sm:$0xf]
      %v818 = vsel %vm266, %v623, %v817
      %819 = vst [vmem:[%s212 + $0x90] sm:$0xf] %v818
      %820 = vst.msk [vmem:[%s212 + $0x94] sm:$0xf] %vm204, %v632
      %v821 = vld [vmem:[%s212 + $0x98] sm:$0x1]
      %v822 = vsel %vm215, %v633, %v821
      %823 = vst [vmem:[%s212 + $0x98] sm:$0x1] %v822
      %v824 = vld [vmem:[%s212 + $0x9c] sm:$0xf]
      %v825 = vsel %vm266, %v640, %v824
      %826 = vst [vmem:[%s212 + $0x9c] sm:$0xf] %v825
      %827 = vst.msk [vmem:[%s212 + $0xa0] sm:$0xf] %vm204, %v649
      %v828 = vld [vmem:[%s212 + $0xa4] sm:$0x1]
      %v829 = vsel %vm215, %v650, %v828
      %830 = vst [vmem:[%s212 + $0xa4] sm:$0x1] %v829
      %v831 = vld [vmem:[%s212 + $0xa8] sm:$0xf]
      %v832 = vsel %vm266, %v657, %v831
      %833 = vst [vmem:[%s212 + $0xa8] sm:$0xf] %v832
      %834 = vst.msk [vmem:[%s212 + $0xac] sm:$0xf] %vm204, %v666
      %v835 = vld [vmem:[%s212 + $0xb0] sm:$0x1]
      %v836 = vsel %vm215, %v667, %v835
      %837 = vst [vmem:[%s212 + $0xb0] sm:$0x1] %v836
      %v838 = vld [vmem:[%s212 + $0xb4] sm:$0xf]
      %v839 = vsel %vm266, %v674, %v838
      %840 = vst [vmem:[%s212 + $0xb4] sm:$0xf] %v839
      %841 = vst.msk [vmem:[%s212 + $0xb8] sm:$0xf] %vm204, %v683
      %v842 = vld [vmem:[%s212 + $0xbc] sm:$0x1]
      %v843 = vsel %vm215, %v684, %v842
      %844 = vst [vmem:[%s212 + $0xbc] sm:$0x1] %v843
      %v845 = vld [vmem:[#allocation2] sm:$0xf]
      %v846 = vld [vmem:[#allocation2 + $0x4] sm:$0xf]
      %v847 = vld [vmem:[#allocation2 + $0x8] sm:$0xf]
      %v848 = vld [vmem:[#allocation2 + $0xc] sm:$0xf]
      %v849 = vld [vmem:[#allocation2 + $0x10] sm:$0xf]
      %v850 = vld [vmem:[#allocation2 + $0x14] sm:$0xf]
      %v851 = vld [vmem:[#allocation2 + $0x18] sm:$0xf]
      %v852 = vld [vmem:[#allocation2 + $0x1c] sm:$0xf]
      %v853 = vld [vmem:[#allocation2 + $0x20] sm:$0xf]
      %v854 = vld [vmem:[#allocation2 + $0x24] sm:$0xf]
      %v855 = vld [vmem:[#allocation2 + $0x28] sm:$0xf]
      %v856 = vld [vmem:[#allocation2 + $0x2c] sm:$0xf]
      %v857 = vld [vmem:[#allocation2 + $0x30] sm:$0xf]
      %v858 = vld [vmem:[#allocation2 + $0x34] sm:$0xf]
      %v859 = vld [vmem:[#allocation2 + $0x38] sm:$0xf]
      %v860 = vld [vmem:[#allocation2 + $0x3c] sm:$0xf]
      %v861 = vld [vmem:[#allocation2 + $0x40] sm:$0xf]
      %v862 = vld [vmem:[#allocation2 + $0x44] sm:$0xf]
      %v863 = vld [vmem:[#allocation2 + $0x48] sm:$0xf]
      %v864 = vld [vmem:[#allocation2 + $0x4c] sm:$0xf]
      %v865 = vld [vmem:[#allocation2 + $0x50] sm:$0xf]
      %v866 = vld [vmem:[#allocation2 + $0x54] sm:$0xf]
      %v867 = vld [vmem:[#allocation2 + $0x58] sm:$0xf]
      %v868 = vld [vmem:[#allocation2 + $0x5c] sm:$0xf]
      %v869 = vld [vmem:[#allocation2 + $0x60] sm:$0xf]
      %v870 = vld [vmem:[#allocation2 + $0x64] sm:$0xf]
      %v871 = vld [vmem:[#allocation2 + $0x68] sm:$0xf]
      %v872 = vld [vmem:[#allocation2 + $0x6c] sm:$0xf]
      %v873 = vld [vmem:[#allocation2 + $0x70] sm:$0xf]
      %v874 = vld [vmem:[#allocation2 + $0x74] sm:$0xf]
      %v875 = vld [vmem:[#allocation2 + $0x78] sm:$0xf]
      %v876 = vld [vmem:[#allocation2 + $0x7c] sm:$0xf]
      %v877 = vld [vmem:[#allocation2 + $0x80] sm:$0xf]
      %v878 = vld [vmem:[#allocation2 + $0x84] sm:$0xf]
      %v879 = vld [vmem:[#allocation2 + $0x88] sm:$0xf]
      %v880 = vld [vmem:[#allocation2 + $0x8c] sm:$0xf]
      %v881 = vld [vmem:[#allocation2 + $0x90] sm:$0xf]
      %v882 = vld [vmem:[#allocation2 + $0x94] sm:$0xf]
      %v883 = vld [vmem:[#allocation2 + $0x98] sm:$0xf]
      %v884 = vld [vmem:[#allocation2 + $0x9c] sm:$0xf]
      %v885 = vld [vmem:[#allocation2 + $0xa0] sm:$0xf]
      %v886 = vld [vmem:[#allocation2 + $0xa4] sm:$0xf]
      %v887 = vld [vmem:[#allocation2 + $0xa8] sm:$0xf]
      %v888 = vld [vmem:[#allocation2 + $0xac] sm:$0xf]
      %v889 = vld [vmem:[#allocation2 + $0xb0] sm:$0xf]
      %v890 = vld [vmem:[#allocation2 + $0xb4] sm:$0xf]
      %v891 = vld [vmem:[#allocation2 + $0xb8] sm:$0xf]
      %v892 = vld [vmem:[#allocation2 + $0xbc] sm:$0xf]
      %v893 = vld [vmem:[%s1] sm:$0x3]
      %v942 = vunpack.c.l.b16 %v845
      %v943 = vunpack.c.l.b16 %v846
      %v944 = vunpack.c.l.b16 %v847
      %v945 = vunpack.c.l.b16 %v848
      %v946 = vunpack.c.l.b16 %v849
      %v947 = vunpack.c.l.b16 %v850
      %v948 = vunpack.c.l.b16 %v851
      %v949 = vunpack.c.l.b16 %v852
      %v950 = vunpack.c.l.b16 %v853
      %v951 = vunpack.c.l.b16 %v854
      %v952 = vunpack.c.l.b16 %v855
      %v953 = vunpack.c.l.b16 %v856
      %v954 = vunpack.c.l.b16 %v857
      %v955 = vunpack.c.l.b16 %v858
      %v956 = vunpack.c.l.b16 %v859
      %v957 = vunpack.c.l.b16 %v860
      %v958 = vunpack.c.l.b16 %v861
      %v959 = vunpack.c.l.b16 %v862
      %v960 = vunpack.c.l.b16 %v863
      %v961 = vunpack.c.l.b16 %v864
      %v962 = vunpack.c.l.b16 %v865
      %v963 = vunpack.c.l.b16 %v866
      %v964 = vunpack.c.l.b16 %v867
      %v965 = vunpack.c.l.b16 %v868
      %v966 = vunpack.c.l.b16 %v869
      %v967 = vunpack.c.l.b16 %v870
      %v968 = vunpack.c.l.b16 %v871
      %v969 = vunpack.c.l.b16 %v872
      %v970 = vunpack.c.l.b16 %v873
      %v971 = vunpack.c.l.b16 %v874
      %v972 = vunpack.c.l.b16 %v875
      %v973 = vunpack.c.l.b16 %v876
      %v974 = vunpack.c.l.b16 %v877
      %v975 = vunpack.c.l.b16 %v878
      %v976 = vunpack.c.l.b16 %v879
      %v977 = vunpack.c.l.b16 %v880
      %v978 = vunpack.c.l.b16 %v881
      %v979 = vunpack.c.l.b16 %v882
      %v980 = vunpack.c.l.b16 %v883
      %v981 = vunpack.c.l.b16 %v884
      %v982 = vunpack.c.l.b16 %v885
      %v983 = vunpack.c.l.b16 %v886
      %v984 = vunpack.c.l.b16 %v887
      %v985 = vunpack.c.l.b16 %v888
      %v986 = vunpack.c.l.b16 %v889
      %v987 = vunpack.c.l.b16 %v890
      %v988 = vunpack.c.l.b16 %v891
      %v989 = vunpack.c.l.b16 %v892
      %v990 = vpack.c.b16 %v943, %v942
      %v991 = vpack.c.b16 %v945, %v944
      %v992 = vpack.c.b16 %v947, %v946
      %v993 = vpack.c.b16 %v949, %v948
      %v994 = vpack.c.b16 %v951, %v950
      %v995 = vpack.c.b16 %v953, %v952
      %v996 = vpack.c.b16 %v955, %v954
      %v997 = vpack.c.b16 %v957, %v956
      %v998 = vpack.c.b16 %v959, %v958
      %v999 = vpack.c.b16 %v961, %v960
      %v1000 = vpack.c.b16 %v963, %v962
      %v1001 = vpack.c.b16 %v965, %v964
      %v1002 = vpack.c.b16 %v967, %v966
      %v1003 = vpack.c.b16 %v969, %v968
      %v1004 = vpack.c.b16 %v971, %v970
      %v1005 = vpack.c.b16 %v973, %v972
      %v1006 = vpack.c.b16 %v975, %v974
      %v1007 = vpack.c.b16 %v977, %v976
      %v1008 = vpack.c.b16 %v979, %v978
      %v1009 = vpack.c.b16 %v981, %v980
      %v1010 = vpack.c.b16 %v983, %v982
      %v1011 = vpack.c.b16 %v985, %v984
      %v1012 = vpack.c.b16 %v987, %v986
      %v1013 = vpack.c.b16 %v989, %v988
      %vm1014 = vcmask 31744
      %v1016 = vsel %vm1014, %v990, 0
      %v1019 = vsel %vm1014, %v991, 0
      %v1022 = vsel %vm1014, %v992, 0
      %v1025 = vsel %vm1014, %v993, 0
      %v1028 = vsel %vm1014, %v994, 0
      %v1031 = vsel %vm1014, %v995, 0
      %v1034 = vsel %vm1014, %v996, 0
      %v1037 = vsel %vm1014, %v997, 0
      %v1040 = vsel %vm1014, %v998, 0
      %v1043 = vsel %vm1014, %v999, 0
      %v1046 = vsel %vm1014, %v1000, 0
      %v1049 = vsel %vm1014, %v1001, 0
      %v1052 = vsel %vm1014, %v1002, 0
      %v1055 = vsel %vm1014, %v1003, 0
      %v1058 = vsel %vm1014, %v1004, 0
      %v1061 = vsel %vm1014, %v1005, 0
      %v1064 = vsel %vm1014, %v1006, 0
      %v1067 = vsel %vm1014, %v1007, 0
      %v1070 = vsel %vm1014, %v1008, 0
      %v1073 = vsel %vm1014, %v1009, 0
      %v1076 = vsel %vm1014, %v1010, 0
      %v1079 = vsel %vm1014, %v1011, 0
      %v1082 = vsel %vm1014, %v1012, 0
      %v1085 = vsel %vm1014, %v1013, 0
      %vm1087 = vcmask 1041408
      %v1089 = vsel %vm1087, %v893, 0
      %1091 = vmatprep.subr.bf16.mxu0 0
      %1092 = vmatpush1.bf16.msra.mxu0 %v1089
      %1093 = vmatprep.subr.bf16.mxu0 0
      %1094 = vmatpush1.bf16.msra.mxu0 0
      %1095 = vmatprep.subr.bf16.mxu0 0
      %1096 = vmatpush1.bf16.msra.mxu0 0
      %1097 = vmatprep.subr.bf16.mxu0 0
      %1098 = vmatpush1.bf16.msra.mxu0 0
      %1099 = vmatprep.subr.bf16.mxu0 0
      %1100 = vmatpush1.bf16.msra.mxu0 0
      %1101 = vmatprep.subr.bf16.mxu0 0
      %1102 = vmatpush1.bf16.msra.mxu0 0
      %1103 = vmatprep.subr.bf16.mxu0 0
      %1104 = vmatpush1.bf16.msra.mxu0 0
      %1105 = vmatprep.subr.bf16.mxu0 0
      %1106 = vmatpush1.bf16.msra.mxu0 0
      %1107 = vmatprep.subr.bf16.mxu0 0
      %1108 = vmatpush1.bf16.msra.mxu0 0
      %1109 = vmatprep.subr.bf16.mxu0 0
      %1110 = vmatpush1.bf16.msra.mxu0 0
      %1111 = vmatprep.subr.bf16.mxu0 0
      %1112 = vmatpush1.bf16.msra.mxu0 0
      %1113 = vmatprep.subr.bf16.mxu0 0
      %1114 = vmatpush1.bf16.msra.mxu0 0
      %1115 = vmatprep.subr.bf16.mxu0 0
      %1116 = vmatpush1.bf16.msra.mxu0 0
      %1117 = vmatprep.subr.bf16.mxu0 0
      %1118 = vmatpush1.bf16.msra.mxu0 0
      %1119 = vmatprep.subr.bf16.mxu0 0
      %1120 = vmatpush1.bf16.msra.mxu0 0
      %1121 = vmatprep.subr.bf16.mxu0 0
      %1122 = vmatpush1.bf16.msra.mxu0 0
      %1123 = vmatprep.mubr.bf16.mxu0 0
      %1124 = vmatmul.mubr.bf16.gmra.mrb[0].mxu0 %v1016
      %v1125 = vpop.f32.mrb[0].mxu0
      %v1126 = vadd.f32 0.0, %v1125
      %v1127 = vpop.f32.mrb[0].mxu0
      %v1128 = vpop.f32.mrb[0].mxu0
      %v1129 = vadd.f32 0.0, %v1128
      %v1130 = vpop.f32.mrb[0].mxu0
      %1131 = vmatprep.mubr.bf16.mxu0 0
      %1132 = vmatmul.mubr.bf16.gmra.mrb[0].mxu0 %v1019
      %v1133 = vpop.f32.mrb[0].mxu0
      %v1134 = vpop.f32.mrb[0].mxu0
      %v1135 = vpop.f32.mrb[0].mxu0
      %v1136 = vadd.f32 0.0, %v1135
      %v1137 = vpop.f32.mrb[0].mxu0
      %1138 = vmatprep.mubr.bf16.mxu0 0
      %1139 = vmatmul.mubr.bf16.gmra.mrb[0].mxu0 %v1022
      %v1140 = vpop.f32.mrb[0].mxu0
      %v1141 = vadd.f32 0.0, %v1140
      %v1142 = vpop.f32.mrb[0].mxu0
      %v1143 = vpop.f32.mrb[0].mxu0
      %v1144 = vpop.f32.mrb[0].mxu0
      %1145 = vmatprep.mubr.bf16.mxu0 0
      %1146 = vmatmul.mubr.bf16.gmra.mrb[0].mxu0 %v1025
      %v1147 = vpop.f32.mrb[0].mxu0
      %v1148 = vadd.f32 0.0, %v1147
      %v1149 = vpop.f32.mrb[0].mxu0
      %v1150 = vpop.f32.mrb[0].mxu0
      %v1151 = vadd.f32 0.0, %v1150
      %v1152 = vpop.f32.mrb[0].mxu0
      %1153 = vmatprep.mubr.bf16.mxu0 0
      %1154 = vmatmul.mubr.bf16.gmra.mrb[0].mxu0 %v1028
      %v1155 = vpop.f32.mrb[0].mxu0
      %v1156 = vpop.f32.mrb[0].mxu0
      %v1157 = vpop.f32.mrb[0].mxu0
      %v1158 = vadd.f32 0.0, %v1157
      %v1159 = vpop.f32.mrb[0].mxu0
      %1160 = vmatprep.mubr.bf16.mxu0 0
      %1161 = vmatmul.mubr.bf16.gmra.mrb[0].mxu0 %v1031
      %v1162 = vpop.f32.mrb[0].mxu0
      %v1163 = vadd.f32 0.0, %v1162
      %v1164 = vpop.f32.mrb[0].mxu0
      %v1165 = vpop.f32.mrb[0].mxu0
      %v1166 = vpop.f32.mrb[0].mxu0
      %1167 = vmatprep.mubr.bf16.mxu0 0
      %1168 = vmatmul.mubr.bf16.gmra.mrb[0].mxu0 %v1034
      %v1169 = vpop.f32.mrb[0].mxu0
      %v1170 = vadd.f32 0.0, %v1169
      %v1171 = vpop.f32.mrb[0].mxu0
      %v1172 = vpop.f32.mrb[0].mxu0
      %v1173 = vadd.f32 0.0, %v1172
      %v1174 = vpop.f32.mrb[0].mxu0
      %1175 = vmatprep.mubr.bf16.mxu0 0
      %1176 = vmatmul.mubr.bf16.gmra.mrb[0].mxu0 %v1037
      %v1177 = vpop.f32.mrb[0].mxu0
      %v1178 = vpop.f32.mrb[0].mxu0
      %v1179 = vpop.f32.mrb[0].mxu0
      %v1180 = vadd.f32 0.0, %v1179
      %v1181 = vpop.f32.mrb[0].mxu0
      %1182 = vmatprep.mubr.bf16.mxu0 0
      %1183 = vmatmul.mubr.bf16.gmra.mrb[0].mxu0 %v1040
      %v1184 = vpop.f32.mrb[0].mxu0
      %v1185 = vadd.f32 0.0, %v1184
      %v1186 = vpop.f32.mrb[0].mxu0
      %v1187 = vpop.f32.mrb[0].mxu0
      %v1188 = vpop.f32.mrb[0].mxu0
      %1189 = vmatprep.mubr.bf16.mxu0 0
      %1190 = vmatmul.mubr.bf16.gmra.mrb[0].mxu0 %v1043
      %v1191 = vpop.f32.mrb[0].mxu0
      %v1192 = vadd.f32 0.0, %v1191
      %v1193 = vpop.f32.mrb[0].mxu0
      %v1194 = vpop.f32.mrb[0].mxu0
      %v1195 = vadd.f32 0.0, %v1194
      %v1196 = vpop.f32.mrb[0].mxu0
      %1197 = vmatprep.mubr.bf16.mxu0 0
      %1198 = vmatmul.mubr.bf16.gmra.mrb[0].mxu0 %v1046
      %v1199 = vpop.f32.mrb[0].mxu0
      %v1200 = vpop.f32.mrb[0].mxu0
      %v1201 = vpop.f32.mrb[0].mxu0
      %v1202 = vadd.f32 0.0, %v1201
      %v1203 = vpop.f32.mrb[0].mxu0
      %1204 = vmatprep.mubr.bf16.mxu0 0
      %1205 = vmatmul.mubr.bf16.gmra.mrb[0].mxu0 %v1049
      %v1206 = vpop.f32.mrb[0].mxu0
      %v1207 = vadd.f32 0.0, %v1206
      %v1208 = vpop.f32.mrb[0].mxu0
      %v1209 = vpop.f32.mrb[0].mxu0
      %v1210 = vpop.f32.mrb[0].mxu0
      %1211 = vmatprep.mubr.bf16.mxu0 0
      %1212 = vmatmul.mubr.bf16.gmra.mrb[0].mxu0 %v1052
      %v1213 = vpop.f32.mrb[0].mxu0
      %v1214 = vadd.f32 0.0, %v1213
      %v1215 = vpop.f32.mrb[0].mxu0
      %v1216 = vpop.f32.mrb[0].mxu0
      %v1217 = vadd.f32 0.0, %v1216
      %v1218 = vpop.f32.mrb[0].mxu0
      %1219 = vmatprep.mubr.bf16.mxu0 0
      %1220 = vmatmul.mubr.bf16.gmra.mrb[0].mxu0 %v1055
      %v1221 = vpop.f32.mrb[0].mxu0
      %v1222 = vpop.f32.mrb[0].mxu0
      %v1223 = vpop.f32.mrb[0].mxu0
      %v1224 = vadd.f32 0.0, %v1223
      %v1225 = vpop.f32.mrb[0].mxu0
      %1226 = vmatprep.mubr.bf16.mxu0 0
      %1227 = vmatmul.mubr.bf16.gmra.mrb[0].mxu0 %v1058
      %v1228 = vpop.f32.mrb[0].mxu0
      %v1229 = vadd.f32 0.0, %v1228
      %v1230 = vpop.f32.mrb[0].mxu0
      %v1231 = vpop.f32.mrb[0].mxu0
      %v1232 = vpop.f32.mrb[0].mxu0
      %1233 = vmatprep.mubr.bf16.mxu0 0
      %1234 = vmatmul.mubr.bf16.gmra.mrb[0].mxu0 %v1061
      %v1235 = vpop.f32.mrb[0].mxu0
      %v1236 = vadd.f32 0.0, %v1235
      %v1237 = vpop.f32.mrb[0].mxu0
      %v1238 = vpop.f32.mrb[0].mxu0
      %v1239 = vadd.f32 0.0, %v1238
      %v1240 = vpop.f32.mrb[0].mxu0
      %1241 = vmatprep.mubr.bf16.mxu0 0
      %1242 = vmatmul.mubr.bf16.gmra.mrb[0].mxu0 %v1064
      %v1243 = vpop.f32.mrb[0].mxu0
      %v1244 = vpop.f32.mrb[0].mxu0
      %v1245 = vpop.f32.mrb[0].mxu0
      %v1246 = vadd.f32 0.0, %v1245
      %v1247 = vpop.f32.mrb[0].mxu0
      %1248 = vmatprep.mubr.bf16.mxu0 0
      %1249 = vmatmul.mubr.bf16.gmra.mrb[0].mxu0 %v1067
      %v1250 = vpop.f32.mrb[0].mxu0
      %v1251 = vadd.f32 0.0, %v1250
      %v1252 = vpop.f32.mrb[0].mxu0
      %v1253 = vpop.f32.mrb[0].mxu0
      %v1254 = vpop.f32.mrb[0].mxu0
      %1255 = vmatprep.mubr.bf16.mxu0 0
      %1256 = vmatmul.mubr.bf16.gmra.mrb[0].mxu0 %v1070
      %v1257 = vpop.f32.mrb[0].mxu0
      %v1258 = vadd.f32 0.0, %v1257
      %v1259 = vpop.f32.mrb[0].mxu0
      %v1260 = vpop.f32.mrb[0].mxu0
      %v1261 = vadd.f32 0.0, %v1260
      %v1262 = vpop.f32.mrb[0].mxu0
      %1263 = vmatprep.mubr.bf16.mxu0 0
      %1264 = vmatmul.mubr.bf16.gmra.mrb[0].mxu0 %v1073
      %v1265 = vpop.f32.mrb[0].mxu0
      %v1266 = vpop.f32.mrb[0].mxu0
      %v1267 = vpop.f32.mrb[0].mxu0
      %v1268 = vadd.f32 0.0, %v1267
      %v1269 = vpop.f32.mrb[0].mxu0
      %1270 = vmatprep.mubr.bf16.mxu0 0
      %1271 = vmatmul.mubr.bf16.gmra.mrb[0].mxu0 %v1076
      %v1272 = vpop.f32.mrb[0].mxu0
      %v1273 = vadd.f32 0.0, %v1272
      %v1274 = vpop.f32.mrb[0].mxu0
      %v1275 = vpop.f32.mrb[0].mxu0
      %v1276 = vpop.f32.mrb[0].mxu0
      %1277 = vmatprep.mubr.bf16.mxu0 0
      %1278 = vmatmul.mubr.bf16.gmra.mrb[0].mxu0 %v1079
      %v1279 = vpop.f32.mrb[0].mxu0
      %v1280 = vadd.f32 0.0, %v1279
      %v1281 = vpop.f32.mrb[0].mxu0
      %v1282 = vpop.f32.mrb[0].mxu0
      %v1283 = vadd.f32 0.0, %v1282
      %v1284 = vpop.f32.mrb[0].mxu0
      %1285 = vmatprep.mubr.bf16.mxu0 0
      %1286 = vmatmul.mubr.bf16.gmra.mrb[0].mxu0 %v1082
      %v1287 = vpop.f32.mrb[0].mxu0
      %v1288 = vpop.f32.mrb[0].mxu0
      %v1289 = vpop.f32.mrb[0].mxu0
      %v1290 = vadd.f32 0.0, %v1289
      %v1291 = vpop.f32.mrb[0].mxu0
      %1292 = vmatprep.mubr.bf16.mxu0 0
      %1293 = vmatmul.mubr.bf16.gmra.mrb[0].mxu0 %v1085
      %v1294 = vpop.f32.mrb[0].mxu0
      %v1295 = vadd.f32 0.0, %v1294
      %v1296 = vpop.f32.mrb[0].mxu0
      %v1297 = vpop.f32.mrb[0].mxu0
      %v1298 = vpop.f32.mrb[0].mxu0
      %1299 = vdwg.mxu0
      %v1300 = vadd.f32 %v1126, 0.0
      %v1301 = vadd.f32 %v1129, 0.0
      %v1302 = vadd.f32 %v1136, 0.0
      %v1303 = vadd.f32 %v1141, 0.0
      %v1304 = vadd.f32 %v1148, 0.0
      %v1305 = vadd.f32 %v1151, 0.0
      %v1306 = vadd.f32 %v1158, 0.0
      %v1307 = vadd.f32 %v1163, 0.0
      %v1308 = vadd.f32 %v1170, 0.0
      %v1309 = vadd.f32 %v1173, 0.0
      %v1310 = vadd.f32 %v1180, 0.0
      %v1311 = vadd.f32 %v1185, 0.0
      %v1312 = vadd.f32 %v1192, 0.0
      %v1313 = vadd.f32 %v1195, 0.0
      %v1314 = vadd.f32 %v1202, 0.0
      %v1315 = vadd.f32 %v1207, 0.0
      %v1316 = vadd.f32 %v1214, 0.0
      %v1317 = vadd.f32 %v1217, 0.0
      %v1318 = vadd.f32 %v1224, 0.0
      %v1319 = vadd.f32 %v1229, 0.0
      %v1320 = vadd.f32 %v1236, 0.0
      %v1321 = vadd.f32 %v1239, 0.0
      %v1322 = vadd.f32 %v1246, 0.0
      %v1323 = vadd.f32 %v1251, 0.0
      %v1324 = vadd.f32 %v1258, 0.0
      %v1325 = vadd.f32 %v1261, 0.0
      %v1326 = vadd.f32 %v1268, 0.0
      %v1327 = vadd.f32 %v1273, 0.0
      %v1328 = vadd.f32 %v1280, 0.0
      %v1329 = vadd.f32 %v1283, 0.0
      %v1330 = vadd.f32 %v1290, 0.0
      %v1331 = vadd.f32 %v1295, 0.0
      %s1332 = scalar_lea.vmem %s1, 2
      %v1333 = vld [vmem:[%s1332] sm:$0x3]
      %v1335 = vsel %vm1087, %v1333, 0
      %1337 = vmatprep.subr.bf16.mxu0 0
      %1338 = vmatpush1.bf16.msra.mxu0 %v1335
      %1339 = vmatprep.subr.bf16.mxu0 0
      %1340 = vmatpush1.bf16.msra.mxu0 0
      %1341 = vmatprep.subr.bf16.mxu0 0
      %1342 = vmatpush1.bf16.msra.mxu0 0
      %1343 = vmatprep.subr.bf16.mxu0 0
      %1344 = vmatpush1.bf16.msra.mxu0 0
      %1345 = vmatprep.subr.bf16.mxu0 0
      %1346 = vmatpush1.bf16.msra.mxu0 0
      %1347 = vmatprep.subr.bf16.mxu0 0
      %1348 = vmatpush1.bf16.msra.mxu0 0
      %1349 = vmatprep.subr.bf16.mxu0 0
      %1350 = vmatpush1.bf16.msra.mxu0 0
      %1351 = vmatprep.subr.bf16.mxu0 0
      %1352 = vmatpush1.bf16.msra.mxu0 0
      %1353 = vmatprep.subr.bf16.mxu0 0
      %1354 = vmatpush1.bf16.msra.mxu0 0
      %1355 = vmatprep.subr.bf16.mxu0 0
      %1356 = vmatpush1.bf16.msra.mxu0 0
      %1357 = vmatprep.subr.bf16.mxu0 0
      %1358 = vmatpush1.bf16.msra.mxu0 0
      %1359 = vmatprep.subr.bf16.mxu0 0
      %1360 = vmatpush1.bf16.msra.mxu0 0
      %1361 = vmatprep.subr.bf16.mxu0 0
      %1362 = vmatpush1.bf16.msra.mxu0 0
      %1363 = vmatprep.subr.bf16.mxu0 0
      %1364 = vmatpush1.bf16.msra.mxu0 0
      %1365 = vmatprep.subr.bf16.mxu0 0
      %1366 = vmatpush1.bf16.msra.mxu0 0
      %1367 = vmatprep.subr.bf16.mxu0 0
      %1368 = vmatpush1.bf16.msra.mxu0 0
      %1369 = vmatprep.mubr.bf16.mxu0 0
      %1370 = vmatmul.mubr.bf16.gmra.mrb[0].mxu0 %v1016
      %v1371 = vpop.f32.mrb[0].mxu0
      %v1372 = vadd.f32 0.0, %v1371
      %v1373 = vpop.f32.mrb[0].mxu0
      %v1374 = vpop.f32.mrb[0].mxu0
      %v1375 = vadd.f32 0.0, %v1374
      %v1376 = vpop.f32.mrb[0].mxu0
      %1377 = vmatprep.mubr.bf16.mxu0 0
      %1378 = vmatmul.mubr.bf16.gmra.mrb[0].mxu0 %v1019
      %v1379 = vpop.f32.mrb[0].mxu0
      %v1380 = vadd.f32 0.0, %v1379
      %v1381 = vpop.f32.mrb[0].mxu0
      %v1382 = vpop.f32.mrb[0].mxu0
      %v1383 = vadd.f32 0.0, %v1382
      %v1384 = vpop.f32.mrb[0].mxu0
      %1385 = vmatprep.mubr.bf16.mxu0 0
      %1386 = vmatmul.mubr.bf16.gmra.mrb[0].mxu0 %v1022
      %v1387 = vpop.f32.mrb[0].mxu0
      %v1388 = vadd.f32 0.0, %v1387
      %v1389 = vpop.f32.mrb[0].mxu0
      %v1390 = vpop.f32.mrb[0].mxu0
      %v1391 = vadd.f32 0.0, %v1390
      %v1392 = vpop.f32.mrb[0].mxu0
      %1393 = vmatprep.mubr.bf16.mxu0 0
      %1394 = vmatmul.mubr.bf16.gmra.mrb[0].mxu0 %v1025
      %v1395 = vpop.f32.mrb[0].mxu0
      %v1396 = vadd.f32 0.0, %v1395
      %v1397 = vpop.f32.mrb[0].mxu0
      %v1398 = vpop.f32.mrb[0].mxu0
      %v1399 = vadd.f32 0.0, %v1398
      %v1400 = vpop.f32.mrb[0].mxu0
      %1401 = vmatprep.mubr.bf16.mxu0 0
      %1402 = vmatmul.mubr.bf16.gmra.mrb[0].mxu0 %v1028
      %v1403 = vpop.f32.mrb[0].mxu0
      %v1404 = vadd.f32 0.0, %v1403
      %v1405 = vpop.f32.mrb[0].mxu0
      %v1406 = vpop.f32.mrb[0].mxu0
      %v1407 = vadd.f32 0.0, %v1406
      %v1408 = vpop.f32.mrb[0].mxu0
      %1409 = vmatprep.mubr.bf16.mxu0 0
      %1410 = vmatmul.mubr.bf16.gmra.mrb[0].mxu0 %v1031
      %v1411 = vpop.f32.mrb[0].mxu0
      %v1412 = vadd.f32 0.0, %v1411
      %v1413 = vpop.f32.mrb[0].mxu0
      %v1414 = vpop.f32.mrb[0].mxu0
      %v1415 = vadd.f32 0.0, %v1414
      %v1416 = vpop.f32.mrb[0].mxu0
      %1417 = vmatprep.mubr.bf16.mxu0 0
      %1418 = vmatmul.mubr.bf16.gmra.mrb[0].mxu0 %v1034
      %v1419 = vpop.f32.mrb[0].mxu0
      %v1420 = vadd.f32 0.0, %v1419
      %v1421 = vpop.f32.mrb[0].mxu0
      %v1422 = vpop.f32.mrb[0].mxu0
      %v1423 = vadd.f32 0.0, %v1422
      %v1424 = vpop.f32.mrb[0].mxu0
      %1425 = vmatprep.mubr.bf16.mxu0 0
      %1426 = vmatmul.mubr.bf16.gmra.mrb[0].mxu0 %v1037
      %v1427 = vpop.f32.mrb[0].mxu0
      %v1428 = vadd.f32 0.0, %v1427
      %v1429 = vpop.f32.mrb[0].mxu0
      %v1430 = vpop.f32.mrb[0].mxu0
      %v1431 = vadd.f32 0.0, %v1430
      %v1432 = vpop.f32.mrb[0].mxu0
      %1433 = vmatprep.mubr.bf16.mxu0 0
      %1434 = vmatmul.mubr.bf16.gmra.mrb[0].mxu0 %v1040
      %v1435 = vpop.f32.mrb[0].mxu0
      %v1436 = vadd.f32 0.0, %v1435
      %v1437 = vpop.f32.mrb[0].mxu0
      %v1438 = vpop.f32.mrb[0].mxu0
      %v1439 = vadd.f32 0.0, %v1438
      %v1440 = vpop.f32.mrb[0].mxu0
      %1441 = vmatprep.mubr.bf16.mxu0 0
      %1442 = vmatmul.mubr.bf16.gmra.mrb[0].mxu0 %v1043
      %v1443 = vpop.f32.mrb[0].mxu0
      %v1444 = vadd.f32 0.0, %v1443
      %v1445 = vpop.f32.mrb[0].mxu0
      %v1446 = vpop.f32.mrb[0].mxu0
      %v1447 = vadd.f32 0.0, %v1446
      %v1448 = vpop.f32.mrb[0].mxu0
      %1449 = vmatprep.mubr.bf16.mxu0 0
      %1450 = vmatmul.mubr.bf16.gmra.mrb[0].mxu0 %v1046
      %v1451 = vpop.f32.mrb[0].mxu0
      %v1452 = vadd.f32 0.0, %v1451
      %v1453 = vpop.f32.mrb[0].mxu0
      %v1454 = vpop.f32.mrb[0].mxu0
      %v1455 = vadd.f32 0.0, %v1454
      %v1456 = vpop.f32.mrb[0].mxu0
      %1457 = vmatprep.mubr.bf16.mxu0 0
      %1458 = vmatmul.mubr.bf16.gmra.mrb[0].mxu0 %v1049
      %v1459 = vpop.f32.mrb[0].mxu0
      %v1460 = vadd.f32 0.0, %v1459
      %v1461 = vpop.f32.mrb[0].mxu0
      %v1462 = vpop.f32.mrb[0].mxu0
      %v1463 = vadd.f32 0.0, %v1462
      %v1464 = vpop.f32.mrb[0].mxu0
      %1465 = vmatprep.mubr.bf16.mxu0 0
      %1466 = vmatmul.mubr.bf16.gmra.mrb[0].mxu0 %v1052
      %v1467 = vpop.f32.mrb[0].mxu0
      %v1468 = vadd.f32 0.0, %v1467
      %v1469 = vpop.f32.mrb[0].mxu0
      %v1470 = vpop.f32.mrb[0].mxu0
      %v1471 = vadd.f32 0.0, %v1470
      %v1472 = vpop.f32.mrb[0].mxu0
      %1473 = vmatprep.mubr.bf16.mxu0 0
      %1474 = vmatmul.mubr.bf16.gmra.mrb[0].mxu0 %v1055
      %v1475 = vpop.f32.mrb[0].mxu0
      %v1476 = vadd.f32 0.0, %v1475
      %v1477 = vpop.f32.mrb[0].mxu0
      %v1478 = vpop.f32.mrb[0].mxu0
      %v1479 = vadd.f32 0.0, %v1478
      %v1480 = vpop.f32.mrb[0].mxu0
      %1481 = vmatprep.mubr.bf16.mxu0 0
      %1482 = vmatmul.mubr.bf16.gmra.mrb[0].mxu0 %v1058
      %v1483 = vpop.f32.mrb[0].mxu0
      %v1484 = vadd.f32 0.0, %v1483
      %v1485 = vpop.f32.mrb[0].mxu0
      %v1486 = vpop.f32.mrb[0].mxu0
      %v1487 = vadd.f32 0.0, %v1486
      %v1488 = vpop.f32.mrb[0].mxu0
      %1489 = vmatprep.mubr.bf16.mxu0 0
      %1490 = vmatmul.mubr.bf16.gmra.mrb[0].mxu0 %v1061
      %v1491 = vpop.f32.mrb[0].mxu0
      %v1492 = vadd.f32 0.0, %v1491
      %v1493 = vpop.f32.mrb[0].mxu0
      %v1494 = vpop.f32.mrb[0].mxu0
      %v1495 = vadd.f32 0.0, %v1494
      %v1496 = vpop.f32.mrb[0].mxu0
      %1497 = vmatprep.mubr.bf16.mxu0 0
      %1498 = vmatmul.mubr.bf16.gmra.mrb[0].mxu0 %v1064
      %v1499 = vpop.f32.mrb[0].mxu0
      %v1500 = vadd.f32 0.0, %v1499
      %v1501 = vpop.f32.mrb[0].mxu0
      %v1502 = vpop.f32.mrb[0].mxu0
      %v1503 = vadd.f32 0.0, %v1502
      %v1504 = vpop.f32.mrb[0].mxu0
      %1505 = vmatprep.mubr.bf16.mxu0 0
      %1506 = vmatmul.mubr.bf16.gmra.mrb[0].mxu0 %v1067
      %v1507 = vpop.f32.mrb[0].mxu0
      %v1508 = vadd.f32 0.0, %v1507
      %v1509 = vpop.f32.mrb[0].mxu0
      %v1510 = vpop.f32.mrb[0].mxu0
      %v1511 = vadd.f32 0.0, %v1510
      %v1512 = vpop.f32.mrb[0].mxu0
      %1513 = vmatprep.mubr.bf16.mxu0 0
      %1514 = vmatmul.mubr.bf16.gmra.mrb[0].mxu0 %v1070
      %v1515 = vpop.f32.mrb[0].mxu0
      %v1516 = vadd.f32 0.0, %v1515
      %v1517 = vpop.f32.mrb[0].mxu0
      %v1518 = vpop.f32.mrb[0].mxu0
      %v1519 = vadd.f32 0.0, %v1518
      %v1520 = vpop.f32.mrb[0].mxu0
      %1521 = vmatprep.mubr.bf16.mxu0 0
      %1522 = vmatmul.mubr.bf16.gmra.mrb[0].mxu0 %v1073
      %v1523 = vpop.f32.mrb[0].mxu0
      %v1524 = vadd.f32 0.0, %v1523
      %v1525 = vpop.f32.mrb[0].mxu0
      %v1526 = vpop.f32.mrb[0].mxu0
      %v1527 = vadd.f32 0.0, %v1526
      %v1528 = vpop.f32.mrb[0].mxu0
      %1529 = vmatprep.mubr.bf16.mxu0 0
      %1530 = vmatmul.mubr.bf16.gmra.mrb[0].mxu0 %v1076
      %v1531 = vpop.f32.mrb[0].mxu0
      %v1532 = vadd.f32 0.0, %v1531
      %v1533 = vpop.f32.mrb[0].mxu0
      %v1534 = vpop.f32.mrb[0].mxu0
      %v1535 = vadd.f32 0.0, %v1534
      %v1536 = vpop.f32.mrb[0].mxu0
      %1537 = vmatprep.mubr.bf16.mxu0 0
      %1538 = vmatmul.mubr.bf16.gmra.mrb[0].mxu0 %v1079
      %v1539 = vpop.f32.mrb[0].mxu0
      %v1540 = vadd.f32 0.0, %v1539
      %v1541 = vpop.f32.mrb[0].mxu0
      %v1542 = vpop.f32.mrb[0].mxu0
      %v1543 = vadd.f32 0.0, %v1542
      %v1544 = vpop.f32.mrb[0].mxu0
      %1545 = vmatprep.mubr.bf16.mxu0 0
      %1546 = vmatmul.mubr.bf16.gmra.mrb[0].mxu0 %v1082
      %v1547 = vpop.f32.mrb[0].mxu0
      %v1548 = vadd.f32 0.0, %v1547
      %v1549 = vpop.f32.mrb[0].mxu0
      %v1550 = vpop.f32.mrb[0].mxu0
      %v1551 = vadd.f32 0.0, %v1550
      %v1552 = vpop.f32.mrb[0].mxu0
      %1553 = vmatprep.mubr.bf16.mxu0 0
      %1554 = vmatmul.mubr.bf16.gmra.mrb[0].mxu0 %v1085
      %v1555 = vpop.f32.mrb[0].mxu0
      %v1556 = vadd.f32 0.0, %v1555
      %v1557 = vpop.f32.mrb[0].mxu0
      %v1558 = vpop.f32.mrb[0].mxu0
      %v1559 = vadd.f32 0.0, %v1558
      %v1560 = vpop.f32.mrb[0].mxu0
      %1561 = vdwg.mxu0
      %vm1610 = vcmask 1046528
      %v1611 = vrot.slane %v1372, 1
      %v1612 = vrot.slane %v1375, 1
      %v1613 = vsel %vm1610, %v1611, %v1612
      %v1614 = vrot.slane %v1380, 1
      %v1615 = vsel %vm1610, %v1612, %v1614
      %v1616 = vrot.slane %v1383, 1
      %v1617 = vrot.slane %v1388, 1
      %v1618 = vsel %vm1610, %v1616, %v1617
      %v1619 = vrot.slane %v1391, 1
      %v1620 = vsel %vm1610, %v1617, %v1619
      %v1621 = vrot.slane %v1396, 1
      %v1622 = vrot.slane %v1399, 1
      %v1623 = vsel %vm1610, %v1621, %v1622
      %v1624 = vrot.slane %v1404, 1
      %v1625 = vsel %vm1610, %v1622, %v1624
      %v1626 = vrot.slane %v1407, 1
      %v1627 = vrot.slane %v1412, 1
      %v1628 = vsel %vm1610, %v1626, %v1627
      %v1629 = vrot.slane %v1415, 1
      %v1630 = vsel %vm1610, %v1627, %v1629
      %v1631 = vrot.slane %v1420, 1
      %v1632 = vrot.slane %v1423, 1
      %v1633 = vsel %vm1610, %v1631, %v1632
      %v1634 = vrot.slane %v1428, 1
      %v1635 = vsel %vm1610, %v1632, %v1634
      %v1636 = vrot.slane %v1431, 1
      %v1637 = vrot.slane %v1436, 1
      %v1638 = vsel %vm1610, %v1636, %v1637
      %v1639 = vrot.slane %v1439, 1
      %v1640 = vsel %vm1610, %v1637, %v1639
      %v1641 = vrot.slane %v1444, 1
      %v1642 = vrot.slane %v1447, 1
      %v1643 = vsel %vm1610, %v1641, %v1642
      %v1644 = vrot.slane %v1452, 1
      %v1645 = vsel %vm1610, %v1642, %v1644
      %v1646 = vrot.slane %v1455, 1
      %v1647 = vrot.slane %v1460, 1
      %v1648 = vsel %vm1610, %v1646, %v1647
      %v1649 = vrot.slane %v1463, 1
      %v1650 = vsel %vm1610, %v1647, %v1649
      %v1651 = vrot.slane %v1468, 1
      %v1652 = vrot.slane %v1471, 1
      %v1653 = vsel %vm1610, %v1651, %v1652
      %v1654 = vrot.slane %v1476, 1
      %v1655 = vsel %vm1610, %v1652, %v1654
      %v1656 = vrot.slane %v1479, 1
      %v1657 = vrot.slane %v1484, 1
      %v1658 = vsel %vm1610, %v1656, %v1657
      %v1659 = vrot.slane %v1487, 1
      %v1660 = vsel %vm1610, %v1657, %v1659
      %v1661 = vrot.slane %v1492, 1
      %v1662 = vrot.slane %v1495, 1
      %v1663 = vsel %vm1610, %v1661, %v1662
      %v1664 = vrot.slane %v1500, 1
      %v1665 = vsel %vm1610, %v1662, %v1664
      %v1666 = vrot.slane %v1503, 1
      %v1667 = vrot.slane %v1508, 1
      %v1668 = vsel %vm1610, %v1666, %v1667
      %v1669 = vrot.slane %v1511, 1
      %v1670 = vsel %vm1610, %v1667, %v1669
      %v1671 = vrot.slane %v1516, 1
      %v1672 = vrot.slane %v1519, 1
      %v1673 = vsel %vm1610, %v1671, %v1672
      %v1674 = vrot.slane %v1524, 1
      %v1675 = vsel %vm1610, %v1672, %v1674
      %v1676 = vrot.slane %v1527, 1
      %v1677 = vrot.slane %v1532, 1
      %v1678 = vsel %vm1610, %v1676, %v1677
      %v1679 = vrot.slane %v1535, 1
      %v1680 = vsel %vm1610, %v1677, %v1679
      %v1681 = vrot.slane %v1540, 1
      %v1682 = vrot.slane %v1543, 1
      %v1683 = vsel %vm1610, %v1681, %v1682
      %v1684 = vrot.slane %v1548, 1
      %v1685 = vsel %vm1610, %v1682, %v1684
      %v1686 = vrot.slane %v1551, 1
      %v1687 = vrot.slane %v1556, 1
      %v1688 = vsel %vm1610, %v1686, %v1687
      %v1689 = vrot.slane %v1559, 1
      %v1690 = vsel %vm1610, %v1687, %v1689
      %v1723 = vadd.f32 %v1300, %v1613
      %v1724 = vadd.f32 %v1301, %v1615
      %v1725 = vadd.f32 %v1302, %v1618
      %v1726 = vadd.f32 %v1303, %v1620
      %v1727 = vadd.f32 %v1304, %v1623
      %v1728 = vadd.f32 %v1305, %v1625
      %v1729 = vadd.f32 %v1306, %v1628
      %v1730 = vadd.f32 %v1307, %v1630
      %v1731 = vadd.f32 %v1308, %v1633
      %v1732 = vadd.f32 %v1309, %v1635
      %v1733 = vadd.f32 %v1310, %v1638
      %v1734 = vadd.f32 %v1311, %v1640
      %v1735 = vadd.f32 %v1312, %v1643
      %v1736 = vadd.f32 %v1313, %v1645
      %v1737 = vadd.f32 %v1314, %v1648
      %v1738 = vadd.f32 %v1315, %v1650
      %v1739 = vadd.f32 %v1316, %v1653
      %v1740 = vadd.f32 %v1317, %v1655
      %v1741 = vadd.f32 %v1318, %v1658
      %v1742 = vadd.f32 %v1319, %v1660
      %v1743 = vadd.f32 %v1320, %v1663
      %v1744 = vadd.f32 %v1321, %v1665
      %v1745 = vadd.f32 %v1322, %v1668
      %v1746 = vadd.f32 %v1323, %v1670
      %v1747 = vadd.f32 %v1324, %v1673
      %v1748 = vadd.f32 %v1325, %v1675
      %v1749 = vadd.f32 %v1326, %v1678
      %v1750 = vadd.f32 %v1327, %v1680
      %v1751 = vadd.f32 %v1328, %v1683
      %v1752 = vadd.f32 %v1329, %v1685
      %v1753 = vadd.f32 %v1330, %v1688
      %v1754 = vadd.f32 %v1331, %v1690
      %s1755 = scalar_lea.vmem %s1, 4
      %v1756 = vld [vmem:[%s1755] sm:$0x3]
      %v1758 = vsel %vm1087, %v1756, 0
      %1760 = vmatprep.subr.bf16.mxu0 0
      %1761 = vmatpush1.bf16.msra.mxu0 %v1758
      %1762 = vmatprep.subr.bf16.mxu0 0
      %1763 = vmatpush1.bf16.msra.mxu0 0
      %1764 = vmatprep.subr.bf16.mxu0 0
      %1765 = vmatpush1.bf16.msra.mxu0 0
      %1766 = vmatprep.subr.bf16.mxu0 0
      %1767 = vmatpush1.bf16.msra.mxu0 0
      %1768 = vmatprep.subr.bf16.mxu0 0
      %1769 = vmatpush1.bf16.msra.mxu0 0
      %1770 = vmatprep.subr.bf16.mxu0 0
      %1771 = vmatpush1.bf16.msra.mxu0 0
      %1772 = vmatprep.subr.bf16.mxu0 0
      %1773 = vmatpush1.bf16.msra.mxu0 0
      %1774 = vmatprep.subr.bf16.mxu0 0
      %1775 = vmatpush1.bf16.msra.mxu0 0
      %1776 = vmatprep.subr.bf16.mxu0 0
      %1777 = vmatpush1.bf16.msra.mxu0 0
      %1778 = vmatprep.subr.bf16.mxu0 0
      %1779 = vmatpush1.bf16.msra.mxu0 0
      %1780 = vmatprep.subr.bf16.mxu0 0
      %1781 = vmatpush1.bf16.msra.mxu0 0
      %1782 = vmatprep.subr.bf16.mxu0 0
      %1783 = vmatpush1.bf16.msra.mxu0 0
      %1784 = vmatprep.subr.bf16.mxu0 0
      %1785 = vmatpush1.bf16.msra.mxu0 0
      %1786 = vmatprep.subr.bf16.mxu0 0
      %1787 = vmatpush1.bf16.msra.mxu0 0
      %1788 = vmatprep.subr.bf16.mxu0 0
      %1789 = vmatpush1.bf16.msra.mxu0 0
      %1790 = vmatprep.subr.bf16.mxu0 0
      %1791 = vmatpush1.bf16.msra.mxu0 0
      %1792 = vmatprep.mubr.bf16.mxu0 0
      %1793 = vmatmul.mubr.bf16.gmra.mrb[0].mxu0 %v1016
      %v1794 = vpop.f32.mrb[0].mxu0
      %v1795 = vadd.f32 0.0, %v1794
      %v1796 = vpop.f32.mrb[0].mxu0
      %v1797 = vpop.f32.mrb[0].mxu0
      %v1798 = vadd.f32 0.0, %v1797
      %v1799 = vpop.f32.mrb[0].mxu0
      %1800 = vmatprep.mubr.bf16.mxu0 0
      %1801 = vmatmul.mubr.bf16.gmra.mrb[0].mxu0 %v1019
      %v1802 = vpop.f32.mrb[0].mxu0
      %v1803 = vadd.f32 0.0, %v1802
      %v1804 = vpop.f32.mrb[0].mxu0
      %v1805 = vpop.f32.mrb[0].mxu0
      %v1806 = vadd.f32 0.0, %v1805
      %v1807 = vpop.f32.mrb[0].mxu0
      %1808 = vmatprep.mubr.bf16.mxu0 0
      %1809 = vmatmul.mubr.bf16.gmra.mrb[0].mxu0 %v1022
      %v1810 = vpop.f32.mrb[0].mxu0
      %v1811 = vadd.f32 0.0, %v1810
      %v1812 = vpop.f32.mrb[0].mxu0
      %v1813 = vpop.f32.mrb[0].mxu0
      %v1814 = vadd.f32 0.0, %v1813
      %v1815 = vpop.f32.mrb[0].mxu0
      %1816 = vmatprep.mubr.bf16.mxu0 0
      %1817 = vmatmul.mubr.bf16.gmra.mrb[0].mxu0 %v1025
      %v1818 = vpop.f32.mrb[0].mxu0
      %v1819 = vadd.f32 0.0, %v1818
      %v1820 = vpop.f32.mrb[0].mxu0
      %v1821 = vpop.f32.mrb[0].mxu0
      %v1822 = vadd.f32 0.0, %v1821
      %v1823 = vpop.f32.mrb[0].mxu0
      %1824 = vmatprep.mubr.bf16.mxu0 0
      %1825 = vmatmul.mubr.bf16.gmra.mrb[0].mxu0 %v1028
      %v1826 = vpop.f32.mrb[0].mxu0
      %v1827 = vadd.f32 0.0, %v1826
      %v1828 = vpop.f32.mrb[0].mxu0
      %v1829 = vpop.f32.mrb[0].mxu0
      %v1830 = vadd.f32 0.0, %v1829
      %v1831 = vpop.f32.mrb[0].mxu0
      %1832 = vmatprep.mubr.bf16.mxu0 0
      %1833 = vmatmul.mubr.bf16.gmra.mrb[0].mxu0 %v1031
      %v1834 = vpop.f32.mrb[0].mxu0
      %v1835 = vadd.f32 0.0, %v1834
      %v1836 = vpop.f32.mrb[0].mxu0
      %v1837 = vpop.f32.mrb[0].mxu0
      %v1838 = vadd.f32 0.0, %v1837
      %v1839 = vpop.f32.mrb[0].mxu0
      %1840 = vmatprep.mubr.bf16.mxu0 0
      %1841 = vmatmul.mubr.bf16.gmra.mrb[0].mxu0 %v1034
      %v1842 = vpop.f32.mrb[0].mxu0
      %v1843 = vadd.f32 0.0, %v1842
      %v1844 = vpop.f32.mrb[0].mxu0
      %v1845 = vpop.f32.mrb[0].mxu0
      %v1846 = vadd.f32 0.0, %v1845
      %v1847 = vpop.f32.mrb[0].mxu0
      %1848 = vmatprep.mubr.bf16.mxu0 0
      %1849 = vmatmul.mubr.bf16.gmra.mrb[0].mxu0 %v1037
      %v1850 = vpop.f32.mrb[0].mxu0
      %v1851 = vadd.f32 0.0, %v1850
      %v1852 = vpop.f32.mrb[0].mxu0
      %v1853 = vpop.f32.mrb[0].mxu0
      %v1854 = vadd.f32 0.0, %v1853
      %v1855 = vpop.f32.mrb[0].mxu0
      %1856 = vmatprep.mubr.bf16.mxu0 0
      %1857 = vmatmul.mubr.bf16.gmra.mrb[0].mxu0 %v1040
      %v1858 = vpop.f32.mrb[0].mxu0
      %v1859 = vadd.f32 0.0, %v1858
      %v1860 = vpop.f32.mrb[0].mxu0
      %v1861 = vpop.f32.mrb[0].mxu0
      %v1862 = vadd.f32 0.0, %v1861
      %v1863 = vpop.f32.mrb[0].mxu0
      %1864 = vmatprep.mubr.bf16.mxu0 0
      %1865 = vmatmul.mubr.bf16.gmra.mrb[0].mxu0 %v1043
      %v1866 = vpop.f32.mrb[0].mxu0
      %v1867 = vadd.f32 0.0, %v1866
      %v1868 = vpop.f32.mrb[0].mxu0
      %v1869 = vpop.f32.mrb[0].mxu0
      %v1870 = vadd.f32 0.0, %v1869
      %v1871 = vpop.f32.mrb[0].mxu0
      %1872 = vmatprep.mubr.bf16.mxu0 0
      %1873 = vmatmul.mubr.bf16.gmra.mrb[0].mxu0 %v1046
      %v1874 = vpop.f32.mrb[0].mxu0
      %v1875 = vadd.f32 0.0, %v1874
      %v1876 = vpop.f32.mrb[0].mxu0
      %v1877 = vpop.f32.mrb[0].mxu0
      %v1878 = vadd.f32 0.0, %v1877
      %v1879 = vpop.f32.mrb[0].mxu0
      %1880 = vmatprep.mubr.bf16.mxu0 0
      %1881 = vmatmul.mubr.bf16.gmra.mrb[0].mxu0 %v1049
      %v1882 = vpop.f32.mrb[0].mxu0
      %v1883 = vadd.f32 0.0, %v1882
      %v1884 = vpop.f32.mrb[0].mxu0
      %v1885 = vpop.f32.mrb[0].mxu0
      %v1886 = vadd.f32 0.0, %v1885
      %v1887 = vpop.f32.mrb[0].mxu0
      %1888 = vmatprep.mubr.bf16.mxu0 0
      %1889 = vmatmul.mubr.bf16.gmra.mrb[0].mxu0 %v1052
      %v1890 = vpop.f32.mrb[0].mxu0
      %v1891 = vadd.f32 0.0, %v1890
      %v1892 = vpop.f32.mrb[0].mxu0
      %v1893 = vpop.f32.mrb[0].mxu0
      %v1894 = vadd.f32 0.0, %v1893
      %v1895 = vpop.f32.mrb[0].mxu0
      %1896 = vmatprep.mubr.bf16.mxu0 0
      %1897 = vmatmul.mubr.bf16.gmra.mrb[0].mxu0 %v1055
      %v1898 = vpop.f32.mrb[0].mxu0
      %v1899 = vadd.f32 0.0, %v1898
      %v1900 = vpop.f32.mrb[0].mxu0
      %v1901 = vpop.f32.mrb[0].mxu0
      %v1902 = vadd.f32 0.0, %v1901
      %v1903 = vpop.f32.mrb[0].mxu0
      %1904 = vmatprep.mubr.bf16.mxu0 0
      %1905 = vmatmul.mubr.bf16.gmra.mrb[0].mxu0 %v1058
      %v1906 = vpop.f32.mrb[0].mxu0
      %v1907 = vadd.f32 0.0, %v1906
      %v1908 = vpop.f32.mrb[0].mxu0
      %v1909 = vpop.f32.mrb[0].mxu0
      %v1910 = vadd.f32 0.0, %v1909
      %v1911 = vpop.f32.mrb[0].mxu0
      %1912 = vmatprep.mubr.bf16.mxu0 0
      %1913 = vmatmul.mubr.bf16.gmra.mrb[0].mxu0 %v1061
      %v1914 = vpop.f32.mrb[0].mxu0
      %v1915 = vadd.f32 0.0, %v1914
      %v1916 = vpop.f32.mrb[0].mxu0
      %v1917 = vpop.f32.mrb[0].mxu0
      %v1918 = vadd.f32 0.0, %v1917
      %v1919 = vpop.f32.mrb[0].mxu0
      %1920 = vmatprep.mubr.bf16.mxu0 0
      %1921 = vmatmul.mubr.bf16.gmra.mrb[0].mxu0 %v1064
      %v1922 = vpop.f32.mrb[0].mxu0
      %v1923 = vadd.f32 0.0, %v1922
      %v1924 = vpop.f32.mrb[0].mxu0
      %v1925 = vpop.f32.mrb[0].mxu0
      %v1926 = vadd.f32 0.0, %v1925
      %v1927 = vpop.f32.mrb[0].mxu0
      %1928 = vmatprep.mubr.bf16.mxu0 0
      %1929 = vmatmul.mubr.bf16.gmra.mrb[0].mxu0 %v1067
      %v1930 = vpop.f32.mrb[0].mxu0
      %v1931 = vadd.f32 0.0, %v1930
      %v1932 = vpop.f32.mrb[0].mxu0
      %v1933 = vpop.f32.mrb[0].mxu0
      %v1934 = vadd.f32 0.0, %v1933
      %v1935 = vpop.f32.mrb[0].mxu0
      %1936 = vmatprep.mubr.bf16.mxu0 0
      %1937 = vmatmul.mubr.bf16.gmra.mrb[0].mxu0 %v1070
      %v1938 = vpop.f32.mrb[0].mxu0
      %v1939 = vadd.f32 0.0, %v1938
      %v1940 = vpop.f32.mrb[0].mxu0
      %v1941 = vpop.f32.mrb[0].mxu0
      %v1942 = vadd.f32 0.0, %v1941
      %v1943 = vpop.f32.mrb[0].mxu0
      %1944 = vmatprep.mubr.bf16.mxu0 0
      %1945 = vmatmul.mubr.bf16.gmra.mrb[0].mxu0 %v1073
      %v1946 = vpop.f32.mrb[0].mxu0
      %v1947 = vadd.f32 0.0, %v1946
      %v1948 = vpop.f32.mrb[0].mxu0
      %v1949 = vpop.f32.mrb[0].mxu0
      %v1950 = vadd.f32 0.0, %v1949
      %v1951 = vpop.f32.mrb[0].mxu0
      %1952 = vmatprep.mubr.bf16.mxu0 0
      %1953 = vmatmul.mubr.bf16.gmra.mrb[0].mxu0 %v1076
      %v1954 = vpop.f32.mrb[0].mxu0
      %v1955 = vadd.f32 0.0, %v1954
      %v1956 = vpop.f32.mrb[0].mxu0
      %v1957 = vpop.f32.mrb[0].mxu0
      %v1958 = vadd.f32 0.0, %v1957
      %v1959 = vpop.f32.mrb[0].mxu0
      %1960 = vmatprep.mubr.bf16.mxu0 0
      %1961 = vmatmul.mubr.bf16.gmra.mrb[0].mxu0 %v1079
      %v1962 = vpop.f32.mrb[0].mxu0
      %v1963 = vadd.f32 0.0, %v1962
      %v1964 = vpop.f32.mrb[0].mxu0
      %v1965 = vpop.f32.mrb[0].mxu0
      %v1966 = vadd.f32 0.0, %v1965
      %v1967 = vpop.f32.mrb[0].mxu0
      %1968 = vmatprep.mubr.bf16.mxu0 0
      %1969 = vmatmul.mubr.bf16.gmra.mrb[0].mxu0 %v1082
      %v1970 = vpop.f32.mrb[0].mxu0
      %v1971 = vadd.f32 0.0, %v1970
      %v1972 = vpop.f32.mrb[0].mxu0
      %v1973 = vpop.f32.mrb[0].mxu0
      %v1974 = vadd.f32 0.0, %v1973
      %v1975 = vpop.f32.mrb[0].mxu0
      %1976 = vmatprep.mubr.bf16.mxu0 0
      %1977 = vmatmul.mubr.bf16.gmra.mrb[0].mxu0 %v1085
      %v1978 = vpop.f32.mrb[0].mxu0
      %v1979 = vadd.f32 0.0, %v1978
      %v1980 = vpop.f32.mrb[0].mxu0
      %v1981 = vpop.f32.mrb[0].mxu0
      %v1982 = vadd.f32 0.0, %v1981
      %v1983 = vpop.f32.mrb[0].mxu0
      %1984 = vdwg.mxu0
      %vm2033 = vcmask 1045504
      %v2034 = vrot.slane %v1795, 2
      %v2035 = vrot.slane %v1798, 2
      %v2036 = vsel %vm2033, %v2034, %v2035
      %v2037 = vrot.slane %v1803, 2
      %v2038 = vsel %vm2033, %v2035, %v2037
      %v2039 = vrot.slane %v1806, 2
      %v2040 = vrot.slane %v1811, 2
      %v2041 = vsel %vm2033, %v2039, %v2040
      %v2042 = vrot.slane %v1814, 2
      %v2043 = vsel %vm2033, %v2040, %v2042
      %v2044 = vrot.slane %v1819, 2
      %v2045 = vrot.slane %v1822, 2
      %v2046 = vsel %vm2033, %v2044, %v2045
      %v2047 = vrot.slane %v1827, 2
      %v2048 = vsel %vm2033, %v2045, %v2047
      %v2049 = vrot.slane %v1830, 2
      %v2050 = vrot.slane %v1835, 2
      %v2051 = vsel %vm2033, %v2049, %v2050
      %v2052 = vrot.slane %v1838, 2
      %v2053 = vsel %vm2033, %v2050, %v2052
      %v2054 = vrot.slane %v1843, 2
      %v2055 = vrot.slane %v1846, 2
      %v2056 = vsel %vm2033, %v2054, %v2055
      %v2057 = vrot.slane %v1851, 2
      %v2058 = vsel %vm2033, %v2055, %v2057
      %v2059 = vrot.slane %v1854, 2
      %v2060 = vrot.slane %v1859, 2
      %v2061 = vsel %vm2033, %v2059, %v2060
      %v2062 = vrot.slane %v1862, 2
      %v2063 = vsel %vm2033, %v2060, %v2062
      %v2064 = vrot.slane %v1867, 2
      %v2065 = vrot.slane %v1870, 2
      %v2066 = vsel %vm2033, %v2064, %v2065
      %v2067 = vrot.slane %v1875, 2
      %v2068 = vsel %vm2033, %v2065, %v2067
      %v2069 = vrot.slane %v1878, 2
      %v2070 = vrot.slane %v1883, 2
      %v2071 = vsel %vm2033, %v2069, %v2070
      %v2072 = vrot.slane %v1886, 2
      %v2073 = vsel %vm2033, %v2070, %v2072
      %v2074 = vrot.slane %v1891, 2
      %v2075 = vrot.slane %v1894, 2
      %v2076 = vsel %vm2033, %v2074, %v2075
      %v2077 = vrot.slane %v1899, 2
      %v2078 = vsel %vm2033, %v2075, %v2077
      %v2079 = vrot.slane %v1902, 2
      %v2080 = vrot.slane %v1907, 2
      %v2081 = vsel %vm2033, %v2079, %v2080
      %v2082 = vrot.slane %v1910, 2
      %v2083 = vsel %vm2033, %v2080, %v2082
      %v2084 = vrot.slane %v1915, 2
      %v2085 = vrot.slane %v1918, 2
      %v2086 = vsel %vm2033, %v2084, %v2085
      %v2087 = vrot.slane %v1923, 2
      %v2088 = vsel %vm2033, %v2085, %v2087
      %v2089 = vrot.slane %v1926, 2
      %v2090 = vrot.slane %v1931, 2
      %v2091 = vsel %vm2033, %v2089, %v2090
      %v2092 = vrot.slane %v1934, 2
      %v2093 = vsel %vm2033, %v2090, %v2092
      %v2094 = vrot.slane %v1939, 2
      %v2095 = vrot.slane %v1942, 2
      %v2096 = vsel %vm2033, %v2094, %v2095
      %v2097 = vrot.slane %v1947, 2
      %v2098 = vsel %vm2033, %v2095, %v2097
      %v2099 = vrot.slane %v1950, 2
      %v2100 = vrot.slane %v1955, 2
      %v2101 = vsel %vm2033, %v2099, %v2100
      %v2102 = vrot.slane %v1958, 2
      %v2103 = vsel %vm2033, %v2100, %v2102
      %v2104 = vrot.slane %v1963, 2
      %v2105 = vrot.slane %v1966, 2
      %v2106 = vsel %vm2033, %v2104, %v2105
      %v2107 = vrot.slane %v1971, 2
      %v2108 = vsel %vm2033, %v2105, %v2107
      %v2109 = vrot.slane %v1974, 2
      %v2110 = vrot.slane %v1979, 2
      %v2111 = vsel %vm2033, %v2109, %v2110
      %v2112 = vrot.slane %v1982, 2
      %v2113 = vsel %vm2033, %v2110, %v2112
      %v2146 = vadd.f32 %v1723, %v2036
      %v2147 = vadd.f32 %v1724, %v2038
      %v2148 = vadd.f32 %v1725, %v2041
      %v2149 = vadd.f32 %v1726, %v2043
      %v2150 = vadd.f32 %v1727, %v2046
      %v2151 = vadd.f32 %v1728, %v2048
      %v2152 = vadd.f32 %v1729, %v2051
      %v2153 = vadd.f32 %v1730, %v2053
      %v2154 = vadd.f32 %v1731, %v2056
      %v2155 = vadd.f32 %v1732, %v2058
      %v2156 = vadd.f32 %v1733, %v2061
      %v2157 = vadd.f32 %v1734, %v2063
      %v2158 = vadd.f32 %v1735, %v2066
      %v2159 = vadd.f32 %v1736, %v2068
      %v2160 = vadd.f32 %v1737, %v2071
      %v2161 = vadd.f32 %v1738, %v2073
      %v2162 = vadd.f32 %v1739, %v2076
      %v2163 = vadd.f32 %v1740, %v2078
      %v2164 = vadd.f32 %v1741, %v2081
      %v2165 = vadd.f32 %v1742, %v2083
      %v2166 = vadd.f32 %v1743, %v2086
      %v2167 = vadd.f32 %v1744, %v2088
      %v2168 = vadd.f32 %v1745, %v2091
      %v2169 = vadd.f32 %v1746, %v2093
      %v2170 = vadd.f32 %v1747, %v2096
      %v2171 = vadd.f32 %v1748, %v2098
      %v2172 = vadd.f32 %v1749, %v2101
      %v2173 = vadd.f32 %v1750, %v2103
      %v2174 = vadd.f32 %v1751, %v2106
      %v2175 = vadd.f32 %v1752, %v2108
      %v2176 = vadd.f32 %v1753, %v2111
      %v2177 = vadd.f32 %v1754, %v2113
      %v2178 = vld [vmem:[%s212] sm:$0xf]
      %v2179 = vld [vmem:[%s212 + $0x4] sm:$0xf]
      %v2180 = vld [vmem:[%s212 + $0x8] sm:$0xf]
      %v2181 = vld [vmem:[%s212 + $0xc] sm:$0xf]
      %v2182 = vld [vmem:[%s212 + $0x10] sm:$0xf]
      %v2183 = vld [vmem:[%s212 + $0x14] sm:$0xf]
      %v2184 = vld [vmem:[%s212 + $0x18] sm:$0xf]
      %v2185 = vld [vmem:[%s212 + $0x1c] sm:$0xf]
      %v2186 = vld [vmem:[%s212 + $0x20] sm:$0xf]
      %v2187 = vld [vmem:[%s212 + $0x24] sm:$0xf]
      %v2188 = vld [vmem:[%s212 + $0x28] sm:$0xf]
      %v2189 = vld [vmem:[%s212 + $0x2c] sm:$0xf]
      %v2190 = vld [vmem:[%s212 + $0x30] sm:$0xf]
      %v2191 = vld [vmem:[%s212 + $0x34] sm:$0xf]
      %v2192 = vld [vmem:[%s212 + $0x38] sm:$0xf]
      %v2193 = vld [vmem:[%s212 + $0x3c] sm:$0xf]
      %v2194 = vld [vmem:[%s212 + $0x40] sm:$0xf]
      %v2195 = vld [vmem:[%s212 + $0x44] sm:$0xf]
      %v2196 = vld [vmem:[%s212 + $0x48] sm:$0xf]
      %v2197 = vld [vmem:[%s212 + $0x4c] sm:$0xf]
      %v2198 = vld [vmem:[%s212 + $0x50] sm:$0xf]
      %v2199 = vld [vmem:[%s212 + $0x54] sm:$0xf]
      %v2200 = vld [vmem:[%s212 + $0x58] sm:$0xf]
      %v2201 = vld [vmem:[%s212 + $0x5c] sm:$0xf]
      %v2202 = vld [vmem:[%s212 + $0x60] sm:$0xf]
      %v2203 = vld [vmem:[%s212 + $0x64] sm:$0xf]
      %v2204 = vld [vmem:[%s212 + $0x68] sm:$0xf]
      %v2205 = vld [vmem:[%s212 + $0x6c] sm:$0xf]
      %v2206 = vld [vmem:[%s212 + $0x70] sm:$0xf]
      %v2207 = vld [vmem:[%s212 + $0x74] sm:$0xf]
      %v2208 = vld [vmem:[%s212 + $0x78] sm:$0xf]
      %v2209 = vld [vmem:[%s212 + $0x7c] sm:$0xf]
      %v2210 = vld [vmem:[%s212 + $0x80] sm:$0xf]
      %v2211 = vld [vmem:[%s212 + $0x84] sm:$0xf]
      %v2212 = vld [vmem:[%s212 + $0x88] sm:$0xf]
      %v2213 = vld [vmem:[%s212 + $0x8c] sm:$0xf]
      %v2214 = vld [vmem:[%s212 + $0x90] sm:$0xf]
      %v2215 = vld [vmem:[%s212 + $0x94] sm:$0xf]
      %v2216 = vld [vmem:[%s212 + $0x98] sm:$0xf]
      %v2217 = vld [vmem:[%s212 + $0x9c] sm:$0xf]
      %v2218 = vld [vmem:[%s212 + $0xa0] sm:$0xf]
      %v2219 = vld [vmem:[%s212 + $0xa4] sm:$0xf]
      %v2220 = vld [vmem:[%s212 + $0xa8] sm:$0xf]
      %v2221 = vld [vmem:[%s212 + $0xac] sm:$0xf]
      %v2222 = vld [vmem:[%s212 + $0xb0] sm:$0xf]
      %v2223 = vld [vmem:[%s212 + $0xb4] sm:$0xf]
      %v2224 = vld [vmem:[%s212 + $0xb8] sm:$0xf]
      %v2225 = vld [vmem:[%s212 + $0xbc] sm:$0xf]
      %s2226 = scalar_lea.vmem %s1, 6
      %v2227 = vld [vmem:[%s2226] sm:$0x3]
      %v2276 = vunpack.c.l.b16 %v2178
      %v2277 = vunpack.c.l.b16 %v2179
      %v2278 = vunpack.c.l.b16 %v2180
      %v2279 = vunpack.c.l.b16 %v2181
      %v2280 = vunpack.c.l.b16 %v2182
      %v2281 = vunpack.c.l.b16 %v2183
      %v2282 = vunpack.c.l.b16 %v2184
      %v2283 = vunpack.c.l.b16 %v2185
      %v2284 = vunpack.c.l.b16 %v2186
      %v2285 = vunpack.c.l.b16 %v2187
      %v2286 = vunpack.c.l.b16 %v2188
      %v2287 = vunpack.c.l.b16 %v2189
      %v2288 = vunpack.c.l.b16 %v2190
      %v2289 = vunpack.c.l.b16 %v2191
      %v2290 = vunpack.c.l.b16 %v2192
      %v2291 = vunpack.c.l.b16 %v2193
      %v2292 = vunpack.c.l.b16 %v2194
      %v2293 = vunpack.c.l.b16 %v2195
      %v2294 = vunpack.c.l.b16 %v2196
      %v2295 = vunpack.c.l.b16 %v2197
      %v2296 = vunpack.c.l.b16 %v2198
      %v2297 = vunpack.c.l.b16 %v2199
      %v2298 = vunpack.c.l.b16 %v2200
      %v2299 = vunpack.c.l.b16 %v2201
      %v2300 = vunpack.c.l.b16 %v2202
      %v2301 = vunpack.c.l.b16 %v2203
      %v2302 = vunpack.c.l.b16 %v2204
      %v2303 = vunpack.c.l.b16 %v2205
      %v2304 = vunpack.c.l.b16 %v2206
      %v2305 = vunpack.c.l.b16 %v2207
      %v2306 = vunpack.c.l.b16 %v2208
      %v2307 = vunpack.c.l.b16 %v2209
      %v2308 = vunpack.c.l.b16 %v2210
      %v2309 = vunpack.c.l.b16 %v2211
      %v2310 = vunpack.c.l.b16 %v2212
      %v2311 = vunpack.c.l.b16 %v2213
      %v2312 = vunpack.c.l.b16 %v2214
      %v2313 = vunpack.c.l.b16 %v2215
      %v2314 = vunpack.c.l.b16 %v2216
      %v2315 = vunpack.c.l.b16 %v2217
      %v2316 = vunpack.c.l.b16 %v2218
      %v2317 = vunpack.c.l.b16 %v2219
      %v2318 = vunpack.c.l.b16 %v2220
      %v2319 = vunpack.c.l.b16 %v2221
      %v2320 = vunpack.c.l.b16 %v2222
      %v2321 = vunpack.c.l.b16 %v2223
      %v2322 = vunpack.c.l.b16 %v2224
      %v2323 = vunpack.c.l.b16 %v2225
      %v2324 = vpack.c.b16 %v2277, %v2276
      %v2325 = vpack.c.b16 %v2279, %v2278
      %v2326 = vpack.c.b16 %v2281, %v2280
      %v2327 = vpack.c.b16 %v2283, %v2282
      %v2328 = vpack.c.b16 %v2285, %v2284
      %v2329 = vpack.c.b16 %v2287, %v2286
      %v2330 = vpack.c.b16 %v2289, %v2288
      %v2331 = vpack.c.b16 %v2291, %v2290
      %v2332 = vpack.c.b16 %v2293, %v2292
      %v2333 = vpack.c.b16 %v2295, %v2294
      %v2334 = vpack.c.b16 %v2297, %v2296
      %v2335 = vpack.c.b16 %v2299, %v2298
      %v2336 = vpack.c.b16 %v2301, %v2300
      %v2337 = vpack.c.b16 %v2303, %v2302
      %v2338 = vpack.c.b16 %v2305, %v2304
      %v2339 = vpack.c.b16 %v2307, %v2306
      %v2340 = vpack.c.b16 %v2309, %v2308
      %v2341 = vpack.c.b16 %v2311, %v2310
      %v2342 = vpack.c.b16 %v2313, %v2312
      %v2343 = vpack.c.b16 %v2315, %v2314
      %v2344 = vpack.c.b16 %v2317, %v2316
      %v2345 = vpack.c.b16 %v2319, %v2318
      %v2346 = vpack.c.b16 %v2321, %v2320
      %v2347 = vpack.c.b16 %v2323, %v2322
      %v2349 = vsel %vm1014, %v2324, 0
      %v2352 = vsel %vm1014, %v2325, 0
      %v2355 = vsel %vm1014, %v2326, 0
      %v2358 = vsel %vm1014, %v2327, 0
      %v2361 = vsel %vm1014, %v2328, 0
      %v2364 = vsel %vm1014, %v2329, 0
      %v2367 = vsel %vm1014, %v2330, 0
      %v2370 = vsel %vm1014, %v2331, 0
      %v2373 = vsel %vm1014, %v2332, 0
      %v2376 = vsel %vm1014, %v2333, 0
      %v2379 = vsel %vm1014, %v2334, 0
      %v2382 = vsel %vm1014, %v2335, 0
      %v2385 = vsel %vm1014, %v2336, 0
      %v2388 = vsel %vm1014, %v2337, 0
      %v2391 = vsel %vm1014, %v2338, 0
      %v2394 = vsel %vm1014, %v2339, 0
      %v2397 = vsel %vm1014, %v2340, 0
      %v2400 = vsel %vm1014, %v2341, 0
      %v2403 = vsel %vm1014, %v2342, 0
      %v2406 = vsel %vm1014, %v2343, 0
      %v2409 = vsel %vm1014, %v2344, 0
      %v2412 = vsel %vm1014, %v2345, 0
      %v2415 = vsel %vm1014, %v2346, 0
      %v2418 = vsel %vm1014, %v2347, 0
      %v2421 = vsel %vm1087, %v2227, 0
      %2423 = vmatprep.subr.bf16.mxu0 0
      %2424 = vmatpush1.bf16.msra.mxu0 %v2421
      %2425 = vmatprep.subr.bf16.mxu0 0
      %2426 = vmatpush1.bf16.msra.mxu0 0
      %2427 = vmatprep.subr.bf16.mxu0 0
      %2428 = vmatpush1.bf16.msra.mxu0 0
      %2429 = vmatprep.subr.bf16.mxu0 0
      %2430 = vmatpush1.bf16.msra.mxu0 0
      %2431 = vmatprep.subr.bf16.mxu0 0
      %2432 = vmatpush1.bf16.msra.mxu0 0
      %2433 = vmatprep.subr.bf16.mxu0 0
      %2434 = vmatpush1.bf16.msra.mxu0 0
      %2435 = vmatprep.subr.bf16.mxu0 0
      %2436 = vmatpush1.bf16.msra.mxu0 0
      %2437 = vmatprep.subr.bf16.mxu0 0
      %2438 = vmatpush1.bf16.msra.mxu0 0
      %2439 = vmatprep.subr.bf16.mxu0 0
      %2440 = vmatpush1.bf16.msra.mxu0 0
      %2441 = vmatprep.subr.bf16.mxu0 0
      %2442 = vmatpush1.bf16.msra.mxu0 0
      %2443 = vmatprep.subr.bf16.mxu0 0
      %2444 = vmatpush1.bf16.msra.mxu0 0
      %2445 = vmatprep.subr.bf16.mxu0 0
      %2446 = vmatpush1.bf16.msra.mxu0 0
      %2447 = vmatprep.subr.bf16.mxu0 0
      %2448 = vmatpush1.bf16.msra.mxu0 0
      %2449 = vmatprep.subr.bf16.mxu0 0
      %2450 = vmatpush1.bf16.msra.mxu0 0
      %2451 = vmatprep.subr.bf16.mxu0 0
      %2452 = vmatpush1.bf16.msra.mxu0 0
      %2453 = vmatprep.subr.bf16.mxu0 0
      %2454 = vmatpush1.bf16.msra.mxu0 0
      %2455 = vmatprep.mubr.bf16.mxu0 0
      %2456 = vmatmul.mubr.bf16.gmra.mrb[0].mxu0 %v2349
      %v2457 = vpop.f32.mrb[0].mxu0
      %v2458 = vadd.f32 0.0, %v2457
      %v2459 = vpop.f32.mrb[0].mxu0
      %v2460 = vpop.f32.mrb[0].mxu0
      %v2461 = vadd.f32 0.0, %v2460
      %v2462 = vpop.f32.mrb[0].mxu0
      %2463 = vmatprep.mubr.bf16.mxu0 0
      %2464 = vmatmul.mubr.bf16.gmra.mrb[0].mxu0 %v2352
      %v2465 = vpop.f32.mrb[0].mxu0
      %v2466 = vpop.f32.mrb[0].mxu0
      %v2467 = vpop.f32.mrb[0].mxu0
      %v2468 = vadd.f32 0.0, %v2467
      %v2469 = vpop.f32.mrb[0].mxu0
      %2470 = vmatprep.mubr.bf16.mxu0 0
      %2471 = vmatmul.mubr.bf16.gmra.mrb[0].mxu0 %v2355
      %v2472 = vpop.f32.mrb[0].mxu0
      %v2473 = vadd.f32 0.0, %v2472
      %v2474 = vpop.f32.mrb[0].mxu0
      %v2475 = vpop.f32.mrb[0].mxu0
      %v2476 = vpop.f32.mrb[0].mxu0
      %2477 = vmatprep.mubr.bf16.mxu0 0
      %2478 = vmatmul.mubr.bf16.gmra.mrb[0].mxu0 %v2358
      %v2479 = vpop.f32.mrb[0].mxu0
      %v2480 = vadd.f32 0.0, %v2479
      %v2481 = vpop.f32.mrb[0].mxu0
      %v2482 = vpop.f32.mrb[0].mxu0
      %v2483 = vadd.f32 0.0, %v2482
      %v2484 = vpop.f32.mrb[0].mxu0
      %2485 = vmatprep.mubr.bf16.mxu0 0
      %2486 = vmatmul.mubr.bf16.gmra.mrb[0].mxu0 %v2361
      %v2487 = vpop.f32.mrb[0].mxu0
      %v2488 = vpop.f32.mrb[0].mxu0
      %v2489 = vpop.f32.mrb[0].mxu0
      %v2490 = vadd.f32 0.0, %v2489
      %v2491 = vpop.f32.mrb[0].mxu0
      %2492 = vmatprep.mubr.bf16.mxu0 0
      %2493 = vmatmul.mubr.bf16.gmra.mrb[0].mxu0 %v2364
      %v2494 = vpop.f32.mrb[0].mxu0
      %v2495 = vadd.f32 0.0, %v2494
      %v2496 = vpop.f32.mrb[0].mxu0
      %v2497 = vpop.f32.mrb[0].mxu0
      %v2498 = vpop.f32.mrb[0].mxu0
      %2499 = vmatprep.mubr.bf16.mxu0 0
      %2500 = vmatmul.mubr.bf16.gmra.mrb[0].mxu0 %v2367
      %v2501 = vpop.f32.mrb[0].mxu0
      %v2502 = vadd.f32 0.0, %v2501
      %v2503 = vpop.f32.mrb[0].mxu0
      %v2504 = vpop.f32.mrb[0].mxu0
      %v2505 = vadd.f32 0.0, %v2504
      %v2506 = vpop.f32.mrb[0].mxu0
      %2507 = vmatprep.mubr.bf16.mxu0 0
      %2508 = vmatmul.mubr.bf16.gmra.mrb[0].mxu0 %v2370
      %v2509 = vpop.f32.mrb[0].mxu0
      %v2510 = vpop.f32.mrb[0].mxu0
      %v2511 = vpop.f32.mrb[0].mxu0
      %v2512 = vadd.f32 0.0, %v2511
      %v2513 = vpop.f32.mrb[0].mxu0
      %2514 = vmatprep.mubr.bf16.mxu0 0
      %2515 = vmatmul.mubr.bf16.gmra.mrb[0].mxu0 %v2373
      %v2516 = vpop.f32.mrb[0].mxu0
      %v2517 = vadd.f32 0.0, %v2516
      %v2518 = vpop.f32.mrb[0].mxu0
      %v2519 = vpop.f32.mrb[0].mxu0
      %v2520 = vpop.f32.mrb[0].mxu0
      %2521 = vmatprep.mubr.bf16.mxu0 0
      %2522 = vmatmul.mubr.bf16.gmra.mrb[0].mxu0 %v2376
      %v2523 = vpop.f32.mrb[0].mxu0
      %v2524 = vadd.f32 0.0, %v2523
      %v2525 = vpop.f32.mrb[0].mxu0
      %v2526 = vpop.f32.mrb[0].mxu0
      %v2527 = vadd.f32 0.0, %v2526
      %v2528 = vpop.f32.mrb[0].mxu0
      %2529 = vmatprep.mubr.bf16.mxu0 0
      %2530 = vmatmul.mubr.bf16.gmra.mrb[0].mxu0 %v2379
      %v2531 = vpop.f32.mrb[0].mxu0
      %v2532 = vpop.f32.mrb[0].mxu0
      %v2533 = vpop.f32.mrb[0].mxu0
      %v2534 = vadd.f32 0.0, %v2533
      %v2535 = vpop.f32.mrb[0].mxu0
      %2536 = vmatprep.mubr.bf16.mxu0 0
      %2537 = vmatmul.mubr.bf16.gmra.mrb[0].mxu0 %v2382
      %v2538 = vpop.f32.mrb[0].mxu0
      %v2539 = vadd.f32 0.0, %v2538
      %v2540 = vpop.f32.mrb[0].mxu0
      %v2541 = vpop.f32.mrb[0].mxu0
      %v2542 = vpop.f32.mrb[0].mxu0
      %2543 = vmatprep.mubr.bf16.mxu0 0
      %2544 = vmatmul.mubr.bf16.gmra.mrb[0].mxu0 %v2385
      %v2545 = vpop.f32.mrb[0].mxu0
      %v2546 = vadd.f32 0.0, %v2545
      %v2547 = vpop.f32.mrb[0].mxu0
      %v2548 = vpop.f32.mrb[0].mxu0
      %v2549 = vadd.f32 0.0, %v2548
      %v2550 = vpop.f32.mrb[0].mxu0
      %2551 = vmatprep.mubr.bf16.mxu0 0
      %2552 = vmatmul.mubr.bf16.gmra.mrb[0].mxu0 %v2388
      %v2553 = vpop.f32.mrb[0].mxu0
      %v2554 = vpop.f32.mrb[0].mxu0
      %v2555 = vpop.f32.mrb[0].mxu0
      %v2556 = vadd.f32 0.0, %v2555
      %v2557 = vpop.f32.mrb[0].mxu0
      %2558 = vmatprep.mubr.bf16.mxu0 0
      %2559 = vmatmul.mubr.bf16.gmra.mrb[0].mxu0 %v2391
      %v2560 = vpop.f32.mrb[0].mxu0
      %v2561 = vadd.f32 0.0, %v2560
      %v2562 = vpop.f32.mrb[0].mxu0
      %v2563 = vpop.f32.mrb[0].mxu0
      %v2564 = vpop.f32.mrb[0].mxu0
      %2565 = vmatprep.mubr.bf16.mxu0 0
      %2566 = vmatmul.mubr.bf16.gmra.mrb[0].mxu0 %v2394
      %v2567 = vpop.f32.mrb[0].mxu0
      %v2568 = vadd.f32 0.0, %v2567
      %v2569 = vpop.f32.mrb[0].mxu0
      %v2570 = vpop.f32.mrb[0].mxu0
      %v2571 = vadd.f32 0.0, %v2570
      %v2572 = vpop.f32.mrb[0].mxu0
      %2573 = vmatprep.mubr.bf16.mxu0 0
      %2574 = vmatmul.mubr.bf16.gmra.mrb[0].mxu0 %v2397
      %v2575 = vpop.f32.mrb[0].mxu0
      %v2576 = vpop.f32.mrb[0].mxu0
      %v2577 = vpop.f32.mrb[0].mxu0
      %v2578 = vadd.f32 0.0, %v2577
      %v2579 = vpop.f32.mrb[0].mxu0
      %2580 = vmatprep.mubr.bf16.mxu0 0
      %2581 = vmatmul.mubr.bf16.gmra.mrb[0].mxu0 %v2400
      %v2582 = vpop.f32.mrb[0].mxu0
      %v2583 = vadd.f32 0.0, %v2582
      %v2584 = vpop.f32.mrb[0].mxu0
      %v2585 = vpop.f32.mrb[0].mxu0
      %v2586 = vpop.f32.mrb[0].mxu0
      %2587 = vmatprep.mubr.bf16.mxu0 0
      %2588 = vmatmul.mubr.bf16.gmra.mrb[0].mxu0 %v2403
      %v2589 = vpop.f32.mrb[0].mxu0
      %v2590 = vadd.f32 0.0, %v2589
      %v2591 = vpop.f32.mrb[0].mxu0
      %v2592 = vpop.f32.mrb[0].mxu0
      %v2593 = vadd.f32 0.0, %v2592
      %v2594 = vpop.f32.mrb[0].mxu0
      %2595 = vmatprep.mubr.bf16.mxu0 0
      %2596 = vmatmul.mubr.bf16.gmra.mrb[0].mxu0 %v2406
      %v2597 = vpop.f32.mrb[0].mxu0
      %v2598 = vpop.f32.mrb[0].mxu0
      %v2599 = vpop.f32.mrb[0].mxu0
      %v2600 = vadd.f32 0.0, %v2599
      %v2601 = vpop.f32.mrb[0].mxu0
      %2602 = vmatprep.mubr.bf16.mxu0 0
      %2603 = vmatmul.mubr.bf16.gmra.mrb[0].mxu0 %v2409
      %v2604 = vpop.f32.mrb[0].mxu0
      %v2605 = vadd.f32 0.0, %v2604
      %v2606 = vpop.f32.mrb[0].mxu0
      %v2607 = vpop.f32.mrb[0].mxu0
      %v2608 = vpop.f32.mrb[0].mxu0
      %2609 = vmatprep.mubr.bf16.mxu0 0
      %2610 = vmatmul.mubr.bf16.gmra.mrb[0].mxu0 %v2412
      %v2611 = vpop.f32.mrb[0].mxu0
      %v2612 = vadd.f32 0.0, %v2611
      %v2613 = vpop.f32.mrb[0].mxu0
      %v2614 = vpop.f32.mrb[0].mxu0
      %v2615 = vadd.f32 0.0, %v2614
      %v2616 = vpop.f32.mrb[0].mxu0
      %2617 = vmatprep.mubr.bf16.mxu0 0
      %2618 = vmatmul.mubr.bf16.gmra.mrb[0].mxu0 %v2415
      %v2619 = vpop.f32.mrb[0].mxu0
      %v2620 = vpop.f32.mrb[0].mxu0
      %v2621 = vpop.f32.mrb[0].mxu0
      %v2622 = vadd.f32 0.0, %v2621
      %v2623 = vpop.f32.mrb[0].mxu0
      %2624 = vmatprep.mubr.bf16.mxu0 0
      %2625 = vmatmul.mubr.bf16.gmra.mrb[0].mxu0 %v2418
      %v2626 = vpop.f32.mrb[0].mxu0
      %v2627 = vadd.f32 0.0, %v2626
      %v2628 = vpop.f32.mrb[0].mxu0
      %v2629 = vpop.f32.mrb[0].mxu0
      %v2630 = vpop.f32.mrb[0].mxu0
      %2631 = vdwg.mxu0
      %v2632 = vadd.f32 %v2146, %v2458
      %v2633 = vadd.f32 %v2147, %v2461
      %v2634 = vadd.f32 %v2148, %v2468
      %v2635 = vadd.f32 %v2149, %v2473
      %v2636 = vadd.f32 %v2150, %v2480
      %v2637 = vadd.f32 %v2151, %v2483
      %v2638 = vadd.f32 %v2152, %v2490
      %v2639 = vadd.f32 %v2153, %v2495
      %v2640 = vadd.f32 %v2154, %v2502
      %v2641 = vadd.f32 %v2155, %v2505
      %v2642 = vadd.f32 %v2156, %v2512
      %v2643 = vadd.f32 %v2157, %v2517
      %v2644 = vadd.f32 %v2158, %v2524
      %v2645 = vadd.f32 %v2159, %v2527
      %v2646 = vadd.f32 %v2160, %v2534
      %v2647 = vadd.f32 %v2161, %v2539
      %v2648 = vadd.f32 %v2162, %v2546
      %v2649 = vadd.f32 %v2163, %v2549
      %v2650 = vadd.f32 %v2164, %v2556
      %v2651 = vadd.f32 %v2165, %v2561
      %v2652 = vadd.f32 %v2166, %v2568
      %v2653 = vadd.f32 %v2167, %v2571
      %v2654 = vadd.f32 %v2168, %v2578
      %v2655 = vadd.f32 %v2169, %v2583
      %v2656 = vadd.f32 %v2170, %v2590
      %v2657 = vadd.f32 %v2171, %v2593
      %v2658 = vadd.f32 %v2172, %v2600
      %v2659 = vadd.f32 %v2173, %v2605
      %v2660 = vadd.f32 %v2174, %v2612
      %v2661 = vadd.f32 %v2175, %v2615
      %v2662 = vadd.f32 %v2176, %v2622
      %v2663 = vadd.f32 %v2177, %v2627
      %s2664 = scalar_lea.vmem %s1, 8
      %v2665 = vld [vmem:[%s2664] sm:$0x3]
      %v2667 = vsel %vm1087, %v2665, 0
      %2669 = vmatprep.subr.bf16.mxu0 0
      %2670 = vmatpush1.bf16.msra.mxu0 %v2667
      %2671 = vmatprep.subr.bf16.mxu0 0
      %2672 = vmatpush1.bf16.msra.mxu0 0
      %2673 = vmatprep.subr.bf16.mxu0 0
      %2674 = vmatpush1.bf16.msra.mxu0 0
      %2675 = vmatprep.subr.bf16.mxu0 0
      %2676 = vmatpush1.bf16.msra.mxu0 0
      %2677 = vmatprep.subr.bf16.mxu0 0
      %2678 = vmatpush1.bf16.msra.mxu0 0
      %2679 = vmatprep.subr.bf16.mxu0 0
      %2680 = vmatpush1.bf16.msra.mxu0 0
      %2681 = vmatprep.subr.bf16.mxu0 0
      %2682 = vmatpush1.bf16.msra.mxu0 0
      %2683 = vmatprep.subr.bf16.mxu0 0
      %2684 = vmatpush1.bf16.msra.mxu0 0
      %2685 = vmatprep.subr.bf16.mxu0 0
      %2686 = vmatpush1.bf16.msra.mxu0 0
      %2687 = vmatprep.subr.bf16.mxu0 0
      %2688 = vmatpush1.bf16.msra.mxu0 0
      %2689 = vmatprep.subr.bf16.mxu0 0
      %2690 = vmatpush1.bf16.msra.mxu0 0
      %2691 = vmatprep.subr.bf16.mxu0 0
      %2692 = vmatpush1.bf16.msra.mxu0 0
      %2693 = vmatprep.subr.bf16.mxu0 0
      %2694 = vmatpush1.bf16.msra.mxu0 0
      %2695 = vmatprep.subr.bf16.mxu0 0
      %2696 = vmatpush1.bf16.msra.mxu0 0
      %2697 = vmatprep.subr.bf16.mxu0 0
      %2698 = vmatpush1.bf16.msra.mxu0 0
      %2699 = vmatprep.subr.bf16.mxu0 0
      %2700 = vmatpush1.bf16.msra.mxu0 0
      %2701 = vmatprep.mubr.bf16.mxu0 0
      %2702 = vmatmul.mubr.bf16.gmra.mrb[0].mxu0 %v2349
      %v2703 = vpop.f32.mrb[0].mxu0
      %v2704 = vadd.f32 0.0, %v2703
      %v2705 = vpop.f32.mrb[0].mxu0
      %v2706 = vpop.f32.mrb[0].mxu0
      %v2707 = vadd.f32 0.0, %v2706
      %v2708 = vpop.f32.mrb[0].mxu0
      %2709 = vmatprep.mubr.bf16.mxu0 0
      %2710 = vmatmul.mubr.bf16.gmra.mrb[0].mxu0 %v2352
      %v2711 = vpop.f32.mrb[0].mxu0
      %v2712 = vadd.f32 0.0, %v2711
      %v2713 = vpop.f32.mrb[0].mxu0
      %v2714 = vpop.f32.mrb[0].mxu0
      %v2715 = vadd.f32 0.0, %v2714
      %v2716 = vpop.f32.mrb[0].mxu0
      %2717 = vmatprep.mubr.bf16.mxu0 0
      %2718 = vmatmul.mubr.bf16.gmra.mrb[0].mxu0 %v2355
      %v2719 = vpop.f32.mrb[0].mxu0
      %v2720 = vadd.f32 0.0, %v2719
      %v2721 = vpop.f32.mrb[0].mxu0
      %v2722 = vpop.f32.mrb[0].mxu0
      %v2723 = vadd.f32 0.0, %v2722
      %v2724 = vpop.f32.mrb[0].mxu0
      %2725 = vmatprep.mubr.bf16.mxu0 0
      %2726 = vmatmul.mubr.bf16.gmra.mrb[0].mxu0 %v2358
      %v2727 = vpop.f32.mrb[0].mxu0
      %v2728 = vadd.f32 0.0, %v2727
      %v2729 = vpop.f32.mrb[0].mxu0
      %v2730 = vpop.f32.mrb[0].mxu0
      %v2731 = vadd.f32 0.0, %v2730
      %v2732 = vpop.f32.mrb[0].mxu0
      %2733 = vmatprep.mubr.bf16.mxu0 0
      %2734 = vmatmul.mubr.bf16.gmra.mrb[0].mxu0 %v2361
      %v2735 = vpop.f32.mrb[0].mxu0
      %v2736 = vadd.f32 0.0, %v2735
      %v2737 = vpop.f32.mrb[0].mxu0
      %v2738 = vpop.f32.mrb[0].mxu0
      %v2739 = vadd.f32 0.0, %v2738
      %v2740 = vpop.f32.mrb[0].mxu0
      %2741 = vmatprep.mubr.bf16.mxu0 0
      %2742 = vmatmul.mubr.bf16.gmra.mrb[0].mxu0 %v2364
      %v2743 = vpop.f32.mrb[0].mxu0
      %v2744 = vadd.f32 0.0, %v2743
      %v2745 = vpop.f32.mrb[0].mxu0
      %v2746 = vpop.f32.mrb[0].mxu0
      %v2747 = vadd.f32 0.0, %v2746
      %v2748 = vpop.f32.mrb[0].mxu0
      %2749 = vmatprep.mubr.bf16.mxu0 0
      %2750 = vmatmul.mubr.bf16.gmra.mrb[0].mxu0 %v2367
      %v2751 = vpop.f32.mrb[0].mxu0
      %v2752 = vadd.f32 0.0, %v2751
      %v2753 = vpop.f32.mrb[0].mxu0
      %v2754 = vpop.f32.mrb[0].mxu0
      %v2755 = vadd.f32 0.0, %v2754
      %v2756 = vpop.f32.mrb[0].mxu0
      %2757 = vmatprep.mubr.bf16.mxu0 0
      %2758 = vmatmul.mubr.bf16.gmra.mrb[0].mxu0 %v2370
      %v2759 = vpop.f32.mrb[0].mxu0
      %v2760 = vadd.f32 0.0, %v2759
      %v2761 = vpop.f32.mrb[0].mxu0
      %v2762 = vpop.f32.mrb[0].mxu0
      %v2763 = vadd.f32 0.0, %v2762
      %v2764 = vpop.f32.mrb[0].mxu0
      %2765 = vmatprep.mubr.bf16.mxu0 0
      %2766 = vmatmul.mubr.bf16.gmra.mrb[0].mxu0 %v2373
      %v2767 = vpop.f32.mrb[0].mxu0
      %v2768 = vadd.f32 0.0, %v2767
      %v2769 = vpop.f32.mrb[0].mxu0
      %v2770 = vpop.f32.mrb[0].mxu0
      %v2771 = vadd.f32 0.0, %v2770
      %v2772 = vpop.f32.mrb[0].mxu0
      %2773 = vmatprep.mubr.bf16.mxu0 0
      %2774 = vmatmul.mubr.bf16.gmra.mrb[0].mxu0 %v2376
      %v2775 = vpop.f32.mrb[0].mxu0
      %v2776 = vadd.f32 0.0, %v2775
      %v2777 = vpop.f32.mrb[0].mxu0
      %v2778 = vpop.f32.mrb[0].mxu0
      %v2779 = vadd.f32 0.0, %v2778
      %v2780 = vpop.f32.mrb[0].mxu0
      %2781 = vmatprep.mubr.bf16.mxu0 0
      %2782 = vmatmul.mubr.bf16.gmra.mrb[0].mxu0 %v2379
      %v2783 = vpop.f32.mrb[0].mxu0
      %v2784 = vadd.f32 0.0, %v2783
      %v2785 = vpop.f32.mrb[0].mxu0
      %v2786 = vpop.f32.mrb[0].mxu0
      %v2787 = vadd.f32 0.0, %v2786
      %v2788 = vpop.f32.mrb[0].mxu0
      %2789 = vmatprep.mubr.bf16.mxu0 0
      %2790 = vmatmul.mubr.bf16.gmra.mrb[0].mxu0 %v2382
      %v2791 = vpop.f32.mrb[0].mxu0
      %v2792 = vadd.f32 0.0, %v2791
      %v2793 = vpop.f32.mrb[0].mxu0
      %v2794 = vpop.f32.mrb[0].mxu0
      %v2795 = vadd.f32 0.0, %v2794
      %v2796 = vpop.f32.mrb[0].mxu0
      %2797 = vmatprep.mubr.bf16.mxu0 0
      %2798 = vmatmul.mubr.bf16.gmra.mrb[0].mxu0 %v2385
      %v2799 = vpop.f32.mrb[0].mxu0
      %v2800 = vadd.f32 0.0, %v2799
      %v2801 = vpop.f32.mrb[0].mxu0
      %v2802 = vpop.f32.mrb[0].mxu0
      %v2803 = vadd.f32 0.0, %v2802
      %v2804 = vpop.f32.mrb[0].mxu0
      %2805 = vmatprep.mubr.bf16.mxu0 0
      %2806 = vmatmul.mubr.bf16.gmra.mrb[0].mxu0 %v2388
      %v2807 = vpop.f32.mrb[0].mxu0
      %v2808 = vadd.f32 0.0, %v2807
      %v2809 = vpop.f32.mrb[0].mxu0
      %v2810 = vpop.f32.mrb[0].mxu0
      %v2811 = vadd.f32 0.0, %v2810
      %v2812 = vpop.f32.mrb[0].mxu0
      %2813 = vmatprep.mubr.bf16.mxu0 0
      %2814 = vmatmul.mubr.bf16.gmra.mrb[0].mxu0 %v2391
      %v2815 = vpop.f32.mrb[0].mxu0
      %v2816 = vadd.f32 0.0, %v2815
      %v2817 = vpop.f32.mrb[0].mxu0
      %v2818 = vpop.f32.mrb[0].mxu0
      %v2819 = vadd.f32 0.0, %v2818
      %v2820 = vpop.f32.mrb[0].mxu0
      %2821 = vmatprep.mubr.bf16.mxu0 0
      %2822 = vmatmul.mubr.bf16.gmra.mrb[0].mxu0 %v2394
      %v2823 = vpop.f32.mrb[0].mxu0
      %v2824 = vadd.f32 0.0, %v2823
      %v2825 = vpop.f32.mrb[0].mxu0
      %v2826 = vpop.f32.mrb[0].mxu0
      %v2827 = vadd.f32 0.0, %v2826
      %v2828 = vpop.f32.mrb[0].mxu0
      %2829 = vmatprep.mubr.bf16.mxu0 0
      %2830 = vmatmul.mubr.bf16.gmra.mrb[0].mxu0 %v2397
      %v2831 = vpop.f32.mrb[0].mxu0
      %v2832 = vadd.f32 0.0, %v2831
      %v2833 = vpop.f32.mrb[0].mxu0
      %v2834 = vpop.f32.mrb[0].mxu0
      %v2835 = vadd.f32 0.0, %v2834
      %v2836 = vpop.f32.mrb[0].mxu0
      %2837 = vmatprep.mubr.bf16.mxu0 0
      %2838 = vmatmul.mubr.bf16.gmra.mrb[0].mxu0 %v2400
      %v2839 = vpop.f32.mrb[0].mxu0
      %v2840 = vadd.f32 0.0, %v2839
      %v2841 = vpop.f32.mrb[0].mxu0
      %v2842 = vpop.f32.mrb[0].mxu0
      %v2843 = vadd.f32 0.0, %v2842
      %v2844 = vpop.f32.mrb[0].mxu0
      %2845 = vmatprep.mubr.bf16.mxu0 0
      %2846 = vmatmul.mubr.bf16.gmra.mrb[0].mxu0 %v2403
      %v2847 = vpop.f32.mrb[0].mxu0
      %v2848 = vadd.f32 0.0, %v2847
      %v2849 = vpop.f32.mrb[0].mxu0
      %v2850 = vpop.f32.mrb[0].mxu0
      %v2851 = vadd.f32 0.0, %v2850
      %v2852 = vpop.f32.mrb[0].mxu0
      %2853 = vmatprep.mubr.bf16.mxu0 0
      %2854 = vmatmul.mubr.bf16.gmra.mrb[0].mxu0 %v2406
      %v2855 = vpop.f32.mrb[0].mxu0
      %v2856 = vadd.f32 0.0, %v2855
      %v2857 = vpop.f32.mrb[0].mxu0
      %v2858 = vpop.f32.mrb[0].mxu0
      %v2859 = vadd.f32 0.0, %v2858
      %v2860 = vpop.f32.mrb[0].mxu0
      %2861 = vmatprep.mubr.bf16.mxu0 0
      %2862 = vmatmul.mubr.bf16.gmra.mrb[0].mxu0 %v2409
      %v2863 = vpop.f32.mrb[0].mxu0
      %v2864 = vadd.f32 0.0, %v2863
      %v2865 = vpop.f32.mrb[0].mxu0
      %v2866 = vpop.f32.mrb[0].mxu0
      %v2867 = vadd.f32 0.0, %v2866
      %v2868 = vpop.f32.mrb[0].mxu0
      %2869 = vmatprep.mubr.bf16.mxu0 0
      %2870 = vmatmul.mubr.bf16.gmra.mrb[0].mxu0 %v2412
      %v2871 = vpop.f32.mrb[0].mxu0
      %v2872 = vadd.f32 0.0, %v2871
      %v2873 = vpop.f32.mrb[0].mxu0
      %v2874 = vpop.f32.mrb[0].mxu0
      %v2875 = vadd.f32 0.0, %v2874
      %v2876 = vpop.f32.mrb[0].mxu0
      %2877 = vmatprep.mubr.bf16.mxu0 0
      %2878 = vmatmul.mubr.bf16.gmra.mrb[0].mxu0 %v2415
      %v2879 = vpop.f32.mrb[0].mxu0
      %v2880 = vadd.f32 0.0, %v2879
      %v2881 = vpop.f32.mrb[0].mxu0
      %v2882 = vpop.f32.mrb[0].mxu0
      %v2883 = vadd.f32 0.0, %v2882
      %v2884 = vpop.f32.mrb[0].mxu0
      %2885 = vmatprep.mubr.bf16.mxu0 0
      %2886 = vmatmul.mubr.bf16.gmra.mrb[0].mxu0 %v2418
      %v2887 = vpop.f32.mrb[0].mxu0
      %v2888 = vadd.f32 0.0, %v2887
      %v2889 = vpop.f32.mrb[0].mxu0
      %v2890 = vpop.f32.mrb[0].mxu0
      %v2891 = vadd.f32 0.0, %v2890
      %v2892 = vpop.f32.mrb[0].mxu0
      %2893 = vdwg.mxu0
      %v2942 = vrot.slane %v2704, 1
      %v2943 = vrot.slane %v2707, 1
      %v2944 = vsel %vm1610, %v2942, %v2943
      %v2945 = vrot.slane %v2712, 1
      %v2946 = vsel %vm1610, %v2943, %v2945
      %v2947 = vrot.slane %v2715, 1
      %v2948 = vrot.slane %v2720, 1
      %v2949 = vsel %vm1610, %v2947, %v2948
      %v2950 = vrot.slane %v2723, 1
      %v2951 = vsel %vm1610, %v2948, %v2950
      %v2952 = vrot.slane %v2728, 1
      %v2953 = vrot.slane %v2731, 1
      %v2954 = vsel %vm1610, %v2952, %v2953
      %v2955 = vrot.slane %v2736, 1
      %v2956 = vsel %vm1610, %v2953, %v2955
      %v2957 = vrot.slane %v2739, 1
      %v2958 = vrot.slane %v2744, 1
      %v2959 = vsel %vm1610, %v2957, %v2958
      %v2960 = vrot.slane %v2747, 1
      %v2961 = vsel %vm1610, %v2958, %v2960
      %v2962 = vrot.slane %v2752, 1
      %v2963 = vrot.slane %v2755, 1
      %v2964 = vsel %vm1610, %v2962, %v2963
      %v2965 = vrot.slane %v2760, 1
      %v2966 = vsel %vm1610, %v2963, %v2965
      %v2967 = vrot.slane %v2763, 1
      %v2968 = vrot.slane %v2768, 1
      %v2969 = vsel %vm1610, %v2967, %v2968
      %v2970 = vrot.slane %v2771, 1
      %v2971 = vsel %vm1610, %v2968, %v2970
      %v2972 = vrot.slane %v2776, 1
      %v2973 = vrot.slane %v2779, 1
      %v2974 = vsel %vm1610, %v2972, %v2973
      %v2975 = vrot.slane %v2784, 1
      %v2976 = vsel %vm1610, %v2973, %v2975
      %v2977 = vrot.slane %v2787, 1
      %v2978 = vrot.slane %v2792, 1
      %v2979 = vsel %vm1610, %v2977, %v2978
      %v2980 = vrot.slane %v2795, 1
      %v2981 = vsel %vm1610, %v2978, %v2980
      %v2982 = vrot.slane %v2800, 1
      %v2983 = vrot.slane %v2803, 1
      %v2984 = vsel %vm1610, %v2982, %v2983
      %v2985 = vrot.slane %v2808, 1
      %v2986 = vsel %vm1610, %v2983, %v2985
      %v2987 = vrot.slane %v2811, 1
      %v2988 = vrot.slane %v2816, 1
      %v2989 = vsel %vm1610, %v2987, %v2988
      %v2990 = vrot.slane %v2819, 1
      %v2991 = vsel %vm1610, %v2988, %v2990
      %v2992 = vrot.slane %v2824, 1
      %v2993 = vrot.slane %v2827, 1
      %v2994 = vsel %vm1610, %v2992, %v2993
      %v2995 = vrot.slane %v2832, 1
      %v2996 = vsel %vm1610, %v2993, %v2995
      %v2997 = vrot.slane %v2835, 1
      %v2998 = vrot.slane %v2840, 1
      %v2999 = vsel %vm1610, %v2997, %v2998
      %v3000 = vrot.slane %v2843, 1
      %v3001 = vsel %vm1610, %v2998, %v3000
      %v3002 = vrot.slane %v2848, 1
      %v3003 = vrot.slane %v2851, 1
      %v3004 = vsel %vm1610, %v3002, %v3003
      %v3005 = vrot.slane %v2856, 1
      %v3006 = vsel %vm1610, %v3003, %v3005
      %v3007 = vrot.slane %v2859, 1
      %v3008 = vrot.slane %v2864, 1
      %v3009 = vsel %vm1610, %v3007, %v3008
      %v3010 = vrot.slane %v2867, 1
      %v3011 = vsel %vm1610, %v3008, %v3010
      %v3012 = vrot.slane %v2872, 1
      %v3013 = vrot.slane %v2875, 1
      %v3014 = vsel %vm1610, %v3012, %v3013
      %v3015 = vrot.slane %v2880, 1
      %v3016 = vsel %vm1610, %v3013, %v3015
      %v3017 = vrot.slane %v2883, 1
      %v3018 = vrot.slane %v2888, 1
      %v3019 = vsel %vm1610, %v3017, %v3018
      %v3020 = vrot.slane %v2891, 1
      %v3021 = vsel %vm1610, %v3018, %v3020
      %v3054 = vadd.f32 %v2632, %v2944
      %v3055 = vadd.f32 %v2633, %v2946
      %v3056 = vadd.f32 %v2634, %v2949
      %v3057 = vadd.f32 %v2635, %v2951
      %v3058 = vadd.f32 %v2636, %v2954
      %v3059 = vadd.f32 %v2637, %v2956
      %v3060 = vadd.f32 %v2638, %v2959
      %v3061 = vadd.f32 %v2639, %v2961
      %v3062 = vadd.f32 %v2640, %v2964
      %v3063 = vadd.f32 %v2641, %v2966
      %v3064 = vadd.f32 %v2642, %v2969
      %v3065 = vadd.f32 %v2643, %v2971
      %v3066 = vadd.f32 %v2644, %v2974
      %v3067 = vadd.f32 %v2645, %v2976
      %v3068 = vadd.f32 %v2646, %v2979
      %v3069 = vadd.f32 %v2647, %v2981
      %v3070 = vadd.f32 %v2648, %v2984
      %v3071 = vadd.f32 %v2649, %v2986
      %v3072 = vadd.f32 %v2650, %v2989
      %v3073 = vadd.f32 %v2651, %v2991
      %v3074 = vadd.f32 %v2652, %v2994
      %v3075 = vadd.f32 %v2653, %v2996
      %v3076 = vadd.f32 %v2654, %v2999
      %v3077 = vadd.f32 %v2655, %v3001
      %v3078 = vadd.f32 %v2656, %v3004
      %v3079 = vadd.f32 %v2657, %v3006
      %v3080 = vadd.f32 %v2658, %v3009
      %v3081 = vadd.f32 %v2659, %v3011
      %v3082 = vadd.f32 %v2660, %v3014
      %v3083 = vadd.f32 %v2661, %v3016
      %v3084 = vadd.f32 %v2662, %v3019
      %v3085 = vadd.f32 %v2663, %v3021
      %s3086 = scalar_lea.vmem %s1, 10
      %v3087 = vld [vmem:[%s3086] sm:$0x3]
      %v3089 = vsel %vm1087, %v3087, 0
      %3091 = vmatprep.subr.bf16.mxu0 0
      %3092 = vmatpush1.bf16.msra.mxu0 %v3089
      %3093 = vmatprep.subr.bf16.mxu0 0
      %3094 = vmatpush1.bf16.msra.mxu0 0
      %3095 = vmatprep.subr.bf16.mxu0 0
      %3096 = vmatpush1.bf16.msra.mxu0 0
      %3097 = vmatprep.subr.bf16.mxu0 0
      %3098 = vmatpush1.bf16.msra.mxu0 0
      %3099 = vmatprep.subr.bf16.mxu0 0
      %3100 = vmatpush1.bf16.msra.mxu0 0
      %3101 = vmatprep.subr.bf16.mxu0 0
      %3102 = vmatpush1.bf16.msra.mxu0 0
      %3103 = vmatprep.subr.bf16.mxu0 0
      %3104 = vmatpush1.bf16.msra.mxu0 0
      %3105 = vmatprep.subr.bf16.mxu0 0
      %3106 = vmatpush1.bf16.msra.mxu0 0
      %3107 = vmatprep.subr.bf16.mxu0 0
      %3108 = vmatpush1.bf16.msra.mxu0 0
      %3109 = vmatprep.subr.bf16.mxu0 0
      %3110 = vmatpush1.bf16.msra.mxu0 0
      %3111 = vmatprep.subr.bf16.mxu0 0
      %3112 = vmatpush1.bf16.msra.mxu0 0
      %3113 = vmatprep.subr.bf16.mxu0 0
      %3114 = vmatpush1.bf16.msra.mxu0 0
      %3115 = vmatprep.subr.bf16.mxu0 0
      %3116 = vmatpush1.bf16.msra.mxu0 0
      %3117 = vmatprep.subr.bf16.mxu0 0
      %3118 = vmatpush1.bf16.msra.mxu0 0
      %3119 = vmatprep.subr.bf16.mxu0 0
      %3120 = vmatpush1.bf16.msra.mxu0 0
      %3121 = vmatprep.subr.bf16.mxu0 0
      %3122 = vmatpush1.bf16.msra.mxu0 0
      %3123 = vmatprep.mubr.bf16.mxu0 0
      %3124 = vmatmul.mubr.bf16.gmra.mrb[0].mxu0 %v2349
      %v3125 = vpop.f32.mrb[0].mxu0
      %v3126 = vadd.f32 0.0, %v3125
      %v3127 = vpop.f32.mrb[0].mxu0
      %v3128 = vpop.f32.mrb[0].mxu0
      %v3129 = vadd.f32 0.0, %v3128
      %v3130 = vpop.f32.mrb[0].mxu0
      %3131 = vmatprep.mubr.bf16.mxu0 0
      %3132 = vmatmul.mubr.bf16.gmra.mrb[0].mxu0 %v2352
      %v3133 = vpop.f32.mrb[0].mxu0
      %v3134 = vadd.f32 0.0, %v3133
      %v3135 = vpop.f32.mrb[0].mxu0
      %v3136 = vpop.f32.mrb[0].mxu0
      %v3137 = vadd.f32 0.0, %v3136
      %v3138 = vpop.f32.mrb[0].mxu0
      %3139 = vmatprep.mubr.bf16.mxu0 0
      %3140 = vmatmul.mubr.bf16.gmra.mrb[0].mxu0 %v2355
      %v3141 = vpop.f32.mrb[0].mxu0
      %v3142 = vadd.f32 0.0, %v3141
      %v3143 = vpop.f32.mrb[0].mxu0
      %v3144 = vpop.f32.mrb[0].mxu0
      %v3145 = vadd.f32 0.0, %v3144
      %v3146 = vpop.f32.mrb[0].mxu0
      %3147 = vmatprep.mubr.bf16.mxu0 0
      %3148 = vmatmul.mubr.bf16.gmra.mrb[0].mxu0 %v2358
      %v3149 = vpop.f32.mrb[0].mxu0
      %v3150 = vadd.f32 0.0, %v3149
      %v3151 = vpop.f32.mrb[0].mxu0
      %v3152 = vpop.f32.mrb[0].mxu0
      %v3153 = vadd.f32 0.0, %v3152
      %v3154 = vpop.f32.mrb[0].mxu0
      %3155 = vmatprep.mubr.bf16.mxu0 0
      %3156 = vmatmul.mubr.bf16.gmra.mrb[0].mxu0 %v2361
      %v3157 = vpop.f32.mrb[0].mxu0
      %v3158 = vadd.f32 0.0, %v3157
      %v3159 = vpop.f32.mrb[0].mxu0
      %v3160 = vpop.f32.mrb[0].mxu0
      %v3161 = vadd.f32 0.0, %v3160
      %v3162 = vpop.f32.mrb[0].mxu0
      %3163 = vmatprep.mubr.bf16.mxu0 0
      %3164 = vmatmul.mubr.bf16.gmra.mrb[0].mxu0 %v2364
      %v3165 = vpop.f32.mrb[0].mxu0
      %v3166 = vadd.f32 0.0, %v3165
      %v3167 = vpop.f32.mrb[0].mxu0
      %v3168 = vpop.f32.mrb[0].mxu0
      %v3169 = vadd.f32 0.0, %v3168
      %v3170 = vpop.f32.mrb[0].mxu0
      %3171 = vmatprep.mubr.bf16.mxu0 0
      %3172 = vmatmul.mubr.bf16.gmra.mrb[0].mxu0 %v2367
      %v3173 = vpop.f32.mrb[0].mxu0
      %v3174 = vadd.f32 0.0, %v3173
      %v3175 = vpop.f32.mrb[0].mxu0
      %v3176 = vpop.f32.mrb[0].mxu0
      %v3177 = vadd.f32 0.0, %v3176
      %v3178 = vpop.f32.mrb[0].mxu0
      %3179 = vmatprep.mubr.bf16.mxu0 0
      %3180 = vmatmul.mubr.bf16.gmra.mrb[0].mxu0 %v2370
      %v3181 = vpop.f32.mrb[0].mxu0
      %v3182 = vadd.f32 0.0, %v3181
      %v3183 = vpop.f32.mrb[0].mxu0
      %v3184 = vpop.f32.mrb[0].mxu0
      %v3185 = vadd.f32 0.0, %v3184
      %v3186 = vpop.f32.mrb[0].mxu0
      %3187 = vmatprep.mubr.bf16.mxu0 0
      %3188 = vmatmul.mubr.bf16.gmra.mrb[0].mxu0 %v2373
      %v3189 = vpop.f32.mrb[0].mxu0
      %v3190 = vadd.f32 0.0, %v3189
      %v3191 = vpop.f32.mrb[0].mxu0
      %v3192 = vpop.f32.mrb[0].mxu0
      %v3193 = vadd.f32 0.0, %v3192
      %v3194 = vpop.f32.mrb[0].mxu0
      %3195 = vmatprep.mubr.bf16.mxu0 0
      %3196 = vmatmul.mubr.bf16.gmra.mrb[0].mxu0 %v2376
      %v3197 = vpop.f32.mrb[0].mxu0
      %v3198 = vadd.f32 0.0, %v3197
      %v3199 = vpop.f32.mrb[0].mxu0
      %v3200 = vpop.f32.mrb[0].mxu0
      %v3201 = vadd.f32 0.0, %v3200
      %v3202 = vpop.f32.mrb[0].mxu0
      %3203 = vmatprep.mubr.bf16.mxu0 0
      %3204 = vmatmul.mubr.bf16.gmra.mrb[0].mxu0 %v2379
      %v3205 = vpop.f32.mrb[0].mxu0
      %v3206 = vadd.f32 0.0, %v3205
      %v3207 = vpop.f32.mrb[0].mxu0
      %v3208 = vpop.f32.mrb[0].mxu0
      %v3209 = vadd.f32 0.0, %v3208
      %v3210 = vpop.f32.mrb[0].mxu0
      %3211 = vmatprep.mubr.bf16.mxu0 0
      %3212 = vmatmul.mubr.bf16.gmra.mrb[0].mxu0 %v2382
      %v3213 = vpop.f32.mrb[0].mxu0
      %v3214 = vadd.f32 0.0, %v3213
      %v3215 = vpop.f32.mrb[0].mxu0
      %v3216 = vpop.f32.mrb[0].mxu0
      %v3217 = vadd.f32 0.0, %v3216
      %v3218 = vpop.f32.mrb[0].mxu0
      %3219 = vmatprep.mubr.bf16.mxu0 0
      %3220 = vmatmul.mubr.bf16.gmra.mrb[0].mxu0 %v2385
      %v3221 = vpop.f32.mrb[0].mxu0
      %v3222 = vadd.f32 0.0, %v3221
      %v3223 = vpop.f32.mrb[0].mxu0
      %v3224 = vpop.f32.mrb[0].mxu0
      %v3225 = vadd.f32 0.0, %v3224
      %v3226 = vpop.f32.mrb[0].mxu0
      %3227 = vmatprep.mubr.bf16.mxu0 0
      %3228 = vmatmul.mubr.bf16.gmra.mrb[0].mxu0 %v2388
      %v3229 = vpop.f32.mrb[0].mxu0
      %v3230 = vadd.f32 0.0, %v3229
      %v3231 = vpop.f32.mrb[0].mxu0
      %v3232 = vpop.f32.mrb[0].mxu0
      %v3233 = vadd.f32 0.0, %v3232
      %v3234 = vpop.f32.mrb[0].mxu0
      %3235 = vmatprep.mubr.bf16.mxu0 0
      %3236 = vmatmul.mubr.bf16.gmra.mrb[0].mxu0 %v2391
      %v3237 = vpop.f32.mrb[0].mxu0
      %v3238 = vadd.f32 0.0, %v3237
      %v3239 = vpop.f32.mrb[0].mxu0
      %v3240 = vpop.f32.mrb[0].mxu0
      %v3241 = vadd.f32 0.0, %v3240
      %v3242 = vpop.f32.mrb[0].mxu0
      %3243 = vmatprep.mubr.bf16.mxu0 0
      %3244 = vmatmul.mubr.bf16.gmra.mrb[0].mxu0 %v2394
      %v3245 = vpop.f32.mrb[0].mxu0
      %v3246 = vadd.f32 0.0, %v3245
      %v3247 = vpop.f32.mrb[0].mxu0
      %v3248 = vpop.f32.mrb[0].mxu0
      %v3249 = vadd.f32 0.0, %v3248
      %v3250 = vpop.f32.mrb[0].mxu0
      %3251 = vmatprep.mubr.bf16.mxu0 0
      %3252 = vmatmul.mubr.bf16.gmra.mrb[0].mxu0 %v2397
      %v3253 = vpop.f32.mrb[0].mxu0
      %v3254 = vadd.f32 0.0, %v3253
      %v3255 = vpop.f32.mrb[0].mxu0
      %v3256 = vpop.f32.mrb[0].mxu0
      %v3257 = vadd.f32 0.0, %v3256
      %v3258 = vpop.f32.mrb[0].mxu0
      %3259 = vmatprep.mubr.bf16.mxu0 0
      %3260 = vmatmul.mubr.bf16.gmra.mrb[0].mxu0 %v2400
      %v3261 = vpop.f32.mrb[0].mxu0
      %v3262 = vadd.f32 0.0, %v3261
      %v3263 = vpop.f32.mrb[0].mxu0
      %v3264 = vpop.f32.mrb[0].mxu0
      %v3265 = vadd.f32 0.0, %v3264
      %v3266 = vpop.f32.mrb[0].mxu0
      %3267 = vmatprep.mubr.bf16.mxu0 0
      %3268 = vmatmul.mubr.bf16.gmra.mrb[0].mxu0 %v2403
      %v3269 = vpop.f32.mrb[0].mxu0
      %v3270 = vadd.f32 0.0, %v3269
      %v3271 = vpop.f32.mrb[0].mxu0
      %v3272 = vpop.f32.mrb[0].mxu0
      %v3273 = vadd.f32 0.0, %v3272
      %v3274 = vpop.f32.mrb[0].mxu0
      %3275 = vmatprep.mubr.bf16.mxu0 0
      %3276 = vmatmul.mubr.bf16.gmra.mrb[0].mxu0 %v2406
      %v3277 = vpop.f32.mrb[0].mxu0
      %v3278 = vadd.f32 0.0, %v3277
      %v3279 = vpop.f32.mrb[0].mxu0
      %v3280 = vpop.f32.mrb[0].mxu0
      %v3281 = vadd.f32 0.0, %v3280
      %v3282 = vpop.f32.mrb[0].mxu0
      %3283 = vmatprep.mubr.bf16.mxu0 0
      %3284 = vmatmul.mubr.bf16.gmra.mrb[0].mxu0 %v2409
      %v3285 = vpop.f32.mrb[0].mxu0
      %v3286 = vadd.f32 0.0, %v3285
      %v3287 = vpop.f32.mrb[0].mxu0
      %v3288 = vpop.f32.mrb[0].mxu0
      %v3289 = vadd.f32 0.0, %v3288
      %v3290 = vpop.f32.mrb[0].mxu0
      %3291 = vmatprep.mubr.bf16.mxu0 0
      %3292 = vmatmul.mubr.bf16.gmra.mrb[0].mxu0 %v2412
      %v3293 = vpop.f32.mrb[0].mxu0
      %v3294 = vadd.f32 0.0, %v3293
      %v3295 = vpop.f32.mrb[0].mxu0
      %v3296 = vpop.f32.mrb[0].mxu0
      %v3297 = vadd.f32 0.0, %v3296
      %v3298 = vpop.f32.mrb[0].mxu0
      %3299 = vmatprep.mubr.bf16.mxu0 0
      %3300 = vmatmul.mubr.bf16.gmra.mrb[0].mxu0 %v2415
      %v3301 = vpop.f32.mrb[0].mxu0
      %v3302 = vadd.f32 0.0, %v3301
      %v3303 = vpop.f32.mrb[0].mxu0
      %v3304 = vpop.f32.mrb[0].mxu0
      %v3305 = vadd.f32 0.0, %v3304
      %v3306 = vpop.f32.mrb[0].mxu0
      %3307 = vmatprep.mubr.bf16.mxu0 0
      %3308 = vmatmul.mubr.bf16.gmra.mrb[0].mxu0 %v2418
      %v3309 = vpop.f32.mrb[0].mxu0
      %v3310 = vadd.f32 0.0, %v3309
      %v3311 = vpop.f32.mrb[0].mxu0
      %v3312 = vpop.f32.mrb[0].mxu0
      %v3313 = vadd.f32 0.0, %v3312
      %v3314 = vpop.f32.mrb[0].mxu0
      %3315 = vdwg.mxu0
      %v3364 = vrot.slane %v3126, 2
      %v3365 = vrot.slane %v3129, 2
      %v3366 = vsel %vm2033, %v3364, %v3365
      %v3367 = vrot.slane %v3134, 2
      %v3368 = vsel %vm2033, %v3365, %v3367
      %v3369 = vrot.slane %v3137, 2
      %v3370 = vrot.slane %v3142, 2
      %v3371 = vsel %vm2033, %v3369, %v3370
      %v3372 = vrot.slane %v3145, 2
      %v3373 = vsel %vm2033, %v3370, %v3372
      %v3374 = vrot.slane %v3150, 2
      %v3375 = vrot.slane %v3153, 2
      %v3376 = vsel %vm2033, %v3374, %v3375
      %v3377 = vrot.slane %v3158, 2
      %v3378 = vsel %vm2033, %v3375, %v3377
      %v3379 = vrot.slane %v3161, 2
      %v3380 = vrot.slane %v3166, 2
      %v3381 = vsel %vm2033, %v3379, %v3380
      %v3382 = vrot.slane %v3169, 2
      %v3383 = vsel %vm2033, %v3380, %v3382
      %v3384 = vrot.slane %v3174, 2
      %v3385 = vrot.slane %v3177, 2
      %v3386 = vsel %vm2033, %v3384, %v3385
      %v3387 = vrot.slane %v3182, 2
      %v3388 = vsel %vm2033, %v3385, %v3387
      %v3389 = vrot.slane %v3185, 2
      %v3390 = vrot.slane %v3190, 2
      %v3391 = vsel %vm2033, %v3389, %v3390
      %v3392 = vrot.slane %v3193, 2
      %v3393 = vsel %vm2033, %v3390, %v3392
      %v3394 = vrot.slane %v3198, 2
      %v3395 = vrot.slane %v3201, 2
      %v3396 = vsel %vm2033, %v3394, %v3395
      %v3397 = vrot.slane %v3206, 2
      %v3398 = vsel %vm2033, %v3395, %v3397
      %v3399 = vrot.slane %v3209, 2
      %v3400 = vrot.slane %v3214, 2
      %v3401 = vsel %vm2033, %v3399, %v3400
      %v3402 = vrot.slane %v3217, 2
      %v3403 = vsel %vm2033, %v3400, %v3402
      %v3404 = vrot.slane %v3222, 2
      %v3405 = vrot.slane %v3225, 2
      %v3406 = vsel %vm2033, %v3404, %v3405
      %v3407 = vrot.slane %v3230, 2
      %v3408 = vsel %vm2033, %v3405, %v3407
      %v3409 = vrot.slane %v3233, 2
      %v3410 = vrot.slane %v3238, 2
      %v3411 = vsel %vm2033, %v3409, %v3410
      %v3412 = vrot.slane %v3241, 2
      %v3413 = vsel %vm2033, %v3410, %v3412
      %v3414 = vrot.slane %v3246, 2
      %v3415 = vrot.slane %v3249, 2
      %v3416 = vsel %vm2033, %v3414, %v3415
      %v3417 = vrot.slane %v3254, 2
      %v3418 = vsel %vm2033, %v3415, %v3417
      %v3419 = vrot.slane %v3257, 2
      %v3420 = vrot.slane %v3262, 2
      %v3421 = vsel %vm2033, %v3419, %v3420
      %v3422 = vrot.slane %v3265, 2
      %v3423 = vsel %vm2033, %v3420, %v3422
      %v3424 = vrot.slane %v3270, 2
      %v3425 = vrot.slane %v3273, 2
      %v3426 = vsel %vm2033, %v3424, %v3425
      %v3427 = vrot.slane %v3278, 2
      %v3428 = vsel %vm2033, %v3425, %v3427
      %v3429 = vrot.slane %v3281, 2
      %v3430 = vrot.slane %v3286, 2
      %v3431 = vsel %vm2033, %v3429, %v3430
      %v3432 = vrot.slane %v3289, 2
      %v3433 = vsel %vm2033, %v3430, %v3432
      %v3434 = vrot.slane %v3294, 2
      %v3435 = vrot.slane %v3297, 2
      %v3436 = vsel %vm2033, %v3434, %v3435
      %v3437 = vrot.slane %v3302, 2
      %v3438 = vsel %vm2033, %v3435, %v3437
      %v3439 = vrot.slane %v3305, 2
      %v3440 = vrot.slane %v3310, 2
      %v3441 = vsel %vm2033, %v3439, %v3440
      %v3442 = vrot.slane %v3313, 2
      %v3443 = vsel %vm2033, %v3440, %v3442
      %v3476 = vadd.f32 %v3054, %v3366
      %v3477 = vadd.f32 %v3055, %v3368
      %v3478 = vadd.f32 %v3056, %v3371
      %v3479 = vadd.f32 %v3057, %v3373
      %v3480 = vadd.f32 %v3058, %v3376
      %v3481 = vadd.f32 %v3059, %v3378
      %v3482 = vadd.f32 %v3060, %v3381
      %v3483 = vadd.f32 %v3061, %v3383
      %v3484 = vadd.f32 %v3062, %v3386
      %v3485 = vadd.f32 %v3063, %v3388
      %v3486 = vadd.f32 %v3064, %v3391
      %v3487 = vadd.f32 %v3065, %v3393
      %v3488 = vadd.f32 %v3066, %v3396
      %v3489 = vadd.f32 %v3067, %v3398
      %v3490 = vadd.f32 %v3068, %v3401
      %v3491 = vadd.f32 %v3069, %v3403
      %v3492 = vadd.f32 %v3070, %v3406
      %v3493 = vadd.f32 %v3071, %v3408
      %v3494 = vadd.f32 %v3072, %v3411
      %v3495 = vadd.f32 %v3073, %v3413
      %v3496 = vadd.f32 %v3074, %v3416
      %v3497 = vadd.f32 %v3075, %v3418
      %v3498 = vadd.f32 %v3076, %v3421
      %v3499 = vadd.f32 %v3077, %v3423
      %v3500 = vadd.f32 %v3078, %v3426
      %v3501 = vadd.f32 %v3079, %v3428
      %v3502 = vadd.f32 %v3080, %v3431
      %v3503 = vadd.f32 %v3081, %v3433
      %v3504 = vadd.f32 %v3082, %v3436
      %v3505 = vadd.f32 %v3083, %v3438
      %v3506 = vadd.f32 %v3084, %v3441
      %v3507 = vadd.f32 %v3085, %v3443
      %s3508 = scalar_lea.vmem [#allocation2], 24
      %v3509 = vld [vmem:[%s3508] sm:$0xf]
      %v3510 = vld [vmem:[%s3508 + $0x4] sm:$0xf]
      %v3511 = vld [vmem:[%s3508 + $0x8] sm:$0xf]
      %v3512 = vld [vmem:[%s3508 + $0xc] sm:$0xf]
      %v3513 = vld [vmem:[%s3508 + $0x10] sm:$0xf]
      %v3514 = vld [vmem:[%s3508 + $0x14] sm:$0xf]
      %v3515 = vld [vmem:[%s3508 + $0x18] sm:$0xf]
      %v3516 = vld [vmem:[%s3508 + $0x1c] sm:$0xf]
      %v3517 = vld [vmem:[%s3508 + $0x20] sm:$0xf]
      %v3518 = vld [vmem:[%s3508 + $0x24] sm:$0xf]
      %v3519 = vld [vmem:[%s3508 + $0x28] sm:$0xf]
      %v3520 = vld [vmem:[%s3508 + $0x2c] sm:$0xf]
      %v3521 = vld [vmem:[%s3508 + $0x30] sm:$0xf]
      %v3522 = vld [vmem:[%s3508 + $0x34] sm:$0xf]
      %v3523 = vld [vmem:[%s3508 + $0x38] sm:$0xf]
      %v3524 = vld [vmem:[%s3508 + $0x3c] sm:$0xf]
      %v3525 = vld [vmem:[%s3508 + $0x40] sm:$0xf]
      %v3526 = vld [vmem:[%s3508 + $0x44] sm:$0xf]
      %v3527 = vld [vmem:[%s3508 + $0x48] sm:$0xf]
      %v3528 = vld [vmem:[%s3508 + $0x4c] sm:$0xf]
      %v3529 = vld [vmem:[%s3508 + $0x50] sm:$0xf]
      %v3530 = vld [vmem:[%s3508 + $0x54] sm:$0xf]
      %v3531 = vld [vmem:[%s3508 + $0x58] sm:$0xf]
      %v3532 = vld [vmem:[%s3508 + $0x5c] sm:$0xf]
      %v3533 = vld [vmem:[%s3508 + $0x60] sm:$0xf]
      %v3534 = vld [vmem:[%s3508 + $0x64] sm:$0xf]
      %v3535 = vld [vmem:[%s3508 + $0x68] sm:$0xf]
      %v3536 = vld [vmem:[%s3508 + $0x6c] sm:$0xf]
      %v3537 = vld [vmem:[%s3508 + $0x70] sm:$0xf]
      %v3538 = vld [vmem:[%s3508 + $0x74] sm:$0xf]
      %v3539 = vld [vmem:[%s3508 + $0x78] sm:$0xf]
      %v3540 = vld [vmem:[%s3508 + $0x7c] sm:$0xf]
      %v3541 = vld [vmem:[%s3508 + $0x80] sm:$0xf]
      %v3542 = vld [vmem:[%s3508 + $0x84] sm:$0xf]
      %v3543 = vld [vmem:[%s3508 + $0x88] sm:$0xf]
      %v3544 = vld [vmem:[%s3508 + $0x8c] sm:$0xf]
      %v3545 = vld [vmem:[%s3508 + $0x90] sm:$0xf]
      %v3546 = vld [vmem:[%s3508 + $0x94] sm:$0xf]
      %v3547 = vld [vmem:[%s3508 + $0x98] sm:$0xf]
      %v3548 = vld [vmem:[%s3508 + $0x9c] sm:$0xf]
      %v3549 = vld [vmem:[%s3508 + $0xa0] sm:$0xf]
      %v3550 = vld [vmem:[%s3508 + $0xa4] sm:$0xf]
      %v3551 = vld [vmem:[%s3508 + $0xa8] sm:$0xf]
      %v3552 = vld [vmem:[%s3508 + $0xac] sm:$0xf]
      %v3553 = vld [vmem:[%s3508 + $0xb0] sm:$0xf]
      %v3554 = vld [vmem:[%s3508 + $0xb4] sm:$0xf]
      %v3555 = vld [vmem:[%s3508 + $0xb8] sm:$0xf]
      %v3556 = vld [vmem:[%s3508 + $0xbc] sm:$0xf]
      %s3557 = scalar_lea.vmem %s1, 12
      %v3558 = vld [vmem:[%s3557] sm:$0x3]
      %v3607 = vunpack.c.l.b16 %v3509
      %v3608 = vunpack.c.l.b16 %v3510
      %v3609 = vunpack.c.l.b16 %v3511
      %v3610 = vunpack.c.l.b16 %v3512
      %v3611 = vunpack.c.l.b16 %v3513
      %v3612 = vunpack.c.l.b16 %v3514
      %v3613 = vunpack.c.l.b16 %v3515
      %v3614 = vunpack.c.l.b16 %v3516
      %v3615 = vunpack.c.l.b16 %v3517
      %v3616 = vunpack.c.l.b16 %v3518
      %v3617 = vunpack.c.l.b16 %v3519
      %v3618 = vunpack.c.l.b16 %v3520
      %v3619 = vunpack.c.l.b16 %v3521
      %v3620 = vunpack.c.l.b16 %v3522
      %v3621 = vunpack.c.l.b16 %v3523
      %v3622 = vunpack.c.l.b16 %v3524
      %v3623 = vunpack.c.l.b16 %v3525
      %v3624 = vunpack.c.l.b16 %v3526
      %v3625 = vunpack.c.l.b16 %v3527
      %v3626 = vunpack.c.l.b16 %v3528
      %v3627 = vunpack.c.l.b16 %v3529
      %v3628 = vunpack.c.l.b16 %v3530
      %v3629 = vunpack.c.l.b16 %v3531
      %v3630 = vunpack.c.l.b16 %v3532
      %v3631 = vunpack.c.l.b16 %v3533
      %v3632 = vunpack.c.l.b16 %v3534
      %v3633 = vunpack.c.l.b16 %v3535
      %v3634 = vunpack.c.l.b16 %v3536
      %v3635 = vunpack.c.l.b16 %v3537
      %v3636 = vunpack.c.l.b16 %v3538
      %v3637 = vunpack.c.l.b16 %v3539
      %v3638 = vunpack.c.l.b16 %v3540
      %v3639 = vunpack.c.l.b16 %v3541
      %v3640 = vunpack.c.l.b16 %v3542
      %v3641 = vunpack.c.l.b16 %v3543
      %v3642 = vunpack.c.l.b16 %v3544
      %v3643 = vunpack.c.l.b16 %v3545
      %v3644 = vunpack.c.l.b16 %v3546
      %v3645 = vunpack.c.l.b16 %v3547
      %v3646 = vunpack.c.l.b16 %v3548
      %v3647 = vunpack.c.l.b16 %v3549
      %v3648 = vunpack.c.l.b16 %v3550
      %v3649 = vunpack.c.l.b16 %v3551
      %v3650 = vunpack.c.l.b16 %v3552
      %v3651 = vunpack.c.l.b16 %v3553
      %v3652 = vunpack.c.l.b16 %v3554
      %v3653 = vunpack.c.l.b16 %v3555
      %v3654 = vunpack.c.l.b16 %v3556
      %v3655 = vpack.c.b16 %v3608, %v3607
      %v3656 = vpack.c.b16 %v3610, %v3609
      %v3657 = vpack.c.b16 %v3612, %v3611
      %v3658 = vpack.c.b16 %v3614, %v3613
      %v3659 = vpack.c.b16 %v3616, %v3615
      %v3660 = vpack.c.b16 %v3618, %v3617
      %v3661 = vpack.c.b16 %v3620, %v3619
      %v3662 = vpack.c.b16 %v3622, %v3621
      %v3663 = vpack.c.b16 %v3624, %v3623
      %v3664 = vpack.c.b16 %v3626, %v3625
      %v3665 = vpack.c.b16 %v3628, %v3627
      %v3666 = vpack.c.b16 %v3630, %v3629
      %v3667 = vpack.c.b16 %v3632, %v3631
      %v3668 = vpack.c.b16 %v3634, %v3633
      %v3669 = vpack.c.b16 %v3636, %v3635
      %v3670 = vpack.c.b16 %v3638, %v3637
      %v3671 = vpack.c.b16 %v3640, %v3639
      %v3672 = vpack.c.b16 %v3642, %v3641
      %v3673 = vpack.c.b16 %v3644, %v3643
      %v3674 = vpack.c.b16 %v3646, %v3645
      %v3675 = vpack.c.b16 %v3648, %v3647
      %v3676 = vpack.c.b16 %v3650, %v3649
      %v3677 = vpack.c.b16 %v3652, %v3651
      %v3678 = vpack.c.b16 %v3654, %v3653
      %v3680 = vsel %vm1014, %v3655, 0
      %v3683 = vsel %vm1014, %v3656, 0
      %v3686 = vsel %vm1014, %v3657, 0
      %v3689 = vsel %vm1014, %v3658, 0
      %v3692 = vsel %vm1014, %v3659, 0
      %v3695 = vsel %vm1014, %v3660, 0
      %v3698 = vsel %vm1014, %v3661, 0
      %v3701 = vsel %vm1014, %v3662, 0
      %v3704 = vsel %vm1014, %v3663, 0
      %v3707 = vsel %vm1014, %v3664, 0
      %v3710 = vsel %vm1014, %v3665, 0
      %v3713 = vsel %vm1014, %v3666, 0
      %v3716 = vsel %vm1014, %v3667, 0
      %v3719 = vsel %vm1014, %v3668, 0
      %v3722 = vsel %vm1014, %v3669, 0
      %v3725 = vsel %vm1014, %v3670, 0
      %v3728 = vsel %vm1014, %v3671, 0
      %v3731 = vsel %vm1014, %v3672, 0
      %v3734 = vsel %vm1014, %v3673, 0
      %v3737 = vsel %vm1014, %v3674, 0
      %v3740 = vsel %vm1014, %v3675, 0
      %v3743 = vsel %vm1014, %v3676, 0
      %v3746 = vsel %vm1014, %v3677, 0
      %v3749 = vsel %vm1014, %v3678, 0
      %v3752 = vsel %vm1087, %v3558, 0
      %3754 = vmatprep.subr.bf16.mxu0 0
      %3755 = vmatpush1.bf16.msra.mxu0 %v3752
      %3756 = vmatprep.subr.bf16.mxu0 0
      %3757 = vmatpush1.bf16.msra.mxu0 0
      %3758 = vmatprep.subr.bf16.mxu0 0
      %3759 = vmatpush1.bf16.msra.mxu0 0
      %3760 = vmatprep.subr.bf16.mxu0 0
      %3761 = vmatpush1.bf16.msra.mxu0 0
      %3762 = vmatprep.subr.bf16.mxu0 0
      %3763 = vmatpush1.bf16.msra.mxu0 0
      %3764 = vmatprep.subr.bf16.mxu0 0
      %3765 = vmatpush1.bf16.msra.mxu0 0
      %3766 = vmatprep.subr.bf16.mxu0 0
      %3767 = vmatpush1.bf16.msra.mxu0 0
      %3768 = vmatprep.subr.bf16.mxu0 0
      %3769 = vmatpush1.bf16.msra.mxu0 0
      %3770 = vmatprep.subr.bf16.mxu0 0
      %3771 = vmatpush1.bf16.msra.mxu0 0
      %3772 = vmatprep.subr.bf16.mxu0 0
      %3773 = vmatpush1.bf16.msra.mxu0 0
      %3774 = vmatprep.subr.bf16.mxu0 0
      %3775 = vmatpush1.bf16.msra.mxu0 0
      %3776 = vmatprep.subr.bf16.mxu0 0
      %3777 = vmatpush1.bf16.msra.mxu0 0
      %3778 = vmatprep.subr.bf16.mxu0 0
      %3779 = vmatpush1.bf16.msra.mxu0 0
      %3780 = vmatprep.subr.bf16.mxu0 0
      %3781 = vmatpush1.bf16.msra.mxu0 0
      %3782 = vmatprep.subr.bf16.mxu0 0
      %3783 = vmatpush1.bf16.msra.mxu0 0
      %3784 = vmatprep.subr.bf16.mxu0 0
      %3785 = vmatpush1.bf16.msra.mxu0 0
      %3786 = vmatprep.mubr.bf16.mxu0 0
      %3787 = vmatmul.mubr.bf16.gmra.mrb[0].mxu0 %v3680
      %v3788 = vpop.f32.mrb[0].mxu0
      %v3789 = vadd.f32 0.0, %v3788
      %v3790 = vpop.f32.mrb[0].mxu0
      %v3791 = vpop.f32.mrb[0].mxu0
      %v3792 = vadd.f32 0.0, %v3791
      %v3793 = vpop.f32.mrb[0].mxu0
      %3794 = vmatprep.mubr.bf16.mxu0 0
      %3795 = vmatmul.mubr.bf16.gmra.mrb[0].mxu0 %v3683
      %v3796 = vpop.f32.mrb[0].mxu0
      %v3797 = vpop.f32.mrb[0].mxu0
      %v3798 = vpop.f32.mrb[0].mxu0
      %v3799 = vadd.f32 0.0, %v3798
      %v3800 = vpop.f32.mrb[0].mxu0
      %3801 = vmatprep.mubr.bf16.mxu0 0
      %3802 = vmatmul.mubr.bf16.gmra.mrb[0].mxu0 %v3686
      %v3803 = vpop.f32.mrb[0].mxu0
      %v3804 = vadd.f32 0.0, %v3803
      %v3805 = vpop.f32.mrb[0].mxu0
      %v3806 = vpop.f32.mrb[0].mxu0
      %v3807 = vpop.f32.mrb[0].mxu0
      %3808 = vmatprep.mubr.bf16.mxu0 0
      %3809 = vmatmul.mubr.bf16.gmra.mrb[0].mxu0 %v3689
      %v3810 = vpop.f32.mrb[0].mxu0
      %v3811 = vadd.f32 0.0, %v3810
      %v3812 = vpop.f32.mrb[0].mxu0
      %v3813 = vpop.f32.mrb[0].mxu0
      %v3814 = vadd.f32 0.0, %v3813
      %v3815 = vpop.f32.mrb[0].mxu0
      %3816 = vmatprep.mubr.bf16.mxu0 0
      %3817 = vmatmul.mubr.bf16.gmra.mrb[0].mxu0 %v3692
      %v3818 = vpop.f32.mrb[0].mxu0
      %v3819 = vpop.f32.mrb[0].mxu0
      %v3820 = vpop.f32.mrb[0].mxu0
      %v3821 = vadd.f32 0.0, %v3820
      %v3822 = vpop.f32.mrb[0].mxu0
      %3823 = vmatprep.mubr.bf16.mxu0 0
      %3824 = vmatmul.mubr.bf16.gmra.mrb[0].mxu0 %v3695
      %v3825 = vpop.f32.mrb[0].mxu0
      %v3826 = vadd.f32 0.0, %v3825
      %v3827 = vpop.f32.mrb[0].mxu0
      %v3828 = vpop.f32.mrb[0].mxu0
      %v3829 = vpop.f32.mrb[0].mxu0
      %3830 = vmatprep.mubr.bf16.mxu0 0
      %3831 = vmatmul.mubr.bf16.gmra.mrb[0].mxu0 %v3698
      %v3832 = vpop.f32.mrb[0].mxu0
      %v3833 = vadd.f32 0.0, %v3832
      %v3834 = vpop.f32.mrb[0].mxu0
      %v3835 = vpop.f32.mrb[0].mxu0
      %v3836 = vadd.f32 0.0, %v3835
      %v3837 = vpop.f32.mrb[0].mxu0
      %3838 = vmatprep.mubr.bf16.mxu0 0
      %3839 = vmatmul.mubr.bf16.gmra.mrb[0].mxu0 %v3701
      %v3840 = vpop.f32.mrb[0].mxu0
      %v3841 = vpop.f32.mrb[0].mxu0
      %v3842 = vpop.f32.mrb[0].mxu0
      %v3843 = vadd.f32 0.0, %v3842
      %v3844 = vpop.f32.mrb[0].mxu0
      %3845 = vmatprep.mubr.bf16.mxu0 0
      %3846 = vmatmul.mubr.bf16.gmra.mrb[0].mxu0 %v3704
      %v3847 = vpop.f32.mrb[0].mxu0
      %v3848 = vadd.f32 0.0, %v3847
      %v3849 = vpop.f32.mrb[0].mxu0
      %v3850 = vpop.f32.mrb[0].mxu0
      %v3851 = vpop.f32.mrb[0].mxu0
      %3852 = vmatprep.mubr.bf16.mxu0 0
      %3853 = vmatmul.mubr.bf16.gmra.mrb[0].mxu0 %v3707
      %v3854 = vpop.f32.mrb[0].mxu0
      %v3855 = vadd.f32 0.0, %v3854
      %v3856 = vpop.f32.mrb[0].mxu0
      %v3857 = vpop.f32.mrb[0].mxu0
      %v3858 = vadd.f32 0.0, %v3857
      %v3859 = vpop.f32.mrb[0].mxu0
      %3860 = vmatprep.mubr.bf16.mxu0 0
      %3861 = vmatmul.mubr.bf16.gmra.mrb[0].mxu0 %v3710
      %v3862 = vpop.f32.mrb[0].mxu0
      %v3863 = vpop.f32.mrb[0].mxu0
      %v3864 = vpop.f32.mrb[0].mxu0
      %v3865 = vadd.f32 0.0, %v3864
      %v3866 = vpop.f32.mrb[0].mxu0
      %3867 = vmatprep.mubr.bf16.mxu0 0
      %3868 = vmatmul.mubr.bf16.gmra.mrb[0].mxu0 %v3713
      %v3869 = vpop.f32.mrb[0].mxu0
      %v3870 = vadd.f32 0.0, %v3869
      %v3871 = vpop.f32.mrb[0].mxu0
      %v3872 = vpop.f32.mrb[0].mxu0
      %v3873 = vpop.f32.mrb[0].mxu0
      %3874 = vmatprep.mubr.bf16.mxu0 0
      %3875 = vmatmul.mubr.bf16.gmra.mrb[0].mxu0 %v3716
      %v3876 = vpop.f32.mrb[0].mxu0
      %v3877 = vadd.f32 0.0, %v3876
      %v3878 = vpop.f32.mrb[0].mxu0
      %v3879 = vpop.f32.mrb[0].mxu0
      %v3880 = vadd.f32 0.0, %v3879
      %v3881 = vpop.f32.mrb[0].mxu0
      %3882 = vmatprep.mubr.bf16.mxu0 0
      %3883 = vmatmul.mubr.bf16.gmra.mrb[0].mxu0 %v3719
      %v3884 = vpop.f32.mrb[0].mxu0
      %v3885 = vpop.f32.mrb[0].mxu0
      %v3886 = vpop.f32.mrb[0].mxu0
      %v3887 = vadd.f32 0.0, %v3886
      %v3888 = vpop.f32.mrb[0].mxu0
      %3889 = vmatprep.mubr.bf16.mxu0 0
      %3890 = vmatmul.mubr.bf16.gmra.mrb[0].mxu0 %v3722
      %v3891 = vpop.f32.mrb[0].mxu0
      %v3892 = vadd.f32 0.0, %v3891
      %v3893 = vpop.f32.mrb[0].mxu0
      %v3894 = vpop.f32.mrb[0].mxu0
      %v3895 = vpop.f32.mrb[0].mxu0
      %3896 = vmatprep.mubr.bf16.mxu0 0
      %3897 = vmatmul.mubr.bf16.gmra.mrb[0].mxu0 %v3725
      %v3898 = vpop.f32.mrb[0].mxu0
      %v3899 = vadd.f32 0.0, %v3898
      %v3900 = vpop.f32.mrb[0].mxu0
      %v3901 = vpop.f32.mrb[0].mxu0
      %v3902 = vadd.f32 0.0, %v3901
      %v3903 = vpop.f32.mrb[0].mxu0
      %3904 = vmatprep.mubr.bf16.mxu0 0
      %3905 = vmatmul.mubr.bf16.gmra.mrb[0].mxu0 %v3728
      %v3906 = vpop.f32.mrb[0].mxu0
      %v3907 = vpop.f32.mrb[0].mxu0
      %v3908 = vpop.f32.mrb[0].mxu0
      %v3909 = vadd.f32 0.0, %v3908
      %v3910 = vpop.f32.mrb[0].mxu0
      %3911 = vmatprep.mubr.bf16.mxu0 0
      %3912 = vmatmul.mubr.bf16.gmra.mrb[0].mxu0 %v3731
      %v3913 = vpop.f32.mrb[0].mxu0
      %v3914 = vadd.f32 0.0, %v3913
      %v3915 = vpop.f32.mrb[0].mxu0
      %v3916 = vpop.f32.mrb[0].mxu0
      %v3917 = vpop.f32.mrb[0].mxu0
      %3918 = vmatprep.mubr.bf16.mxu0 0
      %3919 = vmatmul.mubr.bf16.gmra.mrb[0].mxu0 %v3734
      %v3920 = vpop.f32.mrb[0].mxu0
      %v3921 = vadd.f32 0.0, %v3920
      %v3922 = vpop.f32.mrb[0].mxu0
      %v3923 = vpop.f32.mrb[0].mxu0
      %v3924 = vadd.f32 0.0, %v3923
      %v3925 = vpop.f32.mrb[0].mxu0
      %3926 = vmatprep.mubr.bf16.mxu0 0
      %3927 = vmatmul.mubr.bf16.gmra.mrb[0].mxu0 %v3737
      %v3928 = vpop.f32.mrb[0].mxu0
      %v3929 = vpop.f32.mrb[0].mxu0
      %v3930 = vpop.f32.mrb[0].mxu0
      %v3931 = vadd.f32 0.0, %v3930
      %v3932 = vpop.f32.mrb[0].mxu0
      %3933 = vmatprep.mubr.bf16.mxu0 0
      %3934 = vmatmul.mubr.bf16.gmra.mrb[0].mxu0 %v3740
      %v3935 = vpop.f32.mrb[0].mxu0
      %v3936 = vadd.f32 0.0, %v3935
      %v3937 = vpop.f32.mrb[0].mxu0
      %v3938 = vpop.f32.mrb[0].mxu0
      %v3939 = vpop.f32.mrb[0].mxu0
      %3940 = vmatprep.mubr.bf16.mxu0 0
      %3941 = vmatmul.mubr.bf16.gmra.mrb[0].mxu0 %v3743
      %v3942 = vpop.f32.mrb[0].mxu0
      %v3943 = vadd.f32 0.0, %v3942
      %v3944 = vpop.f32.mrb[0].mxu0
      %v3945 = vpop.f32.mrb[0].mxu0
      %v3946 = vadd.f32 0.0, %v3945
      %v3947 = vpop.f32.mrb[0].mxu0
      %3948 = vmatprep.mubr.bf16.mxu0 0
      %3949 = vmatmul.mubr.bf16.gmra.mrb[0].mxu0 %v3746
      %v3950 = vpop.f32.mrb[0].mxu0
      %v3951 = vpop.f32.mrb[0].mxu0
      %v3952 = vpop.f32.mrb[0].mxu0
      %v3953 = vadd.f32 0.0, %v3952
      %v3954 = vpop.f32.mrb[0].mxu0
      %3955 = vmatprep.mubr.bf16.mxu0 0
      %3956 = vmatmul.mubr.bf16.gmra.mrb[0].mxu0 %v3749
      %v3957 = vpop.f32.mrb[0].mxu0
      %v3958 = vadd.f32 0.0, %v3957
      %v3959 = vpop.f32.mrb[0].mxu0
      %v3960 = vpop.f32.mrb[0].mxu0
      %v3961 = vpop.f32.mrb[0].mxu0
      %3962 = vdwg.mxu0
      %v3963 = vadd.f32 %v3476, %v3789
      %v3964 = vadd.f32 %v3477, %v3792
      %v3965 = vadd.f32 %v3478, %v3799
      %v3966 = vadd.f32 %v3479, %v3804
      %v3967 = vadd.f32 %v3480, %v3811
      %v3968 = vadd.f32 %v3481, %v3814
      %v3969 = vadd.f32 %v3482, %v3821
      %v3970 = vadd.f32 %v3483, %v3826
      %v3971 = vadd.f32 %v3484, %v3833
      %v3972 = vadd.f32 %v3485, %v3836
      %v3973 = vadd.f32 %v3486, %v3843
      %v3974 = vadd.f32 %v3487, %v3848
      %v3975 = vadd.f32 %v3488, %v3855
      %v3976 = vadd.f32 %v3489, %v3858
      %v3977 = vadd.f32 %v3490, %v3865
      %v3978 = vadd.f32 %v3491, %v3870
      %v3979 = vadd.f32 %v3492, %v3877
      %v3980 = vadd.f32 %v3493, %v3880
      %v3981 = vadd.f32 %v3494, %v3887
      %v3982 = vadd.f32 %v3495, %v3892
      %v3983 = vadd.f32 %v3496, %v3899
      %v3984 = vadd.f32 %v3497, %v3902
      %v3985 = vadd.f32 %v3498, %v3909
      %v3986 = vadd.f32 %v3499, %v3914
      %v3987 = vadd.f32 %v3500, %v3921
      %v3988 = vadd.f32 %v3501, %v3924
      %v3989 = vadd.f32 %v3502, %v3931
      %v3990 = vadd.f32 %v3503, %v3936
      %v3991 = vadd.f32 %v3504, %v3943
      %v3992 = vadd.f32 %v3505, %v3946
      %v3993 = vadd.f32 %v3506, %v3953
      %v3994 = vadd.f32 %v3507, %v3958
      %s3995 = scalar_lea.vmem %s1, 14
      %v3996 = vld [vmem:[%s3995] sm:$0x3]
      %v3998 = vsel %vm1087, %v3996, 0
      %4000 = vmatprep.subr.bf16.mxu0 0
      %4001 = vmatpush1.bf16.msra.mxu0 %v3998
      %4002 = vmatprep.subr.bf16.mxu0 0
      %4003 = vmatpush1.bf16.msra.mxu0 0
      %4004 = vmatprep.subr.bf16.mxu0 0
      %4005 = vmatpush1.bf16.msra.mxu0 0
      %4006 = vmatprep.subr.bf16.mxu0 0
      %4007 = vmatpush1.bf16.msra.mxu0 0
      %4008 = vmatprep.subr.bf16.mxu0 0
      %4009 = vmatpush1.bf16.msra.mxu0 0
      %4010 = vmatprep.subr.bf16.mxu0 0
      %4011 = vmatpush1.bf16.msra.mxu0 0
      %4012 = vmatprep.subr.bf16.mxu0 0
      %4013 = vmatpush1.bf16.msra.mxu0 0
      %4014 = vmatprep.subr.bf16.mxu0 0
      %4015 = vmatpush1.bf16.msra.mxu0 0
      %4016 = vmatprep.subr.bf16.mxu0 0
      %4017 = vmatpush1.bf16.msra.mxu0 0
      %4018 = vmatprep.subr.bf16.mxu0 0
      %4019 = vmatpush1.bf16.msra.mxu0 0
      %4020 = vmatprep.subr.bf16.mxu0 0
      %4021 = vmatpush1.bf16.msra.mxu0 0
      %4022 = vmatprep.subr.bf16.mxu0 0
      %4023 = vmatpush1.bf16.msra.mxu0 0
      %4024 = vmatprep.subr.bf16.mxu0 0
      %4025 = vmatpush1.bf16.msra.mxu0 0
      %4026 = vmatprep.subr.bf16.mxu0 0
      %4027 = vmatpush1.bf16.msra.mxu0 0
      %4028 = vmatprep.subr.bf16.mxu0 0
      %4029 = vmatpush1.bf16.msra.mxu0 0
      %4030 = vmatprep.subr.bf16.mxu0 0
      %4031 = vmatpush1.bf16.msra.mxu0 0
      %4032 = vmatprep.mubr.bf16.mxu0 0
      %4033 = vmatmul.mubr.bf16.gmra.mrb[0].mxu0 %v3680
      %v4034 = vpop.f32.mrb[0].mxu0
      %v4035 = vadd.f32 0.0, %v4034
      %v4036 = vpop.f32.mrb[0].mxu0
      %v4037 = vpop.f32.mrb[0].mxu0
      %v4038 = vadd.f32 0.0, %v4037
      %v4039 = vpop.f32.mrb[0].mxu0
      %4040 = vmatprep.mubr.bf16.mxu0 0
      %4041 = vmatmul.mubr.bf16.gmra.mrb[0].mxu0 %v3683
      %v4042 = vpop.f32.mrb[0].mxu0
      %v4043 = vadd.f32 0.0, %v4042
      %v4044 = vpop.f32.mrb[0].mxu0
      %v4045 = vpop.f32.mrb[0].mxu0
      %v4046 = vadd.f32 0.0, %v4045
      %v4047 = vpop.f32.mrb[0].mxu0
      %4048 = vmatprep.mubr.bf16.mxu0 0
      %4049 = vmatmul.mubr.bf16.gmra.mrb[0].mxu0 %v3686
      %v4050 = vpop.f32.mrb[0].mxu0
      %v4051 = vadd.f32 0.0, %v4050
      %v4052 = vpop.f32.mrb[0].mxu0
      %v4053 = vpop.f32.mrb[0].mxu0
      %v4054 = vadd.f32 0.0, %v4053
      %v4055 = vpop.f32.mrb[0].mxu0
      %4056 = vmatprep.mubr.bf16.mxu0 0
      %4057 = vmatmul.mubr.bf16.gmra.mrb[0].mxu0 %v3689
      %v4058 = vpop.f32.mrb[0].mxu0
      %v4059 = vadd.f32 0.0, %v4058
      %v4060 = vpop.f32.mrb[0].mxu0
      %v4061 = vpop.f32.mrb[0].mxu0
      %v4062 = vadd.f32 0.0, %v4061
      %v4063 = vpop.f32.mrb[0].mxu0
      %4064 = vmatprep.mubr.bf16.mxu0 0
      %4065 = vmatmul.mubr.bf16.gmra.mrb[0].mxu0 %v3692
      %v4066 = vpop.f32.mrb[0].mxu0
      %v4067 = vadd.f32 0.0, %v4066
      %v4068 = vpop.f32.mrb[0].mxu0
      %v4069 = vpop.f32.mrb[0].mxu0
      %v4070 = vadd.f32 0.0, %v4069
      %v4071 = vpop.f32.mrb[0].mxu0
      %4072 = vmatprep.mubr.bf16.mxu0 0
      %4073 = vmatmul.mubr.bf16.gmra.mrb[0].mxu0 %v3695
      %v4074 = vpop.f32.mrb[0].mxu0
      %v4075 = vadd.f32 0.0, %v4074
      %v4076 = vpop.f32.mrb[0].mxu0
      %v4077 = vpop.f32.mrb[0].mxu0
      %v4078 = vadd.f32 0.0, %v4077
      %v4079 = vpop.f32.mrb[0].mxu0
      %4080 = vmatprep.mubr.bf16.mxu0 0
      %4081 = vmatmul.mubr.bf16.gmra.mrb[0].mxu0 %v3698
      %v4082 = vpop.f32.mrb[0].mxu0
      %v4083 = vadd.f32 0.0, %v4082
      %v4084 = vpop.f32.mrb[0].mxu0
      %v4085 = vpop.f32.mrb[0].mxu0
      %v4086 = vadd.f32 0.0, %v4085
      %v4087 = vpop.f32.mrb[0].mxu0
      %4088 = vmatprep.mubr.bf16.mxu0 0
      %4089 = vmatmul.mubr.bf16.gmra.mrb[0].mxu0 %v3701
      %v4090 = vpop.f32.mrb[0].mxu0
      %v4091 = vadd.f32 0.0, %v4090
      %v4092 = vpop.f32.mrb[0].mxu0
      %v4093 = vpop.f32.mrb[0].mxu0
      %v4094 = vadd.f32 0.0, %v4093
      %v4095 = vpop.f32.mrb[0].mxu0
      %4096 = vmatprep.mubr.bf16.mxu0 0
      %4097 = vmatmul.mubr.bf16.gmra.mrb[0].mxu0 %v3704
      %v4098 = vpop.f32.mrb[0].mxu0
      %v4099 = vadd.f32 0.0, %v4098
      %v4100 = vpop.f32.mrb[0].mxu0
      %v4101 = vpop.f32.mrb[0].mxu0
      %v4102 = vadd.f32 0.0, %v4101
      %v4103 = vpop.f32.mrb[0].mxu0
      %4104 = vmatprep.mubr.bf16.mxu0 0
      %4105 = vmatmul.mubr.bf16.gmra.mrb[0].mxu0 %v3707
      %v4106 = vpop.f32.mrb[0].mxu0
      %v4107 = vadd.f32 0.0, %v4106
      %v4108 = vpop.f32.mrb[0].mxu0
      %v4109 = vpop.f32.mrb[0].mxu0
      %v4110 = vadd.f32 0.0, %v4109
      %v4111 = vpop.f32.mrb[0].mxu0
      %4112 = vmatprep.mubr.bf16.mxu0 0
      %4113 = vmatmul.mubr.bf16.gmra.mrb[0].mxu0 %v3710
      %v4114 = vpop.f32.mrb[0].mxu0
      %v4115 = vadd.f32 0.0, %v4114
      %v4116 = vpop.f32.mrb[0].mxu0
      %v4117 = vpop.f32.mrb[0].mxu0
      %v4118 = vadd.f32 0.0, %v4117
      %v4119 = vpop.f32.mrb[0].mxu0
      %4120 = vmatprep.mubr.bf16.mxu0 0
      %4121 = vmatmul.mubr.bf16.gmra.mrb[0].mxu0 %v3713
      %v4122 = vpop.f32.mrb[0].mxu0
      %v4123 = vadd.f32 0.0, %v4122
      %v4124 = vpop.f32.mrb[0].mxu0
      %v4125 = vpop.f32.mrb[0].mxu0
      %v4126 = vadd.f32 0.0, %v4125
      %v4127 = vpop.f32.mrb[0].mxu0
      %4128 = vmatprep.mubr.bf16.mxu0 0
      %4129 = vmatmul.mubr.bf16.gmra.mrb[0].mxu0 %v3716
      %v4130 = vpop.f32.mrb[0].mxu0
      %v4131 = vadd.f32 0.0, %v4130
      %v4132 = vpop.f32.mrb[0].mxu0
      %v4133 = vpop.f32.mrb[0].mxu0
      %v4134 = vadd.f32 0.0, %v4133
      %v4135 = vpop.f32.mrb[0].mxu0
      %4136 = vmatprep.mubr.bf16.mxu0 0
      %4137 = vmatmul.mubr.bf16.gmra.mrb[0].mxu0 %v3719
      %v4138 = vpop.f32.mrb[0].mxu0
      %v4139 = vadd.f32 0.0, %v4138
      %v4140 = vpop.f32.mrb[0].mxu0
      %v4141 = vpop.f32.mrb[0].mxu0
      %v4142 = vadd.f32 0.0, %v4141
      %v4143 = vpop.f32.mrb[0].mxu0
      %4144 = vmatprep.mubr.bf16.mxu0 0
      %4145 = vmatmul.mubr.bf16.gmra.mrb[0].mxu0 %v3722
      %v4146 = vpop.f32.mrb[0].mxu0
      %v4147 = vadd.f32 0.0, %v4146
      %v4148 = vpop.f32.mrb[0].mxu0
      %v4149 = vpop.f32.mrb[0].mxu0
      %v4150 = vadd.f32 0.0, %v4149
      %v4151 = vpop.f32.mrb[0].mxu0
      %4152 = vmatprep.mubr.bf16.mxu0 0
      %4153 = vmatmul.mubr.bf16.gmra.mrb[0].mxu0 %v3725
      %v4154 = vpop.f32.mrb[0].mxu0
      %v4155 = vadd.f32 0.0, %v4154
      %v4156 = vpop.f32.mrb[0].mxu0
      %v4157 = vpop.f32.mrb[0].mxu0
      %v4158 = vadd.f32 0.0, %v4157
      %v4159 = vpop.f32.mrb[0].mxu0
      %4160 = vmatprep.mubr.bf16.mxu0 0
      %4161 = vmatmul.mubr.bf16.gmra.mrb[0].mxu0 %v3728
      %v4162 = vpop.f32.mrb[0].mxu0
      %v4163 = vadd.f32 0.0, %v4162
      %v4164 = vpop.f32.mrb[0].mxu0
      %v4165 = vpop.f32.mrb[0].mxu0
      %v4166 = vadd.f32 0.0, %v4165
      %v4167 = vpop.f32.mrb[0].mxu0
      %4168 = vmatprep.mubr.bf16.mxu0 0
      %4169 = vmatmul.mubr.bf16.gmra.mrb[0].mxu0 %v3731
      %v4170 = vpop.f32.mrb[0].mxu0
      %v4171 = vadd.f32 0.0, %v4170
      %v4172 = vpop.f32.mrb[0].mxu0
      %v4173 = vpop.f32.mrb[0].mxu0
      %v4174 = vadd.f32 0.0, %v4173
      %v4175 = vpop.f32.mrb[0].mxu0
      %4176 = vmatprep.mubr.bf16.mxu0 0
      %4177 = vmatmul.mubr.bf16.gmra.mrb[0].mxu0 %v3734
      %v4178 = vpop.f32.mrb[0].mxu0
      %v4179 = vadd.f32 0.0, %v4178
      %v4180 = vpop.f32.mrb[0].mxu0
      %v4181 = vpop.f32.mrb[0].mxu0
      %v4182 = vadd.f32 0.0, %v4181
      %v4183 = vpop.f32.mrb[0].mxu0
      %4184 = vmatprep.mubr.bf16.mxu0 0
      %4185 = vmatmul.mubr.bf16.gmra.mrb[0].mxu0 %v3737
      %v4186 = vpop.f32.mrb[0].mxu0
      %v4187 = vadd.f32 0.0, %v4186
      %v4188 = vpop.f32.mrb[0].mxu0
      %v4189 = vpop.f32.mrb[0].mxu0
      %v4190 = vadd.f32 0.0, %v4189
      %v4191 = vpop.f32.mrb[0].mxu0
      %4192 = vmatprep.mubr.bf16.mxu0 0
      %4193 = vmatmul.mubr.bf16.gmra.mrb[0].mxu0 %v3740
      %v4194 = vpop.f32.mrb[0].mxu0
      %v4195 = vadd.f32 0.0, %v4194
      %v4196 = vpop.f32.mrb[0].mxu0
      %v4197 = vpop.f32.mrb[0].mxu0
      %v4198 = vadd.f32 0.0, %v4197
      %v4199 = vpop.f32.mrb[0].mxu0
      %4200 = vmatprep.mubr.bf16.mxu0 0
      %4201 = vmatmul.mubr.bf16.gmra.mrb[0].mxu0 %v3743
      %v4202 = vpop.f32.mrb[0].mxu0
      %v4203 = vadd.f32 0.0, %v4202
      %v4204 = vpop.f32.mrb[0].mxu0
      %v4205 = vpop.f32.mrb[0].mxu0
      %v4206 = vadd.f32 0.0, %v4205
      %v4207 = vpop.f32.mrb[0].mxu0
      %4208 = vmatprep.mubr.bf16.mxu0 0
      %4209 = vmatmul.mubr.bf16.gmra.mrb[0].mxu0 %v3746
      %v4210 = vpop.f32.mrb[0].mxu0
      %v4211 = vadd.f32 0.0, %v4210
      %v4212 = vpop.f32.mrb[0].mxu0
      %v4213 = vpop.f32.mrb[0].mxu0
      %v4214 = vadd.f32 0.0, %v4213
      %v4215 = vpop.f32.mrb[0].mxu0
      %4216 = vmatprep.mubr.bf16.mxu0 0
      %4217 = vmatmul.mubr.bf16.gmra.mrb[0].mxu0 %v3749
      %v4218 = vpop.f32.mrb[0].mxu0
      %v4219 = vadd.f32 0.0, %v4218
      %v4220 = vpop.f32.mrb[0].mxu0
      %v4221 = vpop.f32.mrb[0].mxu0
      %v4222 = vadd.f32 0.0, %v4221
      %v4223 = vpop.f32.mrb[0].mxu0
      %4224 = vdwg.mxu0
      %v4273 = vrot.slane %v4035, 1
      %v4274 = vrot.slane %v4038, 1
      %v4275 = vsel %vm1610, %v4273, %v4274
      %v4276 = vrot.slane %v4043, 1
      %v4277 = vsel %vm1610, %v4274, %v4276
      %v4278 = vrot.slane %v4046, 1
      %v4279 = vrot.slane %v4051, 1
      %v4280 = vsel %vm1610, %v4278, %v4279
      %v4281 = vrot.slane %v4054, 1
      %v4282 = vsel %vm1610, %v4279, %v4281
      %v4283 = vrot.slane %v4059, 1
      %v4284 = vrot.slane %v4062, 1
      %v4285 = vsel %vm1610, %v4283, %v4284
      %v4286 = vrot.slane %v4067, 1
      %v4287 = vsel %vm1610, %v4284, %v4286
      %v4288 = vrot.slane %v4070, 1
      %v4289 = vrot.slane %v4075, 1
      %v4290 = vsel %vm1610, %v4288, %v4289
      %v4291 = vrot.slane %v4078, 1
      %v4292 = vsel %vm1610, %v4289, %v4291
      %v4293 = vrot.slane %v4083, 1
      %v4294 = vrot.slane %v4086, 1
      %v4295 = vsel %vm1610, %v4293, %v4294
      %v4296 = vrot.slane %v4091, 1
      %v4297 = vsel %vm1610, %v4294, %v4296
      %v4298 = vrot.slane %v4094, 1
      %v4299 = vrot.slane %v4099, 1
      %v4300 = vsel %vm1610, %v4298, %v4299
      %v4301 = vrot.slane %v4102, 1
      %v4302 = vsel %vm1610, %v4299, %v4301
      %v4303 = vrot.slane %v4107, 1
      %v4304 = vrot.slane %v4110, 1
      %v4305 = vsel %vm1610, %v4303, %v4304
      %v4306 = vrot.slane %v4115, 1
      %v4307 = vsel %vm1610, %v4304, %v4306
      %v4308 = vrot.slane %v4118, 1
      %v4309 = vrot.slane %v4123, 1
      %v4310 = vsel %vm1610, %v4308, %v4309
      %v4311 = vrot.slane %v4126, 1
      %v4312 = vsel %vm1610, %v4309, %v4311
      %v4313 = vrot.slane %v4131, 1
      %v4314 = vrot.slane %v4134, 1
      %v4315 = vsel %vm1610, %v4313, %v4314
      %v4316 = vrot.slane %v4139, 1
      %v4317 = vsel %vm1610, %v4314, %v4316
      %v4318 = vrot.slane %v4142, 1
      %v4319 = vrot.slane %v4147, 1
      %v4320 = vsel %vm1610, %v4318, %v4319
      %v4321 = vrot.slane %v4150, 1
      %v4322 = vsel %vm1610, %v4319, %v4321
      %v4323 = vrot.slane %v4155, 1
      %v4324 = vrot.slane %v4158, 1
      %v4325 = vsel %vm1610, %v4323, %v4324
      %v4326 = vrot.slane %v4163, 1
      %v4327 = vsel %vm1610, %v4324, %v4326
      %v4328 = vrot.slane %v4166, 1
      %v4329 = vrot.slane %v4171, 1
      %v4330 = vsel %vm1610, %v4328, %v4329
      %v4331 = vrot.slane %v4174, 1
      %v4332 = vsel %vm1610, %v4329, %v4331
      %v4333 = vrot.slane %v4179, 1
      %v4334 = vrot.slane %v4182, 1
      %v4335 = vsel %vm1610, %v4333, %v4334
      %v4336 = vrot.slane %v4187, 1
      %v4337 = vsel %vm1610, %v4334, %v4336
      %v4338 = vrot.slane %v4190, 1
      %v4339 = vrot.slane %v4195, 1
      %v4340 = vsel %vm1610, %v4338, %v4339
      %v4341 = vrot.slane %v4198, 1
      %v4342 = vsel %vm1610, %v4339, %v4341
      %v4343 = vrot.slane %v4203, 1
      %v4344 = vrot.slane %v4206, 1
      %v4345 = vsel %vm1610, %v4343, %v4344
      %v4346 = vrot.slane %v4211, 1
      %v4347 = vsel %vm1610, %v4344, %v4346
      %v4348 = vrot.slane %v4214, 1
      %v4349 = vrot.slane %v4219, 1
      %v4350 = vsel %vm1610, %v4348, %v4349
      %v4351 = vrot.slane %v4222, 1
      %v4352 = vsel %vm1610, %v4349, %v4351
      %v4385 = vadd.f32 %v3963, %v4275
      %v4386 = vadd.f32 %v3964, %v4277
      %v4387 = vadd.f32 %v3965, %v4280
      %v4388 = vadd.f32 %v3966, %v4282
      %v4389 = vadd.f32 %v3967, %v4285
      %v4390 = vadd.f32 %v3968, %v4287
      %v4391 = vadd.f32 %v3969, %v4290
      %v4392 = vadd.f32 %v3970, %v4292
      %v4393 = vadd.f32 %v3971, %v4295
      %v4394 = vadd.f32 %v3972, %v4297
      %v4395 = vadd.f32 %v3973, %v4300
      %v4396 = vadd.f32 %v3974, %v4302
      %v4397 = vadd.f32 %v3975, %v4305
      %v4398 = vadd.f32 %v3976, %v4307
      %v4399 = vadd.f32 %v3977, %v4310
      %v4400 = vadd.f32 %v3978, %v4312
      %v4401 = vadd.f32 %v3979, %v4315
      %v4402 = vadd.f32 %v3980, %v4317
      %v4403 = vadd.f32 %v3981, %v4320
      %v4404 = vadd.f32 %v3982, %v4322
      %v4405 = vadd.f32 %v3983, %v4325
      %v4406 = vadd.f32 %v3984, %v4327
      %v4407 = vadd.f32 %v3985, %v4330
      %v4408 = vadd.f32 %v3986, %v4332
      %v4409 = vadd.f32 %v3987, %v4335
      %v4410 = vadd.f32 %v3988, %v4337
      %v4411 = vadd.f32 %v3989, %v4340
      %v4412 = vadd.f32 %v3990, %v4342
      %v4413 = vadd.f32 %v3991, %v4345
      %v4414 = vadd.f32 %v3992, %v4347
      %v4415 = vadd.f32 %v3993, %v4350
      %v4416 = vadd.f32 %v3994, %v4352
      %s4417 = scalar_lea.vmem %s1, 16
      %v4418 = vld [vmem:[%s4417] sm:$0x3]
      %v4420 = vsel %vm1087, %v4418, 0
      %4422 = vmatprep.subr.bf16.mxu0 0
      %4423 = vmatpush1.bf16.msra.mxu0 %v4420
      %4424 = vmatprep.subr.bf16.mxu0 0
      %4425 = vmatpush1.bf16.msra.mxu0 0
      %4426 = vmatprep.subr.bf16.mxu0 0
      %4427 = vmatpush1.bf16.msra.mxu0 0
      %4428 = vmatprep.subr.bf16.mxu0 0
      %4429 = vmatpush1.bf16.msra.mxu0 0
      %4430 = vmatprep.subr.bf16.mxu0 0
      %4431 = vmatpush1.bf16.msra.mxu0 0
      %4432 = vmatprep.subr.bf16.mxu0 0
      %4433 = vmatpush1.bf16.msra.mxu0 0
      %4434 = vmatprep.subr.bf16.mxu0 0
      %4435 = vmatpush1.bf16.msra.mxu0 0
      %4436 = vmatprep.subr.bf16.mxu0 0
      %4437 = vmatpush1.bf16.msra.mxu0 0
      %4438 = vmatprep.subr.bf16.mxu0 0
      %4439 = vmatpush1.bf16.msra.mxu0 0
      %4440 = vmatprep.subr.bf16.mxu0 0
      %4441 = vmatpush1.bf16.msra.mxu0 0
      %4442 = vmatprep.subr.bf16.mxu0 0
      %4443 = vmatpush1.bf16.msra.mxu0 0
      %4444 = vmatprep.subr.bf16.mxu0 0
      %4445 = vmatpush1.bf16.msra.mxu0 0
      %4446 = vmatprep.subr.bf16.mxu0 0
      %4447 = vmatpush1.bf16.msra.mxu0 0
      %4448 = vmatprep.subr.bf16.mxu0 0
      %4449 = vmatpush1.bf16.msra.mxu0 0
      %4450 = vmatprep.subr.bf16.mxu0 0
      %4451 = vmatpush1.bf16.msra.mxu0 0
      %4452 = vmatprep.subr.bf16.mxu0 0
      %4453 = vmatpush1.bf16.msra.mxu0 0
      %4454 = vmatprep.mubr.bf16.mxu0 0
      %4455 = vmatmul.mubr.bf16.gmra.mrb[0].mxu0 %v3680
      %v4456 = vpop.f32.mrb[0].mxu0
      %v4457 = vadd.f32 0.0, %v4456
      %v4458 = vpop.f32.mrb[0].mxu0
      %v4459 = vpop.f32.mrb[0].mxu0
      %v4460 = vadd.f32 0.0, %v4459
      %v4461 = vpop.f32.mrb[0].mxu0
      %4462 = vmatprep.mubr.bf16.mxu0 0
      %4463 = vmatmul.mubr.bf16.gmra.mrb[0].mxu0 %v3683
      %v4464 = vpop.f32.mrb[0].mxu0
      %v4465 = vadd.f32 0.0, %v4464
      %v4466 = vpop.f32.mrb[0].mxu0
      %v4467 = vpop.f32.mrb[0].mxu0
      %v4468 = vadd.f32 0.0, %v4467
      %v4469 = vpop.f32.mrb[0].mxu0
      %4470 = vmatprep.mubr.bf16.mxu0 0
      %4471 = vmatmul.mubr.bf16.gmra.mrb[0].mxu0 %v3686
      %v4472 = vpop.f32.mrb[0].mxu0
      %v4473 = vadd.f32 0.0, %v4472
      %v4474 = vpop.f32.mrb[0].mxu0
      %v4475 = vpop.f32.mrb[0].mxu0
      %v4476 = vadd.f32 0.0, %v4475
      %v4477 = vpop.f32.mrb[0].mxu0
      %4478 = vmatprep.mubr.bf16.mxu0 0
      %4479 = vmatmul.mubr.bf16.gmra.mrb[0].mxu0 %v3689
      %v4480 = vpop.f32.mrb[0].mxu0
      %v4481 = vadd.f32 0.0, %v4480
      %v4482 = vpop.f32.mrb[0].mxu0
      %v4483 = vpop.f32.mrb[0].mxu0
      %v4484 = vadd.f32 0.0, %v4483
      %v4485 = vpop.f32.mrb[0].mxu0
      %4486 = vmatprep.mubr.bf16.mxu0 0
      %4487 = vmatmul.mubr.bf16.gmra.mrb[0].mxu0 %v3692
      %v4488 = vpop.f32.mrb[0].mxu0
      %v4489 = vadd.f32 0.0, %v4488
      %v4490 = vpop.f32.mrb[0].mxu0
      %v4491 = vpop.f32.mrb[0].mxu0
      %v4492 = vadd.f32 0.0, %v4491
      %v4493 = vpop.f32.mrb[0].mxu0
      %4494 = vmatprep.mubr.bf16.mxu0 0
      %4495 = vmatmul.mubr.bf16.gmra.mrb[0].mxu0 %v3695
      %v4496 = vpop.f32.mrb[0].mxu0
      %v4497 = vadd.f32 0.0, %v4496
      %v4498 = vpop.f32.mrb[0].mxu0
      %v4499 = vpop.f32.mrb[0].mxu0
      %v4500 = vadd.f32 0.0, %v4499
      %v4501 = vpop.f32.mrb[0].mxu0
      %4502 = vmatprep.mubr.bf16.mxu0 0
      %4503 = vmatmul.mubr.bf16.gmra.mrb[0].mxu0 %v3698
      %v4504 = vpop.f32.mrb[0].mxu0
      %v4505 = vadd.f32 0.0, %v4504
      %v4506 = vpop.f32.mrb[0].mxu0
      %v4507 = vpop.f32.mrb[0].mxu0
      %v4508 = vadd.f32 0.0, %v4507
      %v4509 = vpop.f32.mrb[0].mxu0
      %4510 = vmatprep.mubr.bf16.mxu0 0
      %4511 = vmatmul.mubr.bf16.gmra.mrb[0].mxu0 %v3701
      %v4512 = vpop.f32.mrb[0].mxu0
      %v4513 = vadd.f32 0.0, %v4512
      %v4514 = vpop.f32.mrb[0].mxu0
      %v4515 = vpop.f32.mrb[0].mxu0
      %v4516 = vadd.f32 0.0, %v4515
      %v4517 = vpop.f32.mrb[0].mxu0
      %4518 = vmatprep.mubr.bf16.mxu0 0
      %4519 = vmatmul.mubr.bf16.gmra.mrb[0].mxu0 %v3704
      %v4520 = vpop.f32.mrb[0].mxu0
      %v4521 = vadd.f32 0.0, %v4520
      %v4522 = vpop.f32.mrb[0].mxu0
      %v4523 = vpop.f32.mrb[0].mxu0
      %v4524 = vadd.f32 0.0, %v4523
      %v4525 = vpop.f32.mrb[0].mxu0
      %4526 = vmatprep.mubr.bf16.mxu0 0
      %4527 = vmatmul.mubr.bf16.gmra.mrb[0].mxu0 %v3707
      %v4528 = vpop.f32.mrb[0].mxu0
      %v4529 = vadd.f32 0.0, %v4528
      %v4530 = vpop.f32.mrb[0].mxu0
      %v4531 = vpop.f32.mrb[0].mxu0
      %v4532 = vadd.f32 0.0, %v4531
      %v4533 = vpop.f32.mrb[0].mxu0
      %4534 = vmatprep.mubr.bf16.mxu0 0
      %4535 = vmatmul.mubr.bf16.gmra.mrb[0].mxu0 %v3710
      %v4536 = vpop.f32.mrb[0].mxu0
      %v4537 = vadd.f32 0.0, %v4536
      %v4538 = vpop.f32.mrb[0].mxu0
      %v4539 = vpop.f32.mrb[0].mxu0
      %v4540 = vadd.f32 0.0, %v4539
      %v4541 = vpop.f32.mrb[0].mxu0
      %4542 = vmatprep.mubr.bf16.mxu0 0
      %4543 = vmatmul.mubr.bf16.gmra.mrb[0].mxu0 %v3713
      %v4544 = vpop.f32.mrb[0].mxu0
      %v4545 = vadd.f32 0.0, %v4544
      %v4546 = vpop.f32.mrb[0].mxu0
      %v4547 = vpop.f32.mrb[0].mxu0
      %v4548 = vadd.f32 0.0, %v4547
      %v4549 = vpop.f32.mrb[0].mxu0
      %4550 = vmatprep.mubr.bf16.mxu0 0
      %4551 = vmatmul.mubr.bf16.gmra.mrb[0].mxu0 %v3716
      %v4552 = vpop.f32.mrb[0].mxu0
      %v4553 = vadd.f32 0.0, %v4552
      %v4554 = vpop.f32.mrb[0].mxu0
      %v4555 = vpop.f32.mrb[0].mxu0
      %v4556 = vadd.f32 0.0, %v4555
      %v4557 = vpop.f32.mrb[0].mxu0
      %4558 = vmatprep.mubr.bf16.mxu0 0
      %4559 = vmatmul.mubr.bf16.gmra.mrb[0].mxu0 %v3719
      %v4560 = vpop.f32.mrb[0].mxu0
      %v4561 = vadd.f32 0.0, %v4560
      %v4562 = vpop.f32.mrb[0].mxu0
      %v4563 = vpop.f32.mrb[0].mxu0
      %v4564 = vadd.f32 0.0, %v4563
      %v4565 = vpop.f32.mrb[0].mxu0
      %4566 = vmatprep.mubr.bf16.mxu0 0
      %4567 = vmatmul.mubr.bf16.gmra.mrb[0].mxu0 %v3722
      %v4568 = vpop.f32.mrb[0].mxu0
      %v4569 = vadd.f32 0.0, %v4568
      %v4570 = vpop.f32.mrb[0].mxu0
      %v4571 = vpop.f32.mrb[0].mxu0
      %v4572 = vadd.f32 0.0, %v4571
      %v4573 = vpop.f32.mrb[0].mxu0
      %4574 = vmatprep.mubr.bf16.mxu0 0
      %4575 = vmatmul.mubr.bf16.gmra.mrb[0].mxu0 %v3725
      %v4576 = vpop.f32.mrb[0].mxu0
      %v4577 = vadd.f32 0.0, %v4576
      %v4578 = vpop.f32.mrb[0].mxu0
      %v4579 = vpop.f32.mrb[0].mxu0
      %v4580 = vadd.f32 0.0, %v4579
      %v4581 = vpop.f32.mrb[0].mxu0
      %4582 = vmatprep.mubr.bf16.mxu0 0
      %4583 = vmatmul.mubr.bf16.gmra.mrb[0].mxu0 %v3728
      %v4584 = vpop.f32.mrb[0].mxu0
      %v4585 = vadd.f32 0.0, %v4584
      %v4586 = vpop.f32.mrb[0].mxu0
      %v4587 = vpop.f32.mrb[0].mxu0
      %v4588 = vadd.f32 0.0, %v4587
      %v4589 = vpop.f32.mrb[0].mxu0
      %4590 = vmatprep.mubr.bf16.mxu0 0
      %4591 = vmatmul.mubr.bf16.gmra.mrb[0].mxu0 %v3731
      %v4592 = vpop.f32.mrb[0].mxu0
      %v4593 = vadd.f32 0.0, %v4592
      %v4594 = vpop.f32.mrb[0].mxu0
      %v4595 = vpop.f32.mrb[0].mxu0
      %v4596 = vadd.f32 0.0, %v4595
      %v4597 = vpop.f32.mrb[0].mxu0
      %4598 = vmatprep.mubr.bf16.mxu0 0
      %4599 = vmatmul.mubr.bf16.gmra.mrb[0].mxu0 %v3734
      %v4600 = vpop.f32.mrb[0].mxu0
      %v4601 = vadd.f32 0.0, %v4600
      %v4602 = vpop.f32.mrb[0].mxu0
      %v4603 = vpop.f32.mrb[0].mxu0
      %v4604 = vadd.f32 0.0, %v4603
      %v4605 = vpop.f32.mrb[0].mxu0
      %4606 = vmatprep.mubr.bf16.mxu0 0
      %4607 = vmatmul.mubr.bf16.gmra.mrb[0].mxu0 %v3737
      %v4608 = vpop.f32.mrb[0].mxu0
      %v4609 = vadd.f32 0.0, %v4608
      %v4610 = vpop.f32.mrb[0].mxu0
      %v4611 = vpop.f32.mrb[0].mxu0
      %v4612 = vadd.f32 0.0, %v4611
      %v4613 = vpop.f32.mrb[0].mxu0
      %4614 = vmatprep.mubr.bf16.mxu0 0
      %4615 = vmatmul.mubr.bf16.gmra.mrb[0].mxu0 %v3740
      %v4616 = vpop.f32.mrb[0].mxu0
      %v4617 = vadd.f32 0.0, %v4616
      %v4618 = vpop.f32.mrb[0].mxu0
      %v4619 = vpop.f32.mrb[0].mxu0
      %v4620 = vadd.f32 0.0, %v4619
      %v4621 = vpop.f32.mrb[0].mxu0
      %4622 = vmatprep.mubr.bf16.mxu0 0
      %4623 = vmatmul.mubr.bf16.gmra.mrb[0].mxu0 %v3743
      %v4624 = vpop.f32.mrb[0].mxu0
      %v4625 = vadd.f32 0.0, %v4624
      %v4626 = vpop.f32.mrb[0].mxu0
      %v4627 = vpop.f32.mrb[0].mxu0
      %v4628 = vadd.f32 0.0, %v4627
      %v4629 = vpop.f32.mrb[0].mxu0
      %4630 = vmatprep.mubr.bf16.mxu0 0
      %4631 = vmatmul.mubr.bf16.gmra.mrb[0].mxu0 %v3746
      %v4632 = vpop.f32.mrb[0].mxu0
      %v4633 = vadd.f32 0.0, %v4632
      %v4634 = vpop.f32.mrb[0].mxu0
      %v4635 = vpop.f32.mrb[0].mxu0
      %v4636 = vadd.f32 0.0, %v4635
      %v4637 = vpop.f32.mrb[0].mxu0
      %4638 = vmatprep.mubr.bf16.mxu0 0
      %4639 = vmatmul.mubr.bf16.gmra.mrb[0].mxu0 %v3749
      %v4640 = vpop.f32.mrb[0].mxu0
      %v4641 = vadd.f32 0.0, %v4640
      %v4642 = vpop.f32.mrb[0].mxu0
      %v4643 = vpop.f32.mrb[0].mxu0
      %v4644 = vadd.f32 0.0, %v4643
      %v4645 = vpop.f32.mrb[0].mxu0
      %4646 = vdwg.mxu0
      %v4695 = vrot.slane %v4457, 2
      %v4696 = vrot.slane %v4460, 2
      %v4697 = vsel %vm2033, %v4695, %v4696
      %v4698 = vrot.slane %v4465, 2
      %v4699 = vsel %vm2033, %v4696, %v4698
      %v4700 = vrot.slane %v4468, 2
      %v4701 = vrot.slane %v4473, 2
      %v4702 = vsel %vm2033, %v4700, %v4701
      %v4703 = vrot.slane %v4476, 2
      %v4704 = vsel %vm2033, %v4701, %v4703
      %v4705 = vrot.slane %v4481, 2
      %v4706 = vrot.slane %v4484, 2
      %v4707 = vsel %vm2033, %v4705, %v4706
      %v4708 = vrot.slane %v4489, 2
      %v4709 = vsel %vm2033, %v4706, %v4708
      %v4710 = vrot.slane %v4492, 2
      %v4711 = vrot.slane %v4497, 2
      %v4712 = vsel %vm2033, %v4710, %v4711
      %v4713 = vrot.slane %v4500, 2
      %v4714 = vsel %vm2033, %v4711, %v4713
      %v4715 = vrot.slane %v4505, 2
      %v4716 = vrot.slane %v4508, 2
      %v4717 = vsel %vm2033, %v4715, %v4716
      %v4718 = vrot.slane %v4513, 2
      %v4719 = vsel %vm2033, %v4716, %v4718
      %v4720 = vrot.slane %v4516, 2
      %v4721 = vrot.slane %v4521, 2
      %v4722 = vsel %vm2033, %v4720, %v4721
      %v4723 = vrot.slane %v4524, 2
      %v4724 = vsel %vm2033, %v4721, %v4723
      %v4725 = vrot.slane %v4529, 2
      %v4726 = vrot.slane %v4532, 2
      %v4727 = vsel %vm2033, %v4725, %v4726
      %v4728 = vrot.slane %v4537, 2
      %v4729 = vsel %vm2033, %v4726, %v4728
      %v4730 = vrot.slane %v4540, 2
      %v4731 = vrot.slane %v4545, 2
      %v4732 = vsel %vm2033, %v4730, %v4731
      %v4733 = vrot.slane %v4548, 2
      %v4734 = vsel %vm2033, %v4731, %v4733
      %v4735 = vrot.slane %v4553, 2
      %v4736 = vrot.slane %v4556, 2
      %v4737 = vsel %vm2033, %v4735, %v4736
      %v4738 = vrot.slane %v4561, 2
      %v4739 = vsel %vm2033, %v4736, %v4738
      %v4740 = vrot.slane %v4564, 2
      %v4741 = vrot.slane %v4569, 2
      %v4742 = vsel %vm2033, %v4740, %v4741
      %v4743 = vrot.slane %v4572, 2
      %v4744 = vsel %vm2033, %v4741, %v4743
      %v4745 = vrot.slane %v4577, 2
      %v4746 = vrot.slane %v4580, 2
      %v4747 = vsel %vm2033, %v4745, %v4746
      %v4748 = vrot.slane %v4585, 2
      %v4749 = vsel %vm2033, %v4746, %v4748
      %v4750 = vrot.slane %v4588, 2
      %v4751 = vrot.slane %v4593, 2
      %v4752 = vsel %vm2033, %v4750, %v4751
      %v4753 = vrot.slane %v4596, 2
      %v4754 = vsel %vm2033, %v4751, %v4753
      %v4755 = vrot.slane %v4601, 2
      %v4756 = vrot.slane %v4604, 2
      %v4757 = vsel %vm2033, %v4755, %v4756
      %v4758 = vrot.slane %v4609, 2
      %v4759 = vsel %vm2033, %v4756, %v4758
      %v4760 = vrot.slane %v4612, 2
      %v4761 = vrot.slane %v4617, 2
      %v4762 = vsel %vm2033, %v4760, %v4761
      %v4763 = vrot.slane %v4620, 2
      %v4764 = vsel %vm2033, %v4761, %v4763
      %v4765 = vrot.slane %v4625, 2
      %v4766 = vrot.slane %v4628, 2
      %v4767 = vsel %vm2033, %v4765, %v4766
      %v4768 = vrot.slane %v4633, 2
      %v4769 = vsel %vm2033, %v4766, %v4768
      %v4770 = vrot.slane %v4636, 2
      %v4771 = vrot.slane %v4641, 2
      %v4772 = vsel %vm2033, %v4770, %v4771
      %v4773 = vrot.slane %v4644, 2
      %v4774 = vsel %vm2033, %v4771, %v4773
      %v4807 = vadd.f32 %v4385, %v4697
      %v4808 = vadd.f32 %v4386, %v4699
      %v4809 = vadd.f32 %v4387, %v4702
      %v4810 = vadd.f32 %v4388, %v4704
      %v4811 = vadd.f32 %v4389, %v4707
      %v4812 = vadd.f32 %v4390, %v4709
      %v4813 = vadd.f32 %v4391, %v4712
      %v4814 = vadd.f32 %v4392, %v4714
      %v4815 = vadd.f32 %v4393, %v4717
      %v4816 = vadd.f32 %v4394, %v4719
      %v4817 = vadd.f32 %v4395, %v4722
      %v4818 = vadd.f32 %v4396, %v4724
      %v4819 = vadd.f32 %v4397, %v4727
      %v4820 = vadd.f32 %v4398, %v4729
      %v4821 = vadd.f32 %v4399, %v4732
      %v4822 = vadd.f32 %v4400, %v4734
      %v4823 = vadd.f32 %v4401, %v4737
      %v4824 = vadd.f32 %v4402, %v4739
      %v4825 = vadd.f32 %v4403, %v4742
      %v4826 = vadd.f32 %v4404, %v4744
      %v4827 = vadd.f32 %v4405, %v4747
      %v4828 = vadd.f32 %v4406, %v4749
      %v4829 = vadd.f32 %v4407, %v4752
      %v4830 = vadd.f32 %v4408, %v4754
      %v4831 = vadd.f32 %v4409, %v4757
      %v4832 = vadd.f32 %v4410, %v4759
      %v4833 = vadd.f32 %v4411, %v4762
      %v4834 = vadd.f32 %v4412, %v4764
      %v4835 = vadd.f32 %v4413, %v4767
      %v4836 = vadd.f32 %v4414, %v4769
      %v4837 = vadd.f32 %v4415, %v4772
      %v4838 = vadd.f32 %v4416, %v4774
      %v4839 = vld [vmem:[%s2] sm:$0x1]
      %v4841 = vlaneseq
      %v4842 = vshrl.u32 %v4841, 7
      %v4843 = vsub.s32 0, %v4842
      %v4844 = vrot.slane %v4839, %v4843
      %v4846 = vadd.f32 %v4807, %v4844
      %v4847 = vadd.f32 %v4808, %v4844
      %v4848 = vadd.f32 %v4809, %v4844
      %v4849 = vadd.f32 %v4810, %v4844
      %v4850 = vadd.f32 %v4811, %v4844
      %v4851 = vadd.f32 %v4812, %v4844
      %v4852 = vadd.f32 %v4813, %v4844
      %v4853 = vadd.f32 %v4814, %v4844
      %v4854 = vadd.f32 %v4815, %v4844
      %v4855 = vadd.f32 %v4816, %v4844
      %v4856 = vadd.f32 %v4817, %v4844
      %v4857 = vadd.f32 %v4818, %v4844
      %v4858 = vadd.f32 %v4819, %v4844
      %v4859 = vadd.f32 %v4820, %v4844
      %v4860 = vadd.f32 %v4821, %v4844
      %v4861 = vadd.f32 %v4822, %v4844
      %v4862 = vadd.f32 %v4823, %v4844
      %v4863 = vadd.f32 %v4824, %v4844
      %v4864 = vadd.f32 %v4825, %v4844
      %v4865 = vadd.f32 %v4826, %v4844
      %v4866 = vadd.f32 %v4827, %v4844
      %v4867 = vadd.f32 %v4828, %v4844
      %v4868 = vadd.f32 %v4829, %v4844
      %v4869 = vadd.f32 %v4830, %v4844
      %v4870 = vadd.f32 %v4831, %v4844
      %v4871 = vadd.f32 %v4832, %v4844
      %v4872 = vadd.f32 %v4833, %v4844
      %v4873 = vadd.f32 %v4834, %v4844
      %v4874 = vadd.f32 %v4835, %v4844
      %v4875 = vadd.f32 %v4836, %v4844
      %v4876 = vadd.f32 %v4837, %v4844
      %v4877 = vadd.f32 %v4838, %v4844
      %v4878 = vmul.f32 %v4846, 0.1
      %v4879 = vmul.f32 %v4847, 0.1
      %v4880 = vmul.f32 %v4848, 0.1
      %v4881 = vmul.f32 %v4849, 0.1
      %v4882 = vmul.f32 %v4850, 0.1
      %v4883 = vmul.f32 %v4851, 0.1
      %v4884 = vmul.f32 %v4852, 0.1
      %v4885 = vmul.f32 %v4853, 0.1
      %v4886 = vmul.f32 %v4854, 0.1
      %v4887 = vmul.f32 %v4855, 0.1
      %v4888 = vmul.f32 %v4856, 0.1
      %v4889 = vmul.f32 %v4857, 0.1
      %v4890 = vmul.f32 %v4858, 0.1
      %v4891 = vmul.f32 %v4859, 0.1
      %v4892 = vmul.f32 %v4860, 0.1
      %v4893 = vmul.f32 %v4861, 0.1
      %v4894 = vmul.f32 %v4862, 0.1
      %v4895 = vmul.f32 %v4863, 0.1
      %v4896 = vmul.f32 %v4864, 0.1
      %v4897 = vmul.f32 %v4865, 0.1
      %v4898 = vmul.f32 %v4866, 0.1
      %v4899 = vmul.f32 %v4867, 0.1
      %v4900 = vmul.f32 %v4868, 0.1
      %v4901 = vmul.f32 %v4869, 0.1
      %v4902 = vmul.f32 %v4870, 0.1
      %v4903 = vmul.f32 %v4871, 0.1
      %v4904 = vmul.f32 %v4872, 0.1
      %v4905 = vmul.f32 %v4873, 0.1
      %v4906 = vmul.f32 %v4874, 0.1
      %v4907 = vmul.f32 %v4875, 0.1
      %v4908 = vmul.f32 %v4876, 0.1
      %v4909 = vmul.f32 %v4877, 0.1
      %v4910 = vmax.f32 %v4846, %v4878
      %v4911 = vmax.f32 %v4847, %v4879
      %v4912 = vmax.f32 %v4848, %v4880
      %v4913 = vmax.f32 %v4849, %v4881
      %v4914 = vmax.f32 %v4850, %v4882
      %v4915 = vmax.f32 %v4851, %v4883
      %v4916 = vmax.f32 %v4852, %v4884
      %v4917 = vmax.f32 %v4853, %v4885
      %v4918 = vmax.f32 %v4854, %v4886
      %v4919 = vmax.f32 %v4855, %v4887
      %v4920 = vmax.f32 %v4856, %v4888
      %v4921 = vmax.f32 %v4857, %v4889
      %v4922 = vmax.f32 %v4858, %v4890
      %v4923 = vmax.f32 %v4859, %v4891
      %v4924 = vmax.f32 %v4860, %v4892
      %v4925 = vmax.f32 %v4861, %v4893
      %v4926 = vmax.f32 %v4862, %v4894
      %v4927 = vmax.f32 %v4863, %v4895
      %v4928 = vmax.f32 %v4864, %v4896
      %v4929 = vmax.f32 %v4865, %v4897
      %v4930 = vmax.f32 %v4866, %v4898
      %v4931 = vmax.f32 %v4867, %v4899
      %v4932 = vmax.f32 %v4868, %v4900
      %v4933 = vmax.f32 %v4869, %v4901
      %v4934 = vmax.f32 %v4870, %v4902
      %v4935 = vmax.f32 %v4871, %v4903
      %v4936 = vmax.f32 %v4872, %v4904
      %v4937 = vmax.f32 %v4873, %v4905
      %v4938 = vmax.f32 %v4874, %v4906
      %v4939 = vmax.f32 %v4875, %v4907
      %v4940 = vmax.f32 %v4876, %v4908
      %v4941 = vmax.f32 %v4877, %v4909
      %v4942 = vadd.f32 %v172, %v4910
      %v4943 = vadd.f32 %v173, %v4911
      %v4944 = vadd.f32 %v174, %v4912
      %v4945 = vadd.f32 %v175, %v4913
      %v4946 = vadd.f32 %v176, %v4914
      %v4947 = vadd.f32 %v177, %v4915
      %v4948 = vadd.f32 %v178, %v4916
      %v4949 = vadd.f32 %v179, %v4917
      %v4950 = vadd.f32 %v180, %v4918
      %v4951 = vadd.f32 %v181, %v4919
      %v4952 = vadd.f32 %v182, %v4920
      %v4953 = vadd.f32 %v183, %v4921
      %v4954 = vadd.f32 %v184, %v4922
      %v4955 = vadd.f32 %v185, %v4923
      %v4956 = vadd.f32 %v186, %v4924
      %v4957 = vadd.f32 %v187, %v4925
      %v4958 = vadd.f32 %v188, %v4926
      %v4959 = vadd.f32 %v189, %v4927
      %v4960 = vadd.f32 %v190, %v4928
      %v4961 = vadd.f32 %v191, %v4929
      %v4962 = vadd.f32 %v192, %v4930
      %v4963 = vadd.f32 %v193, %v4931
      %v4964 = vadd.f32 %v194, %v4932
      %v4965 = vadd.f32 %v195, %v4933
      %v4966 = vadd.f32 %v196, %v4934
      %v4967 = vadd.f32 %v197, %v4935
      %v4968 = vadd.f32 %v198, %v4936
      %v4969 = vadd.f32 %v199, %v4937
      %v4970 = vadd.f32 %v200, %v4938
      %v4971 = vadd.f32 %v201, %v4939
      %v4972 = vadd.f32 %v202, %v4940
      %v4973 = vadd.f32 %v203, %v4941
      %4974 = vst.msk [vmem:[%s170] sm:$0xff] %vm1014, %v4942
      %4975 = vst.msk [vmem:[%s170 + $0x8] sm:$0xff] %vm1014, %v4943
      %4976 = vst.msk [vmem:[%s170 + $0x10] sm:$0xff] %vm1014, %v4944
      %4977 = vst.msk [vmem:[%s170 + $0x18] sm:$0xff] %vm1014, %v4945
      %4978 = vst.msk [vmem:[%s170 + $0x20] sm:$0xff] %vm1014, %v4946
      %4979 = vst.msk [vmem:[%s170 + $0x28] sm:$0xff] %vm1014, %v4947
      %4980 = vst.msk [vmem:[%s170 + $0x30] sm:$0xff] %vm1014, %v4948
      %4981 = vst.msk [vmem:[%s170 + $0x38] sm:$0xff] %vm1014, %v4949
      %4982 = vst.msk [vmem:[%s170 + $0x40] sm:$0xff] %vm1014, %v4950
      %4983 = vst.msk [vmem:[%s170 + $0x48] sm:$0xff] %vm1014, %v4951
      %4984 = vst.msk [vmem:[%s170 + $0x50] sm:$0xff] %vm1014, %v4952
      %4985 = vst.msk [vmem:[%s170 + $0x58] sm:$0xff] %vm1014, %v4953
      %4986 = vst.msk [vmem:[%s170 + $0x60] sm:$0xff] %vm1014, %v4954
      %4987 = vst.msk [vmem:[%s170 + $0x68] sm:$0xff] %vm1014, %v4955
      %4988 = vst.msk [vmem:[%s170 + $0x70] sm:$0xff] %vm1014, %v4956
      %4989 = vst.msk [vmem:[%s170 + $0x78] sm:$0xff] %vm1014, %v4957
      %4990 = vst.msk [vmem:[%s170 + $0x80] sm:$0xff] %vm1014, %v4958
      %4991 = vst.msk [vmem:[%s170 + $0x88] sm:$0xff] %vm1014, %v4959
      %4992 = vst.msk [vmem:[%s170 + $0x90] sm:$0xff] %vm1014, %v4960
      %4993 = vst.msk [vmem:[%s170 + $0x98] sm:$0xff] %vm1014, %v4961
      %4994 = vst.msk [vmem:[%s170 + $0xa0] sm:$0xff] %vm1014, %v4962
      %4995 = vst.msk [vmem:[%s170 + $0xa8] sm:$0xff] %vm1014, %v4963
      %4996 = vst.msk [vmem:[%s170 + $0xb0] sm:$0xff] %vm1014, %v4964
      %4997 = vst.msk [vmem:[%s170 + $0xb8] sm:$0xff] %vm1014, %v4965
      %4998 = vst.msk [vmem:[%s170 + $0xc0] sm:$0xff] %vm1014, %v4966
      %4999 = vst.msk [vmem:[%s170 + $0xc8] sm:$0xff] %vm1014, %v4967
      %5000 = vst.msk [vmem:[%s170 + $0xd0] sm:$0xff] %vm1014, %v4968
      %5001 = vst.msk [vmem:[%s170 + $0xd8] sm:$0xff] %vm1014, %v4969
      %5002 = vst.msk [vmem:[%s170 + $0xe0] sm:$0xff] %vm1014, %v4970
      %5003 = vst.msk [vmem:[%s170 + $0xe8] sm:$0xff] %vm1014, %v4971
      %5004 = vst.msk [vmem:[%s170 + $0xf0] sm:$0xff] %vm1014, %v4972
      %5005 = vst.msk [vmem:[%s170 + $0xf8] sm:$0xff] %vm1014, %v4973
      %p5006 = scmp.lt.s32.totalorder %s14, 1
      %s5007 = scalar_select %p5006, %s14, 1
      %s5008 = smul.addr %s5007, 32
      %s5009 = smul.addr %s5008, 8
      %s5010 = scalar_lea.vmem %s3, %s5009
      // Predicated region
      $region33: #{tpu_custom_call.1} parent=31 // pred_check
        %p5011 = pneg %p100
      $region34: #{tpu_custom_call.1} parent=31 // pred_check_branch
        %5013 = sbr.rel (%p5011) target = $region36
      $region35: #{tpu_custom_call.1} parent=31 // pred_region
        _
      $region36: #{tpu_custom_call.1} parent=31 // pred_fallthru
        _
    $region32: #{tpu_custom_call.1} parent=5 // pred_fallthru
      _
    %p5014 = scmp.le.s32.totalorder 2, %s9
    // Predicated region
    $region37: #{tpu_custom_call.1} parent=5 // pred_check
      %p5015 = pneg %p5014
    $region38: #{tpu_custom_call.1} parent=5 // pred_check_branch
      %5017 = sbr.rel (%p5015) target = $region40
    $region39: #{tpu_custom_call.1} parent=5 // pred_region
      %s5018 = ssub.s32 %s9, 2
      // Predicated region
      $region41: #{tpu_custom_call.1} parent=39 // pred_check
        %p5019 = pneg %p106
      $region42: #{tpu_custom_call.1} parent=39 // pred_check_branch
        %5021 = sbr.rel (%p5019) target = $region44
      $region43: #{tpu_custom_call.1} parent=39 // pred_region
        %p5022 = scmp.lt.s32.totalorder %s15, 1
        %s5023 = scalar_select %p5022, %s15, 1
        %s5024 = smul.addr %s5023, 32
        %s5025 = smul.addr %s5024, 8
        %s5026 = scalar_lea.vmem %s3, %s5025
      $region44: #{tpu_custom_call.1} parent=39 // pred_fallthru
        _
    $region40: #{tpu_custom_call.1} parent=5 // pred_fallthru
      _
  $region6: #{tpu_custom_call.1} parent=0 // loop_footer
    %s13 = sadd.s32 1, %s9
  $region7: #{tpu_custom_call.1} parent=0 // loop_footer_branch
    %8 = sbr.rel target = $region3
  $region8: #{tpu_custom_call.1} parent=0 // loop_exit
    _

</llo_original>
